<compile_context>
chip_gen: v7x
topology: tpu7x:2x2x1
jax: 0.10.0
libtpu: 0.0.40
codegen_flags: <defaults>
</compile_context>

<pallas_src>
import jax
import jax.numpy as jnp
from jax.experimental import pallas as pl
from jax.experimental.pallas import tpu as pltpu

HIDDEN = 10    # LSTM hidden size (nn.LSTM(s_dim, 10, 2))
FC = 30        # fcs / fca logical output width
GP = 128       # per-gate lane padding (one full vreg lane width per gate)
FCP = 128      # head width padded to a full lane slab
OUT_PAD = 128  # lane-dense output width (only column 0 is meaningful)


# ---------------------------- weight preparation -------------------------------

def _pad_gate_cols(w_t):
    """(K, 4*HIDDEN) -> (K, 4*GP), each gate block zero-padded to 128 lanes."""
    k = w_t.shape[0]
    out = jnp.zeros((k, 4 * GP), jnp.float32)
    for g in range(4):
        out = out.at[:, g * GP:g * GP + HIDDEN].set(
            w_t[:, g * HIDDEN:(g + 1) * HIDDEN])
    return out


def _pad_gate_vec(b):
    """(4*HIDDEN,) -> (1, 4*GP) with gate-blockwise zero padding."""
    out = jnp.zeros((4 * GP,), jnp.float32)
    for g in range(4):
        out = out.at[g * GP:g * GP + HIDDEN].set(
            b[g * HIDDEN:(g + 1) * HIDDEN])
    return out.reshape(1, 4 * GP)


def _pad_rows(w, rows):
    return jnp.zeros((rows, w.shape[1]), jnp.float32).at[:w.shape[0]].set(w)


def _pad_cols(w, cols):
    return jnp.zeros((w.shape[0], cols), jnp.float32).at[:, :w.shape[1]].set(w)


def prepare_weights(params):
    """Pad / fuse / fold the PyTorch-layout parameters for the kernel."""
    p = {k: jnp.asarray(v, jnp.float32) for k, v in params.items()}

    # Layer 1: input projection hoisted; bias folded (b_ih + b_hh).
    w_ih1 = _pad_gate_cols(p["w_ih1"].T)                              # (s_dim, 4GP)
    w_hh1 = _pad_rows(_pad_gate_cols(p["w_hh1"].T), GP)               # (GP, 4GP)
    b1 = _pad_gate_vec(p["b_ih1"] + p["b_hh1"])                       # (1, 4GP)

    # Layer 2: fused [W_ih2; W_hh2] stacked weight, folded bias.
    w_ih2 = _pad_rows(_pad_gate_cols(p["w_ih2"].T), GP)               # (GP, 4GP)
    w_hh2 = _pad_rows(_pad_gate_cols(p["w_hh2"].T), GP)               # (GP, 4GP)
    w2 = jnp.concatenate([w_ih2, w_hh2], axis=0)                      # (2GP, 4GP)
    b2 = _pad_gate_vec(p["b_ih2"] + p["b_hh2"])                       # (1, 4GP)

    # Critic head: rows padded to GP (h2 pad lanes are zero -> harmless),
    # width padded to FCP=128 lanes, fcs/fca biases folded, out padded to a
    # lane-dense column slab.
    w_fcs = _pad_cols(_pad_rows(p["w_fcs"].T, GP), FCP)               # (GP, FCP)
    w_fca = _pad_cols(p["w_fca"].T, FCP)                              # (a_dim, FCP)
    b_head = _pad_cols((p["b_fcs"] + p["b_fca"]).reshape(1, FC), FCP)  # (1, FCP)
    w_out = jnp.zeros((FCP, OUT_PAD), jnp.float32).at[:FC, 0:1].set(p["w_out"].T)
    b_out = jnp.zeros((1, OUT_PAD), jnp.float32).at[0, 0].set(p["b_out"][0])

    return {
        "w_ih1": w_ih1,
        # bf16 recurrence operands: single-pass MXU issue on all generations.
        "w_hh1": w_hh1.astype(jnp.bfloat16),
        "b1": b1,
        "w2": w2.astype(jnp.bfloat16),
        "b2": b2,
        "w_fcs": w_fcs, "w_fca": w_fca, "b_head": b_head,
        "w_out": w_out, "b_out": b_out,
    }


def check_pad_invariants(w):
    """h/c pad lanes stay exactly 0 only if every gate-pad column of the gate
    weights and every gate-pad lane of the gate biases is zero.  Assert it so
    future edits (nonzero pad init, extra bias) fail loudly."""
    def assert_zero(x):
        assert float(jnp.max(jnp.abs(x.astype(jnp.float32)))) == 0.0, \
            "gate pad-lane invariant violated"
    for g in range(4):
        lo, hi = g * GP + HIDDEN, (g + 1) * GP
        assert_zero(w["w_ih1"][:, lo:hi])
        assert_zero(w["w_hh1"][:, lo:hi])
        assert_zero(w["w2"][:, lo:hi])
        assert_zero(w["b1"][:, lo:hi])
        assert_zero(w["b2"][:, lo:hi])
    assert_zero(w["w_hh1"][HIDDEN:, :])       # pad rows (defensive)
    assert_zero(w["w2"][HIDDEN:GP, :])
    assert_zero(w["w2"][GP + HIDDEN:, :])
    assert_zero(w["w_fcs"][HIDDEN:GP, :])     # head only reads real h2 rows


# ---------------------------------- forward -------------------------------------

def cnet_forward(params, s, a):
    """s: (T, B, s_dim) f32 seq-major; a: (T, B, a_dim) or (T*B, a_dim) T-major.
    Returns q: (T*B, 1) f32."""
    T, B, s_dim = s.shape
    s_flat = s.reshape(T * B, s_dim).astype(jnp.float32)
    a_flat = (a.reshape(T * B, -1) if a.ndim == 3 else a).astype(jnp.float32)
    w = prepare_weights(params)

    def kernel(s_ref, a_ref,
               w_ih1_ref, w_hh1_ref, b1_ref,
               w2_ref, b2_ref,
               w_fcs_ref, w_fca_ref, b_head_ref,
               w_out_ref, b_out_ref,
               q_ref,
               x1_scr, h2_scr):
        # ---- Pre-loop: layer-1 input projection for ALL timesteps in one
        # batched matmul, written densely into the 2-D scratch (no reshape,
        # no sublane relayout). --------------------------------------------
        x1_scr[...] = (jnp.dot(s_ref[...], w_ih1_ref[...],
                               preferred_element_type=jnp.float32)
                       + b1_ref[...])                       # (T*B, 4*GP) f32

        w_hh1 = w_hh1_ref[...]                              # (GP, 4*GP) bf16
        w2 = w2_ref[...]                                    # (2*GP, 4*GP) bf16
        # Hoist the layer-2 bias broadcast out of the loop (JAX doesn't CSE it).
        b2 = jnp.broadcast_to(b2_ref[...], (B, 4 * GP))

        def sigmoid(x):
            # One EUP push (tanh) instead of exp + divide on the serialized
            # recurrence critical path.
            return 0.5 * jnp.tanh(0.5 * x) + 0.5

        def gates_to_hc(gates, c):
            # Gate blocks are 128-lane aligned: whole-vreg slices, no rotates.
            i = sigmoid(gates[:, 0 * GP:1 * GP])
            f = sigmoid(gates[:, 1 * GP:2 * GP])
            g = jnp.tanh(gates[:, 2 * GP:3 * GP])
            o = sigmoid(gates[:, 3 * GP:4 * GP])
            c_new = f * c + i * g
            h_new = o * jnp.tanh(c_new)
            return h_new, c_new

        # ---- Sequential recurrence: one bf16 MXU matmul per layer per step.
        # Static Python loop (T=8) -> fully unrolled with static sublane
        # offsets into the 2-D scratches; equivalent to fori_loop(unroll=True).
        h1 = c1 = h2 = c2 = jnp.zeros((B, GP), jnp.float32)
        for t in range(T):
            lo, hi = t * B, (t + 1) * B
            gates1 = (x1_scr[lo:hi, :]
                      + jnp.dot(h1.astype(jnp.bfloat16), w_hh1,
                                preferred_element_type=jnp.float32))
            h1, c1 = gates_to_hc(gates1, c1)
            h12 = jnp.concatenate([h1, h2], axis=-1).astype(jnp.bfloat16)
            gates2 = jnp.dot(h12, w2,
                             preferred_element_type=jnp.float32) + b2
            h2, c2 = gates_to_hc(gates2, c2)
            h2_scr[lo:hi, :] = h2

        # ---- Post-loop batched critic head (fcs + fca + relu + out), every
        # operand a full 128-lane slab. -------------------------------------
        h2_all = h2_scr[...]                                # (T*B, GP), dense
        net = jnp.maximum(
            jnp.dot(h2_all, w_fcs_ref[...], preferred_element_type=jnp.float32)
            + jnp.dot(a_ref[...], w_fca_ref[...],
                      preferred_element_type=jnp.float32)
            + b_head_ref[...],
            0.0)                                            # (T*B, FCP)
        # Lane-dense output slab; only column 0 carries q.
        q_ref[...] = (jnp.dot(net, w_out_ref[...],
                              preferred_element_type=jnp.float32)
                      + b_out_ref[...])

    args = (s_flat, a_flat,
            w["w_ih1"], w["w_hh1"], w["b1"],
            w["w2"], w["b2"],
            w["w_fcs"], w["w_fca"], w["b_head"],
            w["w_out"], w["b_out"])

    vmem = lambda: pl.BlockSpec(memory_space=pltpu.MemorySpace.VMEM)
    q_pad = pl.pallas_call(
        kernel,
        out_shape=jax.ShapeDtypeStruct((T * B, OUT_PAD), jnp.float32),
        in_specs=[vmem() for _ in args],
        out_specs=vmem(),
        scratch_shapes=[
            pltpu.VMEM((T * B, 4 * GP), jnp.float32),   # hoisted x1 (2-D, dense)
            pltpu.VMEM((T * B, GP), jnp.float32),       # per-step h2 for the head
        ],
        compiler_params=pltpu.CompilerParams(
            # Explicit scoped-VMEM budget: stays within v7x's 64 MiB physical
            # and lifts v5e's 16 MiB default before shapes grow.
            vmem_limit_bytes=32 * 1024 * 1024),
    )(*args)
    return q_pad[:, :1]


# ------------------------------ reference & init -------------------------------

def cnet_reference(params, s, a):
    """Pure-JAX reference matching the PyTorch forward."""
    T, B, _ = s.shape
    a_flat = a.reshape(T * B, -1) if a.ndim == 3 else a

    def cell(x, h, c, w_ih, w_hh, b_ih, b_hh):
        gates = x @ w_ih.T + b_ih + h @ w_hh.T + b_hh
        i, f, g, o = jnp.split(gates, 4, axis=-1)
        c = jax.nn.sigmoid(f) * c + jax.nn.sigmoid(i) * jnp.tanh(g)
        h = jax.nn.sigmoid(o) * jnp.tanh(c)
        return h, c

    h1 = c1 = h2 = c2 = jnp.zeros((B, HIDDEN), jnp.float32)
    outs = []
    for t in range(T):
        h1, c1 = cell(s[t], h1, c1, params["w_ih1"], params["w_hh1"],
                      params["b_ih1"], params["b_hh1"])
        h2, c2 = cell(h1, h2, c2, params["w_ih2"], params["w_hh2"],
                      params["b_ih2"], params["b_hh2"])
        outs.append(h2)
    x = jnp.stack(outs).reshape(T * B, HIDDEN)
    x = x @ params["w_fcs"].T + params["b_fcs"]
    y = a_flat @ params["w_fca"].T + params["b_fca"]
    net = jax.nn.relu(x + y)
    return net @ params["w_out"].T + params["b_out"]


def init_params(key, s_dim, a_dim):
    ks = jax.random.split(key, 16)
    k_lstm = 1.0 / jnp.sqrt(jnp.float32(HIDDEN))
    u = lambda k, shape: jax.random.uniform(k, shape, jnp.float32, -k_lstm, k_lstm)
    n = lambda k, shape: 0.1 * jax.random.normal(k, shape, jnp.float32)
    return {
        # nn.LSTM(s_dim, 10, 2): layer 0
        "w_ih1": u(ks[0], (4 * HIDDEN, s_dim)),
        "w_hh1": u(ks[1], (4 * HIDDEN, HIDDEN)),
        "b_ih1": u(ks[2], (4 * HIDDEN,)),
        "b_hh1": u(ks[3], (4 * HIDDEN,)),
        # layer 1
        "w_ih2": u(ks[4], (4 * HIDDEN, HIDDEN)),
        "w_hh2": u(ks[5], (4 * HIDDEN, HIDDEN)),
        "b_ih2": u(ks[6], (4 * HIDDEN,)),
        "b_hh2": u(ks[7], (4 * HIDDEN,)),
        # fcs: Linear(10, 30), weight ~ N(0, 0.1)
        "w_fcs": n(ks[8], (FC, HIDDEN)),
        "b_fcs": u(ks[9], (FC,)),
        # fca: Linear(a_dim, 30)
        "w_fca": n(ks[10], (FC, a_dim)),
        "b_fca": u(ks[11], (FC,)),
        # out: Linear(30, 1)
        "w_out": n(ks[12], (1, FC)),
        "b_out": u(ks[13], (1,)),
    }


if __name__ == "__main__":
    T, B, S_DIM, A_DIM = 8, 2, 4, 4

    key = jax.random.PRNGKey(0)
    k_p, k_s, k_a = jax.random.split(key, 3)
    params = init_params(k_p, S_DIM, A_DIM)
    s = jax.random.normal(k_s, (T, B, S_DIM), jnp.float32)
    a = jax.random.normal(k_a, (T, B, A_DIM), jnp.float32)

    # Assert the gate-padding invariant the recurrence relies on.
    check_pad_invariants(prepare_weights(params))

    q = cnet_forward(params, s, a)
    q = jax.block_until_ready(q)

    q_ref = cnet_reference(params, s, a)
    assert q.shape == (T * B, 1)
    err = float(jnp.max(jnp.abs(q - q_ref)))
    # Recurrence matmuls intentionally run with bf16 MXU operands (perf
    # review); tolerance reflects bf16 matmul precision over 8 steps.
    assert err < 1e-2, f"max abs err {err}"

    print("KERNEL_OK")
</pallas_src>

<mosaic_0001>
module attributes {stable_mosaic.version = 11 : i64} {
  func.func @kernel(%arg0: memref<16x4xf32, #tpu.memory_space<vmem>>, %arg1: memref<16x4xf32, #tpu.memory_space<vmem>>, %arg2: memref<4x512xf32, #tpu.memory_space<vmem>>, %arg3: memref<128x512xbf16, #tpu.memory_space<vmem>>, %arg4: memref<1x512xf32, #tpu.memory_space<vmem>>, %arg5: memref<256x512xbf16, #tpu.memory_space<vmem>>, %arg6: memref<1x512xf32, #tpu.memory_space<vmem>>, %arg7: memref<128x128xf32, #tpu.memory_space<vmem>>, %arg8: memref<4x128xf32, #tpu.memory_space<vmem>>, %arg9: memref<1x128xf32, #tpu.memory_space<vmem>>, %arg10: memref<128x128xf32, #tpu.memory_space<vmem>>, %arg11: memref<1x128xf32, #tpu.memory_space<vmem>>, %arg12: memref<16x128xf32, #tpu.memory_space<vmem>>, %arg13: memref<16x512xf32, #tpu.memory_space<vmem>>, %arg14: memref<16x128xf32, #tpu.memory_space<vmem>>) attributes {dimension_semantics = [], scalar_prefetch = 0 : i64, scratch_operands = 2 : i64, tpu.core_type = #tpu.core_type<tc>} {
    %c0 = arith.constant 0 : index
    %c0_0 = arith.constant 0 : index
    %0 = vector.load %arg0[%c0, %c0_0] : memref<16x4xf32, #tpu.memory_space<vmem>>, vector<16x4xf32>
    %c0_1 = arith.constant 0 : index
    %c0_2 = arith.constant 0 : index
    %1 = vector.load %arg2[%c0_1, %c0_2] : memref<4x512xf32, #tpu.memory_space<vmem>>, vector<4x512xf32>
    %cst = arith.constant dense<0.000000e+00> : vector<16x512xf32>
    %2 = tpu.matmul %0, %1, %cst {dimension_numbers = #tpu.dot_dimension_numbers<[1], [0], [0], [1], [0, 0, 1, 1], [], []>} : vector<16x4xf32>, vector<4x512xf32>, vector<16x512xf32> -> vector<16x512xf32>
    %c0_3 = arith.constant 0 : index
    %c0_4 = arith.constant 0 : index
    %3 = vector.load %arg4[%c0_3, %c0_4] : memref<1x512xf32, #tpu.memory_space<vmem>>, vector<1x512xf32>
    %4 = vector.broadcast %3 : vector<1x512xf32> to vector<16x512xf32>
    %5 = arith.addf %2, %4 : vector<16x512xf32>
    %c0_5 = arith.constant 0 : index
    %c0_6 = arith.constant 0 : index
    %6 = vector.load %arg13[%c0_5, %c0_6] : memref<16x512xf32, #tpu.memory_space<vmem>>, vector<16x512xf32>
    tpu.vector_store %arg13[%c0_5, %c0_6], %5 {strides = array<i32>} : memref<16x512xf32, #tpu.memory_space<vmem>>, vector<16x512xf32>,
    %c0_7 = arith.constant 0 : index
    %c0_8 = arith.constant 0 : index
    %7 = vector.load %arg3[%c0_7, %c0_8] : memref<128x512xbf16, #tpu.memory_space<vmem>>, vector<128x512xbf16>
    %c0_9 = arith.constant 0 : index
    %c0_10 = arith.constant 0 : index
    %8 = vector.load %arg5[%c0_9, %c0_10] : memref<256x512xbf16, #tpu.memory_space<vmem>>, vector<256x512xbf16>
    %c0_11 = arith.constant 0 : index
    %c0_12 = arith.constant 0 : index
    %9 = vector.load %arg6[%c0_11, %c0_12] : memref<1x512xf32, #tpu.memory_space<vmem>>, vector<1x512xf32>
    %10 = vector.shape_cast %9 : vector<1x512xf32> to vector<1x512xf32>
    %11 = vector.broadcast %10 : vector<1x512xf32> to vector<2x512xf32>
    %cst_13 = arith.constant 0.000000e+00 : f32
    %12 = vector.broadcast %cst_13 : f32 to vector<2x128xf32>
    %c0_14 = arith.constant 0 : index
    %c0_15 = arith.constant 0 : index
    %13 = vector.load %arg13[%c0_14, %c0_15] : memref<16x512xf32, #tpu.memory_space<vmem>>, vector<2x512xf32>
    %14 = arith.truncf %12 : vector<2x128xf32> to vector<2x128xbf16>
    %cst_16 = arith.constant dense<0.000000e+00> : vector<2x512xf32>
    %15 = tpu.matmul %14, %7, %cst_16 {dimension_numbers = #tpu.dot_dimension_numbers<[1], [0], [0], [1], [0, 0, 1, 1], [], []>} : vector<2x128xbf16>, vector<128x512xbf16>, vector<2x512xf32> -> vector<2x512xf32>
    %16 = arith.addf %13, %15 : vector<2x512xf32>
    %17 = vector.extract_strided_slice %16 {offsets = [0, 0], sizes = [2, 128], strides = [1, 1]} : vector<2x512xf32> to vector<2x128xf32>
    %cst_17 = arith.constant 5.000000e-01 : f32
    %18 = vector.broadcast %cst_17 : f32 to vector<2x128xf32>
    %19 = arith.mulf %18, %17 : vector<2x128xf32>
    %20 = math.tanh %19 : vector<2x128xf32>
    %cst_18 = arith.constant 5.000000e-01 : f32
    %21 = vector.broadcast %cst_18 : f32 to vector<2x128xf32>
    %22 = arith.mulf %21, %20 : vector<2x128xf32>
    %cst_19 = arith.constant 5.000000e-01 : f32
    %23 = vector.broadcast %cst_19 : f32 to vector<2x128xf32>
    %24 = arith.addf %22, %23 : vector<2x128xf32>
    %25 = vector.extract_strided_slice %16 {offsets = [0, 128], sizes = [2, 128], strides = [1, 1]} : vector<2x512xf32> to vector<2x128xf32>
    %cst_20 = arith.constant 5.000000e-01 : f32
    %26 = vector.broadcast %cst_20 : f32 to vector<2x128xf32>
    %27 = arith.mulf %26, %25 : vector<2x128xf32>
    %28 = math.tanh %27 : vector<2x128xf32>
    %cst_21 = arith.constant 5.000000e-01 : f32
    %29 = vector.broadcast %cst_21 : f32 to vector<2x128xf32>
    %30 = arith.mulf %29, %28 : vector<2x128xf32>
    %cst_22 = arith.constant 5.000000e-01 : f32
    %31 = vector.broadcast %cst_22 : f32 to vector<2x128xf32>
    %32 = arith.addf %30, %31 : vector<2x128xf32>
    %33 = vector.extract_strided_slice %16 {offsets = [0, 256], sizes = [2, 128], strides = [1, 1]} : vector<2x512xf32> to vector<2x128xf32>
    %34 = math.tanh %33 : vector<2x128xf32>
    %35 = vector.extract_strided_slice %16 {offsets = [0, 384], sizes = [2, 128], strides = [1, 1]} : vector<2x512xf32> to vector<2x128xf32>
    %cst_23 = arith.constant 5.000000e-01 : f32
    %36 = vector.broadcast %cst_23 : f32 to vector<2x128xf32>
    %37 = arith.mulf %36, %35 : vector<2x128xf32>
    %38 = math.tanh %37 : vector<2x128xf32>
    %cst_24 = arith.constant 5.000000e-01 : f32
    %39 = vector.broadcast %cst_24 : f32 to vector<2x128xf32>
    %40 = arith.mulf %39, %38 : vector<2x128xf32>
    %cst_25 = arith.constant 5.000000e-01 : f32
    %41 = vector.broadcast %cst_25 : f32 to vector<2x128xf32>
    %42 = arith.addf %40, %41 : vector<2x128xf32>
    %43 = arith.mulf %32, %12 : vector<2x128xf32>
    %44 = arith.mulf %24, %34 : vector<2x128xf32>
    %45 = arith.addf %43, %44 : vector<2x128xf32>
    %46 = math.tanh %45 : vector<2x128xf32>
    %47 = arith.mulf %42, %46 : vector<2x128xf32>
    %48 = tpu.concatenate %47, %12 in 1 : vector<2x128xf32>, vector<2x128xf32> -> vector<2x256xf32>
    %49 = arith.truncf %48 : vector<2x256xf32> to vector<2x256xbf16>
    %cst_26 = arith.constant dense<0.000000e+00> : vector<2x512xf32>
    %50 = tpu.matmul %49, %8, %cst_26 {dimension_numbers = #tpu.dot_dimension_numbers<[1], [0], [0], [1], [0, 0, 1, 1], [], []>} : vector<2x256xbf16>, vector<256x512xbf16>, vector<2x512xf32> -> vector<2x512xf32>
    %51 = arith.addf %50, %11 : vector<2x512xf32>
    %52 = vector.extract_strided_slice %51 {offsets = [0, 0], sizes = [2, 128], strides = [1, 1]} : vector<2x512xf32> to vector<2x128xf32>
    %cst_27 = arith.constant 5.000000e-01 : f32
    %53 = vector.broadcast %cst_27 : f32 to vector<2x128xf32>
    %54 = arith.mulf %53, %52 : vector<2x128xf32>
    %55 = math.tanh %54 : vector<2x128xf32>
    %cst_28 = arith.constant 5.000000e-01 : f32
    %56 = vector.broadcast %cst_28 : f32 to vector<2x128xf32>
    %57 = arith.mulf %56, %55 : vector<2x128xf32>
    %cst_29 = arith.constant 5.000000e-01 : f32
    %58 = vector.broadcast %cst_29 : f32 to vector<2x128xf32>
    %59 = arith.addf %57, %58 : vector<2x128xf32>
    %60 = vector.extract_strided_slice %51 {offsets = [0, 128], sizes = [2, 128], strides = [1, 1]} : vector<2x512xf32> to vector<2x128xf32>
    %cst_30 = arith.constant 5.000000e-01 : f32
    %61 = vector.broadcast %cst_30 : f32 to vector<2x128xf32>
    %62 = arith.mulf %61, %60 : vector<2x128xf32>
    %63 = math.tanh %62 : vector<2x128xf32>
    %cst_31 = arith.constant 5.000000e-01 : f32
    %64 = vector.broadcast %cst_31 : f32 to vector<2x128xf32>
    %65 = arith.mulf %64, %63 : vector<2x128xf32>
    %cst_32 = arith.constant 5.000000e-01 : f32
    %66 = vector.broadcast %cst_32 : f32 to vector<2x128xf32>
    %67 = arith.addf %65, %66 : vector<2x128xf32>
    %68 = vector.extract_strided_slice %51 {offsets = [0, 256], sizes = [2, 128], strides = [1, 1]} : vector<2x512xf32> to vector<2x128xf32>
    %69 = math.tanh %68 : vector<2x128xf32>
    %70 = vector.extract_strided_slice %51 {offsets = [0, 384], sizes = [2, 128], strides = [1, 1]} : vector<2x512xf32> to vector<2x128xf32>
    %cst_33 = arith.constant 5.000000e-01 : f32
    %71 = vector.broadcast %cst_33 : f32 to vector<2x128xf32>
    %72 = arith.mulf %71, %70 : vector<2x128xf32>
    %73 = math.tanh %72 : vector<2x128xf32>
    %cst_34 = arith.constant 5.000000e-01 : f32
    %74 = vector.broadcast %cst_34 : f32 to vector<2x128xf32>
    %75 = arith.mulf %74, %73 : vector<2x128xf32>
    %cst_35 = arith.constant 5.000000e-01 : f32
    %76 = vector.broadcast %cst_35 : f32 to vector<2x128xf32>
    %77 = arith.addf %75, %76 : vector<2x128xf32>
    %78 = arith.mulf %67, %12 : vector<2x128xf32>
    %79 = arith.mulf %59, %69 : vector<2x128xf32>
    %80 = arith.addf %78, %79 : vector<2x128xf32>
    %81 = math.tanh %80 : vector<2x128xf32>
    %82 = arith.mulf %77, %81 : vector<2x128xf32>
    %c0_36 = arith.constant 0 : index
    %c0_37 = arith.constant 0 : index
    %83 = vector.load %arg14[%c0_36, %c0_37] : memref<16x128xf32, #tpu.memory_space<vmem>>, vector<2x128xf32>
    tpu.vector_store %arg14[%c0_36, %c0_37], %82 {strides = array<i32>} : memref<16x128xf32, #tpu.memory_space<vmem>>, vector<2x128xf32>,
    %c2 = arith.constant 2 : index
    %c0_38 = arith.constant 0 : index
    %84 = vector.load %arg13[%c2, %c0_38] : memref<16x512xf32, #tpu.memory_space<vmem>>, vector<2x512xf32>
    %85 = arith.truncf %47 : vector<2x128xf32> to vector<2x128xbf16>
    %cst_39 = arith.constant dense<0.000000e+00> : vector<2x512xf32>
    %86 = tpu.matmul %85, %7, %cst_39 {dimension_numbers = #tpu.dot_dimension_numbers<[1], [0], [0], [1], [0, 0, 1, 1], [], []>} : vector<2x128xbf16>, vector<128x512xbf16>, vector<2x512xf32> -> vector<2x512xf32>
    %87 = arith.addf %84, %86 : vector<2x512xf32>
    %88 = vector.extract_strided_slice %87 {offsets = [0, 0], sizes = [2, 128], strides = [1, 1]} : vector<2x512xf32> to vector<2x128xf32>
    %cst_40 = arith.constant 5.000000e-01 : f32
    %89 = vector.broadcast %cst_40 : f32 to vector<2x128xf32>
    %90 = arith.mulf %89, %88 : vector<2x128xf32>
    %91 = math.tanh %90 : vector<2x128xf32>
    %cst_41 = arith.constant 5.000000e-01 : f32
    %92 = vector.broadcast %cst_41 : f32 to vector<2x128xf32>
    %93 = arith.mulf %92, %91 : vector<2x128xf32>
    %cst_42 = arith.constant 5.000000e-01 : f32
    %94 = vector.broadcast %cst_42 : f32 to vector<2x128xf32>
    %95 = arith.addf %93, %94 : vector<2x128xf32>
    %96 = vector.extract_strided_slice %87 {offsets = [0, 128], sizes = [2, 128], strides = [1, 1]} : vector<2x512xf32> to vector<2x128xf32>
    %cst_43 = arith.constant 5.000000e-01 : f32
    %97 = vector.broadcast %cst_43 : f32 to vector<2x128xf32>
    %98 = arith.mulf %97, %96 : vector<2x128xf32>
    %99 = math.tanh %98 : vector<2x128xf32>
    %cst_44 = arith.constant 5.000000e-01 : f32
    %100 = vector.broadcast %cst_44 : f32 to vector<2x128xf32>
    %101 = arith.mulf %100, %99 : vector<2x128xf32>
    %cst_45 = arith.constant 5.000000e-01 : f32
    %102 = vector.broadcast %cst_45 : f32 to vector<2x128xf32>
    %103 = arith.addf %101, %102 : vector<2x128xf32>
    %104 = vector.extract_strided_slice %87 {offsets = [0, 256], sizes = [2, 128], strides = [1, 1]} : vector<2x512xf32> to vector<2x128xf32>
    %105 = math.tanh %104 : vector<2x128xf32>
    %106 = vector.extract_strided_slice %87 {offsets = [0, 384], sizes = [2, 128], strides = [1, 1]} : vector<2x512xf32> to vector<2x128xf32>
    %cst_46 = arith.constant 5.000000e-01 : f32
    %107 = vector.broadcast %cst_46 : f32 to vector<2x128xf32>
    %108 = arith.mulf %107, %106 : vector<2x128xf32>
    %109 = math.tanh %108 : vector<2x128xf32>
    %cst_47 = arith.constant 5.000000e-01 : f32
    %110 = vector.broadcast %cst_47 : f32 to vector<2x128xf32>
    %111 = arith.mulf %110, %109 : vector<2x128xf32>
    %cst_48 = arith.constant 5.000000e-01 : f32
    %112 = vector.broadcast %cst_48 : f32 to vector<2x128xf32>
    %113 = arith.addf %111, %112 : vector<2x128xf32>
    %114 = arith.mulf %103, %45 : vector<2x128xf32>
    %115 = arith.mulf %95, %105 : vector<2x128xf32>
    %116 = arith.addf %114, %115 : vector<2x128xf32>
    %117 = math.tanh %116 : vector<2x128xf32>
    %118 = arith.mulf %113, %117 : vector<2x128xf32>
    %119 = tpu.concatenate %118, %82 in 1 : vector<2x128xf32>, vector<2x128xf32> -> vector<2x256xf32>
    %120 = arith.truncf %119 : vector<2x256xf32> to vector<2x256xbf16>
    %cst_49 = arith.constant dense<0.000000e+00> : vector<2x512xf32>
    %121 = tpu.matmul %120, %8, %cst_49 {dimension_numbers = #tpu.dot_dimension_numbers<[1], [0], [0], [1], [0, 0, 1, 1], [], []>} : vector<2x256xbf16>, vector<256x512xbf16>, vector<2x512xf32> -> vector<2x512xf32>
    %122 = arith.addf %121, %11 : vector<2x512xf32>
    %123 = vector.extract_strided_slice %122 {offsets = [0, 0], sizes = [2, 128], strides = [1, 1]} : vector<2x512xf32> to vector<2x128xf32>
    %cst_50 = arith.constant 5.000000e-01 : f32
    %124 = vector.broadcast %cst_50 : f32 to vector<2x128xf32>
    %125 = arith.mulf %124, %123 : vector<2x128xf32>
    %126 = math.tanh %125 : vector<2x128xf32>
    %cst_51 = arith.constant 5.000000e-01 : f32
    %127 = vector.broadcast %cst_51 : f32 to vector<2x128xf32>
    %128 = arith.mulf %127, %126 : vector<2x128xf32>
    %cst_52 = arith.constant 5.000000e-01 : f32
    %129 = vector.broadcast %cst_52 : f32 to vector<2x128xf32>
    %130 = arith.addf %128, %129 : vector<2x128xf32>
    %131 = vector.extract_strided_slice %122 {offsets = [0, 128], sizes = [2, 128], strides = [1, 1]} : vector<2x512xf32> to vector<2x128xf32>
    %cst_53 = arith.constant 5.000000e-01 : f32
    %132 = vector.broadcast %cst_53 : f32 to vector<2x128xf32>
    %133 = arith.mulf %132, %131 : vector<2x128xf32>
    %134 = math.tanh %133 : vector<2x128xf32>
    %cst_54 = arith.constant 5.000000e-01 : f32
    %135 = vector.broadcast %cst_54 : f32 to vector<2x128xf32>
    %136 = arith.mulf %135, %134 : vector<2x128xf32>
    %cst_55 = arith.constant 5.000000e-01 : f32
    %137 = vector.broadcast %cst_55 : f32 to vector<2x128xf32>
    %138 = arith.addf %136, %137 : vector<2x128xf32>
    %139 = vector.extract_strided_slice %122 {offsets = [0, 256], sizes = [2, 128], strides = [1, 1]} : vector<2x512xf32> to vector<2x128xf32>
    %140 = math.tanh %139 : vector<2x128xf32>
    %141 = vector.extract_strided_slice %122 {offsets = [0, 384], sizes = [2, 128], strides = [1, 1]} : vector<2x512xf32> to vector<2x128xf32>
    %cst_56 = arith.constant 5.000000e-01 : f32
    %142 = vector.broadcast %cst_56 : f32 to vector<2x128xf32>
    %143 = arith.mulf %142, %141 : vector<2x128xf32>
    %144 = math.tanh %143 : vector<2x128xf32>
    %cst_57 = arith.constant 5.000000e-01 : f32
    %145 = vector.broadcast %cst_57 : f32 to vector<2x128xf32>
    %146 = arith.mulf %145, %144 : vector<2x128xf32>
    %cst_58 = arith.constant 5.000000e-01 : f32
    %147 = vector.broadcast %cst_58 : f32 to vector<2x128xf32>
    %148 = arith.addf %146, %147 : vector<2x128xf32>
    %149 = arith.mulf %138, %80 : vector<2x128xf32>
    %150 = arith.mulf %130, %140 : vector<2x128xf32>
    %151 = arith.addf %149, %150 : vector<2x128xf32>
    %152 = math.tanh %151 : vector<2x128xf32>
    %153 = arith.mulf %148, %152 : vector<2x128xf32>
    %c2_59 = arith.constant 2 : index
    %c0_60 = arith.constant 0 : index
    %154 = vector.load %arg14[%c2_59, %c0_60] : memref<16x128xf32, #tpu.memory_space<vmem>>, vector<2x128xf32>
    tpu.vector_store %arg14[%c2_59, %c0_60], %153 {strides = array<i32>} : memref<16x128xf32, #tpu.memory_space<vmem>>, vector<2x128xf32>,
    %c4 = arith.constant 4 : index
    %c0_61 = arith.constant 0 : index
    %155 = vector.load %arg13[%c4, %c0_61] : memref<16x512xf32, #tpu.memory_space<vmem>>, vector<2x512xf32>
    %156 = arith.truncf %118 : vector<2x128xf32> to vector<2x128xbf16>
    %cst_62 = arith.constant dense<0.000000e+00> : vector<2x512xf32>
    %157 = tpu.matmul %156, %7, %cst_62 {dimension_numbers = #tpu.dot_dimension_numbers<[1], [0], [0], [1], [0, 0, 1, 1], [], []>} : vector<2x128xbf16>, vector<128x512xbf16>, vector<2x512xf32> -> vector<2x512xf32>
    %158 = arith.addf %155, %157 : vector<2x512xf32>
    %159 = vector.extract_strided_slice %158 {offsets = [0, 0], sizes = [2, 128], strides = [1, 1]} : vector<2x512xf32> to vector<2x128xf32>
    %cst_63 = arith.constant 5.000000e-01 : f32
    %160 = vector.broadcast %cst_63 : f32 to vector<2x128xf32>
    %161 = arith.mulf %160, %159 : vector<2x128xf32>
    %162 = math.tanh %161 : vector<2x128xf32>
    %cst_64 = arith.constant 5.000000e-01 : f32
    %163 = vector.broadcast %cst_64 : f32 to vector<2x128xf32>
    %164 = arith.mulf %163, %162 : vector<2x128xf32>
    %cst_65 = arith.constant 5.000000e-01 : f32
    %165 = vector.broadcast %cst_65 : f32 to vector<2x128xf32>
    %166 = arith.addf %164, %165 : vector<2x128xf32>
    %167 = vector.extract_strided_slice %158 {offsets = [0, 128], sizes = [2, 128], strides = [1, 1]} : vector<2x512xf32> to vector<2x128xf32>
    %cst_66 = arith.constant 5.000000e-01 : f32
    %168 = vector.broadcast %cst_66 : f32 to vector<2x128xf32>
    %169 = arith.mulf %168, %167 : vector<2x128xf32>
    %170 = math.tanh %169 : vector<2x128xf32>
    %cst_67 = arith.constant 5.000000e-01 : f32
    %171 = vector.broadcast %cst_67 : f32 to vector<2x128xf32>
    %172 = arith.mulf %171, %170 : vector<2x128xf32>
    %cst_68 = arith.constant 5.000000e-01 : f32
    %173 = vector.broadcast %cst_68 : f32 to vector<2x128xf32>
    %174 = arith.addf %172, %173 : vector<2x128xf32>
    %175 = vector.extract_strided_slice %158 {offsets = [0, 256], sizes = [2, 128], strides = [1, 1]} : vector<2x512xf32> to vector<2x128xf32>
    %176 = math.tanh %175 : vector<2x128xf32>
    %177 = vector.extract_strided_slice %158 {offsets = [0, 384], sizes = [2, 128], strides = [1, 1]} : vector<2x512xf32> to vector<2x128xf32>
    %cst_69 = arith.constant 5.000000e-01 : f32
    %178 = vector.broadcast %cst_69 : f32 to vector<2x128xf32>
    %179 = arith.mulf %178, %177 : vector<2x128xf32>
    %180 = math.tanh %179 : vector<2x128xf32>
    %cst_70 = arith.constant 5.000000e-01 : f32
    %181 = vector.broadcast %cst_70 : f32 to vector<2x128xf32>
    %182 = arith.mulf %181, %180 : vector<2x128xf32>
    %cst_71 = arith.constant 5.000000e-01 : f32
    %183 = vector.broadcast %cst_71 : f32 to vector<2x128xf32>
    %184 = arith.addf %182, %183 : vector<2x128xf32>
    %185 = arith.mulf %174, %116 : vector<2x128xf32>
    %186 = arith.mulf %166, %176 : vector<2x128xf32>
    %187 = arith.addf %185, %186 : vector<2x128xf32>
    %188 = math.tanh %187 : vector<2x128xf32>
    %189 = arith.mulf %184, %188 : vector<2x128xf32>
    %190 = tpu.concatenate %189, %153 in 1 : vector<2x128xf32>, vector<2x128xf32> -> vector<2x256xf32>
    %191 = arith.truncf %190 : vector<2x256xf32> to vector<2x256xbf16>
    %cst_72 = arith.constant dense<0.000000e+00> : vector<2x512xf32>
    %192 = tpu.matmul %191, %8, %cst_72 {dimension_numbers = #tpu.dot_dimension_numbers<[1], [0], [0], [1], [0, 0, 1, 1], [], []>} : vector<2x256xbf16>, vector<256x512xbf16>, vector<2x512xf32> -> vector<2x512xf32>
    %193 = arith.addf %192, %11 : vector<2x512xf32>
    %194 = vector.extract_strided_slice %193 {offsets = [0, 0], sizes = [2, 128], strides = [1, 1]} : vector<2x512xf32> to vector<2x128xf32>
    %cst_73 = arith.constant 5.000000e-01 : f32
    %195 = vector.broadcast %cst_73 : f32 to vector<2x128xf32>
    %196 = arith.mulf %195, %194 : vector<2x128xf32>
    %197 = math.tanh %196 : vector<2x128xf32>
    %cst_74 = arith.constant 5.000000e-01 : f32
    %198 = vector.broadcast %cst_74 : f32 to vector<2x128xf32>
    %199 = arith.mulf %198, %197 : vector<2x128xf32>
    %cst_75 = arith.constant 5.000000e-01 : f32
    %200 = vector.broadcast %cst_75 : f32 to vector<2x128xf32>
    %201 = arith.addf %199, %200 : vector<2x128xf32>
    %202 = vector.extract_strided_slice %193 {offsets = [0, 128], sizes = [2, 128], strides = [1, 1]} : vector<2x512xf32> to vector<2x128xf32>
    %cst_76 = arith.constant 5.000000e-01 : f32
    %203 = vector.broadcast %cst_76 : f32 to vector<2x128xf32>
    %204 = arith.mulf %203, %202 : vector<2x128xf32>
    %205 = math.tanh %204 : vector<2x128xf32>
    %cst_77 = arith.constant 5.000000e-01 : f32
    %206 = vector.broadcast %cst_77 : f32 to vector<2x128xf32>
    %207 = arith.mulf %206, %205 : vector<2x128xf32>
    %cst_78 = arith.constant 5.000000e-01 : f32
    %208 = vector.broadcast %cst_78 : f32 to vector<2x128xf32>
    %209 = arith.addf %207, %208 : vector<2x128xf32>
    %210 = vector.extract_strided_slice %193 {offsets = [0, 256], sizes = [2, 128], strides = [1, 1]} : vector<2x512xf32> to vector<2x128xf32>
    %211 = math.tanh %210 : vector<2x128xf32>
    %212 = vector.extract_strided_slice %193 {offsets = [0, 384], sizes = [2, 128], strides = [1, 1]} : vector<2x512xf32> to vector<2x128xf32>
    %cst_79 = arith.constant 5.000000e-01 : f32
    %213 = vector.broadcast %cst_79 : f32 to vector<2x128xf32>
    %214 = arith.mulf %213, %212 : vector<2x128xf32>
    %215 = math.tanh %214 : vector<2x128xf32>
    %cst_80 = arith.constant 5.000000e-01 : f32
    %216 = vector.broadcast %cst_80 : f32 to vector<2x128xf32>
    %217 = arith.mulf %216, %215 : vector<2x128xf32>
    %cst_81 = arith.constant 5.000000e-01 : f32
    %218 = vector.broadcast %cst_81 : f32 to vector<2x128xf32>
    %219 = arith.addf %217, %218 : vector<2x128xf32>
    %220 = arith.mulf %209, %151 : vector<2x128xf32>
    %221 = arith.mulf %201, %211 : vector<2x128xf32>
    %222 = arith.addf %220, %221 : vector<2x128xf32>
    %223 = math.tanh %222 : vector<2x128xf32>
    %224 = arith.mulf %219, %223 : vector<2x128xf32>
    %c4_82 = arith.constant 4 : index
    %c0_83 = arith.constant 0 : index
    %225 = vector.load %arg14[%c4_82, %c0_83] : memref<16x128xf32, #tpu.memory_space<vmem>>, vector<2x128xf32>
    tpu.vector_store %arg14[%c4_82, %c0_83], %224 {strides = array<i32>} : memref<16x128xf32, #tpu.memory_space<vmem>>, vector<2x128xf32>,
    %c6 = arith.constant 6 : index
    %c0_84 = arith.constant 0 : index
    %226 = vector.load %arg13[%c6, %c0_84] : memref<16x512xf32, #tpu.memory_space<vmem>>, vector<2x512xf32>
    %227 = arith.truncf %189 : vector<2x128xf32> to vector<2x128xbf16>
    %cst_85 = arith.constant dense<0.000000e+00> : vector<2x512xf32>
    %228 = tpu.matmul %227, %7, %cst_85 {dimension_numbers = #tpu.dot_dimension_numbers<[1], [0], [0], [1], [0, 0, 1, 1], [], []>} : vector<2x128xbf16>, vector<128x512xbf16>, vector<2x512xf32> -> vector<2x512xf32>
    %229 = arith.addf %226, %228 : vector<2x512xf32>
    %230 = vector.extract_strided_slice %229 {offsets = [0, 0], sizes = [2, 128], strides = [1, 1]} : vector<2x512xf32> to vector<2x128xf32>
    %cst_86 = arith.constant 5.000000e-01 : f32
    %231 = vector.broadcast %cst_86 : f32 to vector<2x128xf32>
    %232 = arith.mulf %231, %230 : vector<2x128xf32>
    %233 = math.tanh %232 : vector<2x128xf32>
    %cst_87 = arith.constant 5.000000e-01 : f32
    %234 = vector.broadcast %cst_87 : f32 to vector<2x128xf32>
    %235 = arith.mulf %234, %233 : vector<2x128xf32>
    %cst_88 = arith.constant 5.000000e-01 : f32
    %236 = vector.broadcast %cst_88 : f32 to vector<2x128xf32>
    %237 = arith.addf %235, %236 : vector<2x128xf32>
    %238 = vector.extract_strided_slice %229 {offsets = [0, 128], sizes = [2, 128], strides = [1, 1]} : vector<2x512xf32> to vector<2x128xf32>
    %cst_89 = arith.constant 5.000000e-01 : f32
    %239 = vector.broadcast %cst_89 : f32 to vector<2x128xf32>
    %240 = arith.mulf %239, %238 : vector<2x128xf32>
    %241 = math.tanh %240 : vector<2x128xf32>
    %cst_90 = arith.constant 5.000000e-01 : f32
    %242 = vector.broadcast %cst_90 : f32 to vector<2x128xf32>
    %243 = arith.mulf %242, %241 : vector<2x128xf32>
    %cst_91 = arith.constant 5.000000e-01 : f32
    %244 = vector.broadcast %cst_91 : f32 to vector<2x128xf32>
    %245 = arith.addf %243, %244 : vector<2x128xf32>
    %246 = vector.extract_strided_slice %229 {offsets = [0, 256], sizes = [2, 128], strides = [1, 1]} : vector<2x512xf32> to vector<2x128xf32>
    %247 = math.tanh %246 : vector<2x128xf32>
    %248 = vector.extract_strided_slice %229 {offsets = [0, 384], sizes = [2, 128], strides = [1, 1]} : vector<2x512xf32> to vector<2x128xf32>
    %cst_92 = arith.constant 5.000000e-01 : f32
    %249 = vector.broadcast %cst_92 : f32 to vector<2x128xf32>
    %250 = arith.mulf %249, %248 : vector<2x128xf32>
    %251 = math.tanh %250 : vector<2x128xf32>
    %cst_93 = arith.constant 5.000000e-01 : f32
    %252 = vector.broadcast %cst_93 : f32 to vector<2x128xf32>
    %253 = arith.mulf %252, %251 : vector<2x128xf32>
    %cst_94 = arith.constant 5.000000e-01 : f32
    %254 = vector.broadcast %cst_94 : f32 to vector<2x128xf32>
    %255 = arith.addf %253, %254 : vector<2x128xf32>
    %256 = arith.mulf %245, %187 : vector<2x128xf32>
    %257 = arith.mulf %237, %247 : vector<2x128xf32>
    %258 = arith.addf %256, %257 : vector<2x128xf32>
    %259 = math.tanh %258 : vector<2x128xf32>
    %260 = arith.mulf %255, %259 : vector<2x128xf32>
    %261 = tpu.concatenate %260, %224 in 1 : vector<2x128xf32>, vector<2x128xf32> -> vector<2x256xf32>
    %262 = arith.truncf %261 : vector<2x256xf32> to vector<2x256xbf16>
    %cst_95 = arith.constant dense<0.000000e+00> : vector<2x512xf32>
    %263 = tpu.matmul %262, %8, %cst_95 {dimension_numbers = #tpu.dot_dimension_numbers<[1], [0], [0], [1], [0, 0, 1, 1], [], []>} : vector<2x256xbf16>, vector<256x512xbf16>, vector<2x512xf32> -> vector<2x512xf32>
    %264 = arith.addf %263, %11 : vector<2x512xf32>
    %265 = vector.extract_strided_slice %264 {offsets = [0, 0], sizes = [2, 128], strides = [1, 1]} : vector<2x512xf32> to vector<2x128xf32>
    %cst_96 = arith.constant 5.000000e-01 : f32
    %266 = vector.broadcast %cst_96 : f32 to vector<2x128xf32>
    %267 = arith.mulf %266, %265 : vector<2x128xf32>
    %268 = math.tanh %267 : vector<2x128xf32>
    %cst_97 = arith.constant 5.000000e-01 : f32
    %269 = vector.broadcast %cst_97 : f32 to vector<2x128xf32>
    %270 = arith.mulf %269, %268 : vector<2x128xf32>
    %cst_98 = arith.constant 5.000000e-01 : f32
    %271 = vector.broadcast %cst_98 : f32 to vector<2x128xf32>
    %272 = arith.addf %270, %271 : vector<2x128xf32>
    %273 = vector.extract_strided_slice %264 {offsets = [0, 128], sizes = [2, 128], strides = [1, 1]} : vector<2x512xf32> to vector<2x128xf32>
    %cst_99 = arith.constant 5.000000e-01 : f32
    %274 = vector.broadcast %cst_99 : f32 to vector<2x128xf32>
    %275 = arith.mulf %274, %273 : vector<2x128xf32>
    %276 = math.tanh %275 : vector<2x128xf32>
    %cst_100 = arith.constant 5.000000e-01 : f32
    %277 = vector.broadcast %cst_100 : f32 to vector<2x128xf32>
    %278 = arith.mulf %277, %276 : vector<2x128xf32>
    %cst_101 = arith.constant 5.000000e-01 : f32
    %279 = vector.broadcast %cst_101 : f32 to vector<2x128xf32>
    %280 = arith.addf %278, %279 : vector<2x128xf32>
    %281 = vector.extract_strided_slice %264 {offsets = [0, 256], sizes = [2, 128], strides = [1, 1]} : vector<2x512xf32> to vector<2x128xf32>
    %282 = math.tanh %281 : vector<2x128xf32>
    %283 = vector.extract_strided_slice %264 {offsets = [0, 384], sizes = [2, 128], strides = [1, 1]} : vector<2x512xf32> to vector<2x128xf32>
    %cst_102 = arith.constant 5.000000e-01 : f32
    %284 = vector.broadcast %cst_102 : f32 to vector<2x128xf32>
    %285 = arith.mulf %284, %283 : vector<2x128xf32>
    %286 = math.tanh %285 : vector<2x128xf32>
    %cst_103 = arith.constant 5.000000e-01 : f32
    %287 = vector.broadcast %cst_103 : f32 to vector<2x128xf32>
    %288 = arith.mulf %287, %286 : vector<2x128xf32>
    %cst_104 = arith.constant 5.000000e-01 : f32
    %289 = vector.broadcast %cst_104 : f32 to vector<2x128xf32>
    %290 = arith.addf %288, %289 : vector<2x128xf32>
    %291 = arith.mulf %280, %222 : vector<2x128xf32>
    %292 = arith.mulf %272, %282 : vector<2x128xf32>
    %293 = arith.addf %291, %292 : vector<2x128xf32>
    %294 = math.tanh %293 : vector<2x128xf32>
    %295 = arith.mulf %290, %294 : vector<2x128xf32>
    %c6_105 = arith.constant 6 : index
    %c0_106 = arith.constant 0 : index
    %296 = vector.load %arg14[%c6_105, %c0_106] : memref<16x128xf32, #tpu.memory_space<vmem>>, vector<2x128xf32>
    tpu.vector_store %arg14[%c6_105, %c0_106], %295 {strides = array<i32>} : memref<16x128xf32, #tpu.memory_space<vmem>>, vector<2x128xf32>,
    %c8 = arith.constant 8 : index
    %c0_107 = arith.constant 0 : index
    %297 = vector.load %arg13[%c8, %c0_107] : memref<16x512xf32, #tpu.memory_space<vmem>>, vector<2x512xf32>
    %298 = arith.truncf %260 : vector<2x128xf32> to vector<2x128xbf16>
    %cst_108 = arith.constant dense<0.000000e+00> : vector<2x512xf32>
    %299 = tpu.matmul %298, %7, %cst_108 {dimension_numbers = #tpu.dot_dimension_numbers<[1], [0], [0], [1], [0, 0, 1, 1], [], []>} : vector<2x128xbf16>, vector<128x512xbf16>, vector<2x512xf32> -> vector<2x512xf32>
    %300 = arith.addf %297, %299 : vector<2x512xf32>
    %301 = vector.extract_strided_slice %300 {offsets = [0, 0], sizes = [2, 128], strides = [1, 1]} : vector<2x512xf32> to vector<2x128xf32>
    %cst_109 = arith.constant 5.000000e-01 : f32
    %302 = vector.broadcast %cst_109 : f32 to vector<2x128xf32>
    %303 = arith.mulf %302, %301 : vector<2x128xf32>
    %304 = math.tanh %303 : vector<2x128xf32>
    %cst_110 = arith.constant 5.000000e-01 : f32
    %305 = vector.broadcast %cst_110 : f32 to vector<2x128xf32>
    %306 = arith.mulf %305, %304 : vector<2x128xf32>
    %cst_111 = arith.constant 5.000000e-01 : f32
    %307 = vector.broadcast %cst_111 : f32 to vector<2x128xf32>
    %308 = arith.addf %306, %307 : vector<2x128xf32>
    %309 = vector.extract_strided_slice %300 {offsets = [0, 128], sizes = [2, 128], strides = [1, 1]} : vector<2x512xf32> to vector<2x128xf32>
    %cst_112 = arith.constant 5.000000e-01 : f32
    %310 = vector.broadcast %cst_112 : f32 to vector<2x128xf32>
    %311 = arith.mulf %310, %309 : vector<2x128xf32>
    %312 = math.tanh %311 : vector<2x128xf32>
    %cst_113 = arith.constant 5.000000e-01 : f32
    %313 = vector.broadcast %cst_113 : f32 to vector<2x128xf32>
    %314 = arith.mulf %313, %312 : vector<2x128xf32>
    %cst_114 = arith.constant 5.000000e-01 : f32
    %315 = vector.broadcast %cst_114 : f32 to vector<2x128xf32>
    %316 = arith.addf %314, %315 : vector<2x128xf32>
    %317 = vector.extract_strided_slice %300 {offsets = [0, 256], sizes = [2, 128], strides = [1, 1]} : vector<2x512xf32> to vector<2x128xf32>
    %318 = math.tanh %317 : vector<2x128xf32>
    %319 = vector.extract_strided_slice %300 {offsets = [0, 384], sizes = [2, 128], strides = [1, 1]} : vector<2x512xf32> to vector<2x128xf32>
    %cst_115 = arith.constant 5.000000e-01 : f32
    %320 = vector.broadcast %cst_115 : f32 to vector<2x128xf32>
    %321 = arith.mulf %320, %319 : vector<2x128xf32>
    %322 = math.tanh %321 : vector<2x128xf32>
    %cst_116 = arith.constant 5.000000e-01 : f32
    %323 = vector.broadcast %cst_116 : f32 to vector<2x128xf32>
    %324 = arith.mulf %323, %322 : vector<2x128xf32>
    %cst_117 = arith.constant 5.000000e-01 : f32
    %325 = vector.broadcast %cst_117 : f32 to vector<2x128xf32>
    %326 = arith.addf %324, %325 : vector<2x128xf32>
    %327 = arith.mulf %316, %258 : vector<2x128xf32>
    %328 = arith.mulf %308, %318 : vector<2x128xf32>
    %329 = arith.addf %327, %328 : vector<2x128xf32>
    %330 = math.tanh %329 : vector<2x128xf32>
    %331 = arith.mulf %326, %330 : vector<2x128xf32>
    %332 = tpu.concatenate %331, %295 in 1 : vector<2x128xf32>, vector<2x128xf32> -> vector<2x256xf32>
    %333 = arith.truncf %332 : vector<2x256xf32> to vector<2x256xbf16>
    %cst_118 = arith.constant dense<0.000000e+00> : vector<2x512xf32>
    %334 = tpu.matmul %333, %8, %cst_118 {dimension_numbers = #tpu.dot_dimension_numbers<[1], [0], [0], [1], [0, 0, 1, 1], [], []>} : vector<2x256xbf16>, vector<256x512xbf16>, vector<2x512xf32> -> vector<2x512xf32>
    %335 = arith.addf %334, %11 : vector<2x512xf32>
    %336 = vector.extract_strided_slice %335 {offsets = [0, 0], sizes = [2, 128], strides = [1, 1]} : vector<2x512xf32> to vector<2x128xf32>
    %cst_119 = arith.constant 5.000000e-01 : f32
    %337 = vector.broadcast %cst_119 : f32 to vector<2x128xf32>
    %338 = arith.mulf %337, %336 : vector<2x128xf32>
    %339 = math.tanh %338 : vector<2x128xf32>
    %cst_120 = arith.constant 5.000000e-01 : f32
    %340 = vector.broadcast %cst_120 : f32 to vector<2x128xf32>
    %341 = arith.mulf %340, %339 : vector<2x128xf32>
    %cst_121 = arith.constant 5.000000e-01 : f32
    %342 = vector.broadcast %cst_121 : f32 to vector<2x128xf32>
    %343 = arith.addf %341, %342 : vector<2x128xf32>
    %344 = vector.extract_strided_slice %335 {offsets = [0, 128], sizes = [2, 128], strides = [1, 1]} : vector<2x512xf32> to vector<2x128xf32>
    %cst_122 = arith.constant 5.000000e-01 : f32
    %345 = vector.broadcast %cst_122 : f32 to vector<2x128xf32>
    %346 = arith.mulf %345, %344 : vector<2x128xf32>
    %347 = math.tanh %346 : vector<2x128xf32>
    %cst_123 = arith.constant 5.000000e-01 : f32
    %348 = vector.broadcast %cst_123 : f32 to vector<2x128xf32>
    %349 = arith.mulf %348, %347 : vector<2x128xf32>
    %cst_124 = arith.constant 5.000000e-01 : f32
    %350 = vector.broadcast %cst_124 : f32 to vector<2x128xf32>
    %351 = arith.addf %349, %350 : vector<2x128xf32>
    %352 = vector.extract_strided_slice %335 {offsets = [0, 256], sizes = [2, 128], strides = [1, 1]} : vector<2x512xf32> to vector<2x128xf32>
    %353 = math.tanh %352 : vector<2x128xf32>
    %354 = vector.extract_strided_slice %335 {offsets = [0, 384], sizes = [2, 128], strides = [1, 1]} : vector<2x512xf32> to vector<2x128xf32>
    %cst_125 = arith.constant 5.000000e-01 : f32
    %355 = vector.broadcast %cst_125 : f32 to vector<2x128xf32>
    %356 = arith.mulf %355, %354 : vector<2x128xf32>
    %357 = math.tanh %356 : vector<2x128xf32>
    %cst_126 = arith.constant 5.000000e-01 : f32
    %358 = vector.broadcast %cst_126 : f32 to vector<2x128xf32>
    %359 = arith.mulf %358, %357 : vector<2x128xf32>
    %cst_127 = arith.constant 5.000000e-01 : f32
    %360 = vector.broadcast %cst_127 : f32 to vector<2x128xf32>
    %361 = arith.addf %359, %360 : vector<2x128xf32>
    %362 = arith.mulf %351, %293 : vector<2x128xf32>
    %363 = arith.mulf %343, %353 : vector<2x128xf32>
    %364 = arith.addf %362, %363 : vector<2x128xf32>
    %365 = math.tanh %364 : vector<2x128xf32>
    %366 = arith.mulf %361, %365 : vector<2x128xf32>
    %c8_128 = arith.constant 8 : index
    %c0_129 = arith.constant 0 : index
    %367 = vector.load %arg14[%c8_128, %c0_129] : memref<16x128xf32, #tpu.memory_space<vmem>>, vector<2x128xf32>
    tpu.vector_store %arg14[%c8_128, %c0_129], %366 {strides = array<i32>} : memref<16x128xf32, #tpu.memory_space<vmem>>, vector<2x128xf32>,
    %c10 = arith.constant 10 : index
    %c0_130 = arith.constant 0 : index
    %368 = vector.load %arg13[%c10, %c0_130] : memref<16x512xf32, #tpu.memory_space<vmem>>, vector<2x512xf32>
    %369 = arith.truncf %331 : vector<2x128xf32> to vector<2x128xbf16>
    %cst_131 = arith.constant dense<0.000000e+00> : vector<2x512xf32>
    %370 = tpu.matmul %369, %7, %cst_131 {dimension_numbers = #tpu.dot_dimension_numbers<[1], [0], [0], [1], [0, 0, 1, 1], [], []>} : vector<2x128xbf16>, vector<128x512xbf16>, vector<2x512xf32> -> vector<2x512xf32>
    %371 = arith.addf %368, %370 : vector<2x512xf32>
    %372 = vector.extract_strided_slice %371 {offsets = [0, 0], sizes = [2, 128], strides = [1, 1]} : vector<2x512xf32> to vector<2x128xf32>
    %cst_132 = arith.constant 5.000000e-01 : f32
    %373 = vector.broadcast %cst_132 : f32 to vector<2x128xf32>
    %374 = arith.mulf %373, %372 : vector<2x128xf32>
    %375 = math.tanh %374 : vector<2x128xf32>
    %cst_133 = arith.constant 5.000000e-01 : f32
    %376 = vector.broadcast %cst_133 : f32 to vector<2x128xf32>
    %377 = arith.mulf %376, %375 : vector<2x128xf32>
    %cst_134 = arith.constant 5.000000e-01 : f32
    %378 = vector.broadcast %cst_134 : f32 to vector<2x128xf32>
    %379 = arith.addf %377, %378 : vector<2x128xf32>
    %380 = vector.extract_strided_slice %371 {offsets = [0, 128], sizes = [2, 128], strides = [1, 1]} : vector<2x512xf32> to vector<2x128xf32>
    %cst_135 = arith.constant 5.000000e-01 : f32
    %381 = vector.broadcast %cst_135 : f32 to vector<2x128xf32>
    %382 = arith.mulf %381, %380 : vector<2x128xf32>
    %383 = math.tanh %382 : vector<2x128xf32>
    %cst_136 = arith.constant 5.000000e-01 : f32
    %384 = vector.broadcast %cst_136 : f32 to vector<2x128xf32>
    %385 = arith.mulf %384, %383 : vector<2x128xf32>
    %cst_137 = arith.constant 5.000000e-01 : f32
    %386 = vector.broadcast %cst_137 : f32 to vector<2x128xf32>
    %387 = arith.addf %385, %386 : vector<2x128xf32>
    %388 = vector.extract_strided_slice %371 {offsets = [0, 256], sizes = [2, 128], strides = [1, 1]} : vector<2x512xf32> to vector<2x128xf32>
    %389 = math.tanh %388 : vector<2x128xf32>
    %390 = vector.extract_strided_slice %371 {offsets = [0, 384], sizes = [2, 128], strides = [1, 1]} : vector<2x512xf32> to vector<2x128xf32>
    %cst_138 = arith.constant 5.000000e-01 : f32
    %391 = vector.broadcast %cst_138 : f32 to vector<2x128xf32>
    %392 = arith.mulf %391, %390 : vector<2x128xf32>
    %393 = math.tanh %392 : vector<2x128xf32>
    %cst_139 = arith.constant 5.000000e-01 : f32
    %394 = vector.broadcast %cst_139 : f32 to vector<2x128xf32>
    %395 = arith.mulf %394, %393 : vector<2x128xf32>
    %cst_140 = arith.constant 5.000000e-01 : f32
    %396 = vector.broadcast %cst_140 : f32 to vector<2x128xf32>
    %397 = arith.addf %395, %396 : vector<2x128xf32>
    %398 = arith.mulf %387, %329 : vector<2x128xf32>
    %399 = arith.mulf %379, %389 : vector<2x128xf32>
    %400 = arith.addf %398, %399 : vector<2x128xf32>
    %401 = math.tanh %400 : vector<2x128xf32>
    %402 = arith.mulf %397, %401 : vector<2x128xf32>
    %403 = tpu.concatenate %402, %366 in 1 : vector<2x128xf32>, vector<2x128xf32> -> vector<2x256xf32>
    %404 = arith.truncf %403 : vector<2x256xf32> to vector<2x256xbf16>
    %cst_141 = arith.constant dense<0.000000e+00> : vector<2x512xf32>
    %405 = tpu.matmul %404, %8, %cst_141 {dimension_numbers = #tpu.dot_dimension_numbers<[1], [0], [0], [1], [0, 0, 1, 1], [], []>} : vector<2x256xbf16>, vector<256x512xbf16>, vector<2x512xf32> -> vector<2x512xf32>
    %406 = arith.addf %405, %11 : vector<2x512xf32>
    %407 = vector.extract_strided_slice %406 {offsets = [0, 0], sizes = [2, 128], strides = [1, 1]} : vector<2x512xf32> to vector<2x128xf32>
    %cst_142 = arith.constant 5.000000e-01 : f32
    %408 = vector.broadcast %cst_142 : f32 to vector<2x128xf32>
    %409 = arith.mulf %408, %407 : vector<2x128xf32>
    %410 = math.tanh %409 : vector<2x128xf32>
    %cst_143 = arith.constant 5.000000e-01 : f32
    %411 = vector.broadcast %cst_143 : f32 to vector<2x128xf32>
    %412 = arith.mulf %411, %410 : vector<2x128xf32>
    %cst_144 = arith.constant 5.000000e-01 : f32
    %413 = vector.broadcast %cst_144 : f32 to vector<2x128xf32>
    %414 = arith.addf %412, %413 : vector<2x128xf32>
    %415 = vector.extract_strided_slice %406 {offsets = [0, 128], sizes = [2, 128], strides = [1, 1]} : vector<2x512xf32> to vector<2x128xf32>
    %cst_145 = arith.constant 5.000000e-01 : f32
    %416 = vector.broadcast %cst_145 : f32 to vector<2x128xf32>
    %417 = arith.mulf %416, %415 : vector<2x128xf32>
    %418 = math.tanh %417 : vector<2x128xf32>
    %cst_146 = arith.constant 5.000000e-01 : f32
    %419 = vector.broadcast %cst_146 : f32 to vector<2x128xf32>
    %420 = arith.mulf %419, %418 : vector<2x128xf32>
    %cst_147 = arith.constant 5.000000e-01 : f32
    %421 = vector.broadcast %cst_147 : f32 to vector<2x128xf32>
    %422 = arith.addf %420, %421 : vector<2x128xf32>
    %423 = vector.extract_strided_slice %406 {offsets = [0, 256], sizes = [2, 128], strides = [1, 1]} : vector<2x512xf32> to vector<2x128xf32>
    %424 = math.tanh %423 : vector<2x128xf32>
    %425 = vector.extract_strided_slice %406 {offsets = [0, 384], sizes = [2, 128], strides = [1, 1]} : vector<2x512xf32> to vector<2x128xf32>
    %cst_148 = arith.constant 5.000000e-01 : f32
    %426 = vector.broadcast %cst_148 : f32 to vector<2x128xf32>
    %427 = arith.mulf %426, %425 : vector<2x128xf32>
    %428 = math.tanh %427 : vector<2x128xf32>
    %cst_149 = arith.constant 5.000000e-01 : f32
    %429 = vector.broadcast %cst_149 : f32 to vector<2x128xf32>
    %430 = arith.mulf %429, %428 : vector<2x128xf32>
    %cst_150 = arith.constant 5.000000e-01 : f32
    %431 = vector.broadcast %cst_150 : f32 to vector<2x128xf32>
    %432 = arith.addf %430, %431 : vector<2x128xf32>
    %433 = arith.mulf %422, %364 : vector<2x128xf32>
    %434 = arith.mulf %414, %424 : vector<2x128xf32>
    %435 = arith.addf %433, %434 : vector<2x128xf32>
    %436 = math.tanh %435 : vector<2x128xf32>
    %437 = arith.mulf %432, %436 : vector<2x128xf32>
    %c10_151 = arith.constant 10 : index
    %c0_152 = arith.constant 0 : index
    %438 = vector.load %arg14[%c10_151, %c0_152] : memref<16x128xf32, #tpu.memory_space<vmem>>, vector<2x128xf32>
    tpu.vector_store %arg14[%c10_151, %c0_152], %437 {strides = array<i32>} : memref<16x128xf32, #tpu.memory_space<vmem>>, vector<2x128xf32>,
    %c12 = arith.constant 12 : index
    %c0_153 = arith.constant 0 : index
    %439 = vector.load %arg13[%c12, %c0_153] : memref<16x512xf32, #tpu.memory_space<vmem>>, vector<2x512xf32>
    %440 = arith.truncf %402 : vector<2x128xf32> to vector<2x128xbf16>
    %cst_154 = arith.constant dense<0.000000e+00> : vector<2x512xf32>
    %441 = tpu.matmul %440, %7, %cst_154 {dimension_numbers = #tpu.dot_dimension_numbers<[1], [0], [0], [1], [0, 0, 1, 1], [], []>} : vector<2x128xbf16>, vector<128x512xbf16>, vector<2x512xf32> -> vector<2x512xf32>
    %442 = arith.addf %439, %441 : vector<2x512xf32>
    %443 = vector.extract_strided_slice %442 {offsets = [0, 0], sizes = [2, 128], strides = [1, 1]} : vector<2x512xf32> to vector<2x128xf32>
    %cst_155 = arith.constant 5.000000e-01 : f32
    %444 = vector.broadcast %cst_155 : f32 to vector<2x128xf32>
    %445 = arith.mulf %444, %443 : vector<2x128xf32>
    %446 = math.tanh %445 : vector<2x128xf32>
    %cst_156 = arith.constant 5.000000e-01 : f32
    %447 = vector.broadcast %cst_156 : f32 to vector<2x128xf32>
    %448 = arith.mulf %447, %446 : vector<2x128xf32>
    %cst_157 = arith.constant 5.000000e-01 : f32
    %449 = vector.broadcast %cst_157 : f32 to vector<2x128xf32>
    %450 = arith.addf %448, %449 : vector<2x128xf32>
    %451 = vector.extract_strided_slice %442 {offsets = [0, 128], sizes = [2, 128], strides = [1, 1]} : vector<2x512xf32> to vector<2x128xf32>
    %cst_158 = arith.constant 5.000000e-01 : f32
    %452 = vector.broadcast %cst_158 : f32 to vector<2x128xf32>
    %453 = arith.mulf %452, %451 : vector<2x128xf32>
    %454 = math.tanh %453 : vector<2x128xf32>
    %cst_159 = arith.constant 5.000000e-01 : f32
    %455 = vector.broadcast %cst_159 : f32 to vector<2x128xf32>
    %456 = arith.mulf %455, %454 : vector<2x128xf32>
    %cst_160 = arith.constant 5.000000e-01 : f32
    %457 = vector.broadcast %cst_160 : f32 to vector<2x128xf32>
    %458 = arith.addf %456, %457 : vector<2x128xf32>
    %459 = vector.extract_strided_slice %442 {offsets = [0, 256], sizes = [2, 128], strides = [1, 1]} : vector<2x512xf32> to vector<2x128xf32>
    %460 = math.tanh %459 : vector<2x128xf32>
    %461 = vector.extract_strided_slice %442 {offsets = [0, 384], sizes = [2, 128], strides = [1, 1]} : vector<2x512xf32> to vector<2x128xf32>
    %cst_161 = arith.constant 5.000000e-01 : f32
    %462 = vector.broadcast %cst_161 : f32 to vector<2x128xf32>
    %463 = arith.mulf %462, %461 : vector<2x128xf32>
    %464 = math.tanh %463 : vector<2x128xf32>
    %cst_162 = arith.constant 5.000000e-01 : f32
    %465 = vector.broadcast %cst_162 : f32 to vector<2x128xf32>
    %466 = arith.mulf %465, %464 : vector<2x128xf32>
    %cst_163 = arith.constant 5.000000e-01 : f32
    %467 = vector.broadcast %cst_163 : f32 to vector<2x128xf32>
    %468 = arith.addf %466, %467 : vector<2x128xf32>
    %469 = arith.mulf %458, %400 : vector<2x128xf32>
    %470 = arith.mulf %450, %460 : vector<2x128xf32>
    %471 = arith.addf %469, %470 : vector<2x128xf32>
    %472 = math.tanh %471 : vector<2x128xf32>
    %473 = arith.mulf %468, %472 : vector<2x128xf32>
    %474 = tpu.concatenate %473, %437 in 1 : vector<2x128xf32>, vector<2x128xf32> -> vector<2x256xf32>
    %475 = arith.truncf %474 : vector<2x256xf32> to vector<2x256xbf16>
    %cst_164 = arith.constant dense<0.000000e+00> : vector<2x512xf32>
    %476 = tpu.matmul %475, %8, %cst_164 {dimension_numbers = #tpu.dot_dimension_numbers<[1], [0], [0], [1], [0, 0, 1, 1], [], []>} : vector<2x256xbf16>, vector<256x512xbf16>, vector<2x512xf32> -> vector<2x512xf32>
    %477 = arith.addf %476, %11 : vector<2x512xf32>
    %478 = vector.extract_strided_slice %477 {offsets = [0, 0], sizes = [2, 128], strides = [1, 1]} : vector<2x512xf32> to vector<2x128xf32>
    %cst_165 = arith.constant 5.000000e-01 : f32
    %479 = vector.broadcast %cst_165 : f32 to vector<2x128xf32>
    %480 = arith.mulf %479, %478 : vector<2x128xf32>
    %481 = math.tanh %480 : vector<2x128xf32>
    %cst_166 = arith.constant 5.000000e-01 : f32
    %482 = vector.broadcast %cst_166 : f32 to vector<2x128xf32>
    %483 = arith.mulf %482, %481 : vector<2x128xf32>
    %cst_167 = arith.constant 5.000000e-01 : f32
    %484 = vector.broadcast %cst_167 : f32 to vector<2x128xf32>
    %485 = arith.addf %483, %484 : vector<2x128xf32>
    %486 = vector.extract_strided_slice %477 {offsets = [0, 128], sizes = [2, 128], strides = [1, 1]} : vector<2x512xf32> to vector<2x128xf32>
    %cst_168 = arith.constant 5.000000e-01 : f32
    %487 = vector.broadcast %cst_168 : f32 to vector<2x128xf32>
    %488 = arith.mulf %487, %486 : vector<2x128xf32>
    %489 = math.tanh %488 : vector<2x128xf32>
    %cst_169 = arith.constant 5.000000e-01 : f32
    %490 = vector.broadcast %cst_169 : f32 to vector<2x128xf32>
    %491 = arith.mulf %490, %489 : vector<2x128xf32>
    %cst_170 = arith.constant 5.000000e-01 : f32
    %492 = vector.broadcast %cst_170 : f32 to vector<2x128xf32>
    %493 = arith.addf %491, %492 : vector<2x128xf32>
    %494 = vector.extract_strided_slice %477 {offsets = [0, 256], sizes = [2, 128], strides = [1, 1]} : vector<2x512xf32> to vector<2x128xf32>
    %495 = math.tanh %494 : vector<2x128xf32>
    %496 = vector.extract_strided_slice %477 {offsets = [0, 384], sizes = [2, 128], strides = [1, 1]} : vector<2x512xf32> to vector<2x128xf32>
    %cst_171 = arith.constant 5.000000e-01 : f32
    %497 = vector.broadcast %cst_171 : f32 to vector<2x128xf32>
    %498 = arith.mulf %497, %496 : vector<2x128xf32>
    %499 = math.tanh %498 : vector<2x128xf32>
    %cst_172 = arith.constant 5.000000e-01 : f32
    %500 = vector.broadcast %cst_172 : f32 to vector<2x128xf32>
    %501 = arith.mulf %500, %499 : vector<2x128xf32>
    %cst_173 = arith.constant 5.000000e-01 : f32
    %502 = vector.broadcast %cst_173 : f32 to vector<2x128xf32>
    %503 = arith.addf %501, %502 : vector<2x128xf32>
    %504 = arith.mulf %493, %435 : vector<2x128xf32>
    %505 = arith.mulf %485, %495 : vector<2x128xf32>
    %506 = arith.addf %504, %505 : vector<2x128xf32>
    %507 = math.tanh %506 : vector<2x128xf32>
    %508 = arith.mulf %503, %507 : vector<2x128xf32>
    %c12_174 = arith.constant 12 : index
    %c0_175 = arith.constant 0 : index
    %509 = vector.load %arg14[%c12_174, %c0_175] : memref<16x128xf32, #tpu.memory_space<vmem>>, vector<2x128xf32>
    tpu.vector_store %arg14[%c12_174, %c0_175], %508 {strides = array<i32>} : memref<16x128xf32, #tpu.memory_space<vmem>>, vector<2x128xf32>,
    %c14 = arith.constant 14 : index
    %c0_176 = arith.constant 0 : index
    %510 = vector.load %arg13[%c14, %c0_176] : memref<16x512xf32, #tpu.memory_space<vmem>>, vector<2x512xf32>
    %511 = arith.truncf %473 : vector<2x128xf32> to vector<2x128xbf16>
    %cst_177 = arith.constant dense<0.000000e+00> : vector<2x512xf32>
    %512 = tpu.matmul %511, %7, %cst_177 {dimension_numbers = #tpu.dot_dimension_numbers<[1], [0], [0], [1], [0, 0, 1, 1], [], []>} : vector<2x128xbf16>, vector<128x512xbf16>, vector<2x512xf32> -> vector<2x512xf32>
    %513 = arith.addf %510, %512 : vector<2x512xf32>
    %514 = vector.extract_strided_slice %513 {offsets = [0, 0], sizes = [2, 128], strides = [1, 1]} : vector<2x512xf32> to vector<2x128xf32>
    %cst_178 = arith.constant 5.000000e-01 : f32
    %515 = vector.broadcast %cst_178 : f32 to vector<2x128xf32>
    %516 = arith.mulf %515, %514 : vector<2x128xf32>
    %517 = math.tanh %516 : vector<2x128xf32>
    %cst_179 = arith.constant 5.000000e-01 : f32
    %518 = vector.broadcast %cst_179 : f32 to vector<2x128xf32>
    %519 = arith.mulf %518, %517 : vector<2x128xf32>
    %cst_180 = arith.constant 5.000000e-01 : f32
    %520 = vector.broadcast %cst_180 : f32 to vector<2x128xf32>
    %521 = arith.addf %519, %520 : vector<2x128xf32>
    %522 = vector.extract_strided_slice %513 {offsets = [0, 128], sizes = [2, 128], strides = [1, 1]} : vector<2x512xf32> to vector<2x128xf32>
    %cst_181 = arith.constant 5.000000e-01 : f32
    %523 = vector.broadcast %cst_181 : f32 to vector<2x128xf32>
    %524 = arith.mulf %523, %522 : vector<2x128xf32>
    %525 = math.tanh %524 : vector<2x128xf32>
    %cst_182 = arith.constant 5.000000e-01 : f32
    %526 = vector.broadcast %cst_182 : f32 to vector<2x128xf32>
    %527 = arith.mulf %526, %525 : vector<2x128xf32>
    %cst_183 = arith.constant 5.000000e-01 : f32
    %528 = vector.broadcast %cst_183 : f32 to vector<2x128xf32>
    %529 = arith.addf %527, %528 : vector<2x128xf32>
    %530 = vector.extract_strided_slice %513 {offsets = [0, 256], sizes = [2, 128], strides = [1, 1]} : vector<2x512xf32> to vector<2x128xf32>
    %531 = math.tanh %530 : vector<2x128xf32>
    %532 = vector.extract_strided_slice %513 {offsets = [0, 384], sizes = [2, 128], strides = [1, 1]} : vector<2x512xf32> to vector<2x128xf32>
    %cst_184 = arith.constant 5.000000e-01 : f32
    %533 = vector.broadcast %cst_184 : f32 to vector<2x128xf32>
    %534 = arith.mulf %533, %532 : vector<2x128xf32>
    %535 = math.tanh %534 : vector<2x128xf32>
    %cst_185 = arith.constant 5.000000e-01 : f32
    %536 = vector.broadcast %cst_185 : f32 to vector<2x128xf32>
    %537 = arith.mulf %536, %535 : vector<2x128xf32>
    %cst_186 = arith.constant 5.000000e-01 : f32
    %538 = vector.broadcast %cst_186 : f32 to vector<2x128xf32>
    %539 = arith.addf %537, %538 : vector<2x128xf32>
    %540 = arith.mulf %529, %471 : vector<2x128xf32>
    %541 = arith.mulf %521, %531 : vector<2x128xf32>
    %542 = arith.addf %540, %541 : vector<2x128xf32>
    %543 = math.tanh %542 : vector<2x128xf32>
    %544 = arith.mulf %539, %543 : vector<2x128xf32>
    %545 = tpu.concatenate %544, %508 in 1 : vector<2x128xf32>, vector<2x128xf32> -> vector<2x256xf32>
    %546 = arith.truncf %545 : vector<2x256xf32> to vector<2x256xbf16>
    %cst_187 = arith.constant dense<0.000000e+00> : vector<2x512xf32>
    %547 = tpu.matmul %546, %8, %cst_187 {dimension_numbers = #tpu.dot_dimension_numbers<[1], [0], [0], [1], [0, 0, 1, 1], [], []>} : vector<2x256xbf16>, vector<256x512xbf16>, vector<2x512xf32> -> vector<2x512xf32>
    %548 = arith.addf %547, %11 : vector<2x512xf32>
    %549 = vector.extract_strided_slice %548 {offsets = [0, 0], sizes = [2, 128], strides = [1, 1]} : vector<2x512xf32> to vector<2x128xf32>
    %cst_188 = arith.constant 5.000000e-01 : f32
    %550 = vector.broadcast %cst_188 : f32 to vector<2x128xf32>
    %551 = arith.mulf %550, %549 : vector<2x128xf32>
    %552 = math.tanh %551 : vector<2x128xf32>
    %cst_189 = arith.constant 5.000000e-01 : f32
    %553 = vector.broadcast %cst_189 : f32 to vector<2x128xf32>
    %554 = arith.mulf %553, %552 : vector<2x128xf32>
    %cst_190 = arith.constant 5.000000e-01 : f32
    %555 = vector.broadcast %cst_190 : f32 to vector<2x128xf32>
    %556 = arith.addf %554, %555 : vector<2x128xf32>
    %557 = vector.extract_strided_slice %548 {offsets = [0, 128], sizes = [2, 128], strides = [1, 1]} : vector<2x512xf32> to vector<2x128xf32>
    %cst_191 = arith.constant 5.000000e-01 : f32
    %558 = vector.broadcast %cst_191 : f32 to vector<2x128xf32>
    %559 = arith.mulf %558, %557 : vector<2x128xf32>
    %560 = math.tanh %559 : vector<2x128xf32>
    %cst_192 = arith.constant 5.000000e-01 : f32
    %561 = vector.broadcast %cst_192 : f32 to vector<2x128xf32>
    %562 = arith.mulf %561, %560 : vector<2x128xf32>
    %cst_193 = arith.constant 5.000000e-01 : f32
    %563 = vector.broadcast %cst_193 : f32 to vector<2x128xf32>
    %564 = arith.addf %562, %563 : vector<2x128xf32>
    %565 = vector.extract_strided_slice %548 {offsets = [0, 256], sizes = [2, 128], strides = [1, 1]} : vector<2x512xf32> to vector<2x128xf32>
    %566 = math.tanh %565 : vector<2x128xf32>
    %567 = vector.extract_strided_slice %548 {offsets = [0, 384], sizes = [2, 128], strides = [1, 1]} : vector<2x512xf32> to vector<2x128xf32>
    %cst_194 = arith.constant 5.000000e-01 : f32
    %568 = vector.broadcast %cst_194 : f32 to vector<2x128xf32>
    %569 = arith.mulf %568, %567 : vector<2x128xf32>
    %570 = math.tanh %569 : vector<2x128xf32>
    %cst_195 = arith.constant 5.000000e-01 : f32
    %571 = vector.broadcast %cst_195 : f32 to vector<2x128xf32>
    %572 = arith.mulf %571, %570 : vector<2x128xf32>
    %cst_196 = arith.constant 5.000000e-01 : f32
    %573 = vector.broadcast %cst_196 : f32 to vector<2x128xf32>
    %574 = arith.addf %572, %573 : vector<2x128xf32>
    %575 = arith.mulf %564, %506 : vector<2x128xf32>
    %576 = arith.mulf %556, %566 : vector<2x128xf32>
    %577 = arith.addf %575, %576 : vector<2x128xf32>
    %578 = math.tanh %577 : vector<2x128xf32>
    %579 = arith.mulf %574, %578 : vector<2x128xf32>
    %c14_197 = arith.constant 14 : index
    %c0_198 = arith.constant 0 : index
    %580 = vector.load %arg14[%c14_197, %c0_198] : memref<16x128xf32, #tpu.memory_space<vmem>>, vector<2x128xf32>
    tpu.vector_store %arg14[%c14_197, %c0_198], %579 {strides = array<i32>} : memref<16x128xf32, #tpu.memory_space<vmem>>, vector<2x128xf32>,
    %c0_199 = arith.constant 0 : index
    %c0_200 = arith.constant 0 : index
    %581 = vector.load %arg14[%c0_199, %c0_200] : memref<16x128xf32, #tpu.memory_space<vmem>>, vector<16x128xf32>
    %c0_201 = arith.constant 0 : index
    %c0_202 = arith.constant 0 : index
    %582 = vector.load %arg7[%c0_201, %c0_202] : memref<128x128xf32, #tpu.memory_space<vmem>>, vector<128x128xf32>
    %cst_203 = arith.constant dense<0.000000e+00> : vector<16x128xf32>
    %583 = tpu.matmul %581, %582, %cst_203 {dimension_numbers = #tpu.dot_dimension_numbers<[1], [0], [0], [1], [0, 0, 1, 1], [], []>} : vector<16x128xf32>, vector<128x128xf32>, vector<16x128xf32> -> vector<16x128xf32>
    %c0_204 = arith.constant 0 : index
    %c0_205 = arith.constant 0 : index
    %584 = vector.load %arg1[%c0_204, %c0_205] : memref<16x4xf32, #tpu.memory_space<vmem>>, vector<16x4xf32>
    %c0_206 = arith.constant 0 : index
    %c0_207 = arith.constant 0 : index
    %585 = vector.load %arg8[%c0_206, %c0_207] : memref<4x128xf32, #tpu.memory_space<vmem>>, vector<4x128xf32>
    %cst_208 = arith.constant dense<0.000000e+00> : vector<16x128xf32>
    %586 = tpu.matmul %584, %585, %cst_208 {dimension_numbers = #tpu.dot_dimension_numbers<[1], [0], [0], [1], [0, 0, 1, 1], [], []>} : vector<16x4xf32>, vector<4x128xf32>, vector<16x128xf32> -> vector<16x128xf32>
    %587 = arith.addf %583, %586 : vector<16x128xf32>
    %c0_209 = arith.constant 0 : index
    %c0_210 = arith.constant 0 : index
    %588 = vector.load %arg9[%c0_209, %c0_210] : memref<1x128xf32, #tpu.memory_space<vmem>>, vector<1x128xf32>
    %589 = vector.broadcast %588 : vector<1x128xf32> to vector<16x128xf32>
    %590 = arith.addf %587, %589 : vector<16x128xf32>
    %cst_211 = arith.constant 0.000000e+00 : f32
    %591 = vector.broadcast %cst_211 : f32 to vector<16x128xf32>
    %592 = arith.maximumf %590, %591 : vector<16x128xf32>
    %c0_212 = arith.constant 0 : index
    %c0_213 = arith.constant 0 : index
    %593 = vector.load %arg10[%c0_212, %c0_213] : memref<128x128xf32, #tpu.memory_space<vmem>>, vector<128x128xf32>
    %cst_214 = arith.constant dense<0.000000e+00> : vector<16x128xf32>
    %594 = tpu.matmul %592, %593, %cst_214 {dimension_numbers = #tpu.dot_dimension_numbers<[1], [0], [0], [1], [0, 0, 1, 1], [], []>} : vector<16x128xf32>, vector<128x128xf32>, vector<16x128xf32> -> vector<16x128xf32>
    %c0_215 = arith.constant 0 : index
    %c0_216 = arith.constant 0 : index
    %595 = vector.load %arg11[%c0_215, %c0_216] : memref<1x128xf32, #tpu.memory_space<vmem>>, vector<1x128xf32>
    %596 = vector.broadcast %595 : vector<1x128xf32> to vector<16x128xf32>
    %597 = arith.addf %594, %596 : vector<16x128xf32>
    %c0_217 = arith.constant 0 : index
    %c0_218 = arith.constant 0 : index
    %598 = vector.load %arg12[%c0_217, %c0_218] : memref<16x128xf32, #tpu.memory_space<vmem>>, vector<16x128xf32>
    tpu.vector_store %arg12[%c0_217, %c0_218], %597 {strides = array<i32>} : memref<16x128xf32, #tpu.memory_space<vmem>>, vector<16x128xf32>,
    return
  }
}

</mosaic_0001>

<llo_original>
// kernel: tpu_custom_call.1
$region0: #{tpu_custom_call.1}
  #allocation0 [shape = 'u32[]', space=smem, size = 0x4, offset = 0x4, fixed_abs, tag = 'smem constant byte address 0x4 - core index']
  #allocation1 [shape = 'u32[144,128]{1,0:T(1,128)}', space=vmem, size = 0x12000, scoped, tag = 'internal scratch']
  #allocation2 [shape = 'f32[16,512]{1,0:T(8,128)}', space=vmem, size = 0x8000, scoped, tag = 'scratch operand']
  #allocation3 [shape = 'f32[16,128]{1,0:T(8,128)}', space=vmem, size = 0x2000, scoped, tag = 'scratch operand']
  %s0 = inlined_call_operand.vmem [shape: f32[16,4], index: 0, kind: input, shape index: {}]
  %s1 = inlined_call_operand.vmem [shape: f32[16,4], index: 1, kind: input, shape index: {}]
  %s2 = inlined_call_operand.vmem [shape: f32[4,512], index: 2, kind: input, shape index: {}]
  %s3 = inlined_call_operand.hbm [shape: bf16[128,512], index: 3, kind: input, shape index: {}]
  %s4 = inlined_call_operand.vmem [shape: f32[1,512], index: 4, kind: input, shape index: {}]
  %s5 = inlined_call_operand.hbm [shape: bf16[256,512], index: 5, kind: input, shape index: {}]
  %s6 = inlined_call_operand.vmem [shape: f32[1,512], index: 6, kind: input, shape index: {}]
  %s7 = inlined_call_operand.hbm [shape: f32[128,128], index: 7, kind: input, shape index: {}]
  %s8 = inlined_call_operand.vmem [shape: f32[4,128], index: 8, kind: input, shape index: {}]
  %s9 = inlined_call_operand.vmem [shape: f32[1,128], index: 9, kind: input, shape index: {}]
  %s10 = inlined_call_operand.hbm [shape: f32[128,128], index: 10, kind: input, shape index: {}]
  %s11 = inlined_call_operand.vmem [shape: f32[1,128], index: 11, kind: input, shape index: {}]
  %s12 = inlined_call_operand.hbm [shape: f32[16,128], index: 12, kind: output, shape index: {}]
  %s13 = sld [smem:[#allocation0]]
  $region74: #{tpu_custom_call.1} parent=0
    _
  %s15 = ssub.s32 1, %s13
  %s16 = scalar_select 0, %s15, %s13
  $region1: #{tpu_custom_call.1} parent=0
    #allocation4 [shape = 'u8[131072]{0}', space=vmem, size = 0x20000, scoped, tag = 'input window, operand 3, single buffered']
    #allocation5 [shape = 's32[1]{0}', space=sflag, size = 0x4, scoped, tag = 'scoped memory for tpu_custom_call.1']
    #allocation6 [shape = 's32[1]{0}', space=sflag, size = 0x4, scoped, tag = 'scoped memory for tpu_custom_call.1']
    #allocation7 [shape = 'u8[262144]{0}', space=vmem, size = 0x40000, scoped, tag = 'input window, operand 5, single buffered']
    #allocation8 [shape = 's32[1]{0}', space=sflag, size = 0x4, scoped, tag = 'scoped memory for tpu_custom_call.1']
    #allocation9 [shape = 'u8[65536]{0}', space=vmem, size = 0x10000, scoped, tag = 'input window, operand 7, single buffered']
    #allocation10 [shape = 'u8[65536]{0}', space=vmem, size = 0x10000, scoped, tag = 'input window, operand 10, single buffered']
    #allocation11 [shape = 's32[1]{0}', space=sflag, size = 0x4, scoped, tag = 'scoped memory for tpu_custom_call.1']
    #allocation12 [shape = 'u8[8192]{0}', space=vmem, size = 0x2000, scoped, tag = 'output window, operand 0, single buffered']
    %17 = vsyncpa [#allocation5], 0
    %18 = vsyncpa [#allocation8], 0
    %19 = vsyncpa [#allocation11], 0
    %20 = vsyncpa [#allocation6], 0
    // Predicated region
    $region2: #{tpu_custom_call.1} parent=1 // pred_check
      _
    $region3: #{tpu_custom_call.1} parent=1 // pred_check_branch
      %22 = sbr.rel (0) target = $region5
    $region4: #{tpu_custom_call.1} parent=1 // pred_region
      _
    $region5: #{tpu_custom_call.1} parent=1 // pred_fallthru
      _
    // Predicated region
    $region6: #{tpu_custom_call.1} parent=1 // pred_check
      _
    $region7: #{tpu_custom_call.1} parent=1 // pred_check_branch
      %24 = sbr.rel (0) target = $region9
    $region8: #{tpu_custom_call.1} parent=1 // pred_region
      _
    $region9: #{tpu_custom_call.1} parent=1 // pred_fallthru
      _
    // Predicated region
    $region10: #{tpu_custom_call.1} parent=1 // pred_check
      _
    $region11: #{tpu_custom_call.1} parent=1 // pred_check_branch
      %26 = sbr.rel (0) target = $region13
    $region12: #{tpu_custom_call.1} parent=1 // pred_region
      _
    $region13: #{tpu_custom_call.1} parent=1 // pred_fallthru
      _
    // Predicated region
    $region14: #{tpu_custom_call.1} parent=1 // pred_check
      _
    $region15: #{tpu_custom_call.1} parent=1 // pred_check_branch
      %28 = sbr.rel (0) target = $region17
    $region16: #{tpu_custom_call.1} parent=1 // pred_region
      %s30 = ssub.s32 4096, 4096
      %31 = vsyncadd [#allocation5], %s30
      %s32 = sshll.u32 [#allocation4], 4
      %s33 = int_to_ptr.vmem [resolvable:$true] %s32
      %38 = dma.hbm_to_vmem [thread:$0]  %s3, 4096, %s33, [#allocation5], 256, 256, 16
    $region17: #{tpu_custom_call.1} parent=1 // pred_fallthru
      _
    // Predicated region
    $region18: #{tpu_custom_call.1} parent=1 // pred_check
      _
    $region19: #{tpu_custom_call.1} parent=1 // pred_check_branch
      %40 = sbr.rel (0) target = $region21
    $region20: #{tpu_custom_call.1} parent=1 // pred_region
      _
    $region21: #{tpu_custom_call.1} parent=1 // pred_fallthru
      _
    // Predicated region
    $region22: #{tpu_custom_call.1} parent=1 // pred_check
      _
    $region23: #{tpu_custom_call.1} parent=1 // pred_check_branch
      %42 = sbr.rel (0) target = $region25
    $region24: #{tpu_custom_call.1} parent=1 // pred_region
      %s44 = ssub.s32 8192, 8192
      %45 = vsyncadd [#allocation8], %s44
      %s46 = sshll.u32 [#allocation7], 4
      %s47 = int_to_ptr.vmem [resolvable:$true] %s46
      %52 = dma.hbm_to_vmem [thread:$0]  %s5, 8192, %s47, [#allocation8], 256, 256, 16
    $region25: #{tpu_custom_call.1} parent=1 // pred_fallthru
      _
    // Predicated region
    $region26: #{tpu_custom_call.1} parent=1 // pred_check
      _
    $region27: #{tpu_custom_call.1} parent=1 // pred_check_branch
      %54 = sbr.rel (0) target = $region29
    $region28: #{tpu_custom_call.1} parent=1 // pred_region
      _
    $region29: #{tpu_custom_call.1} parent=1 // pred_fallthru
      _
    // Predicated region
    $region30: #{tpu_custom_call.1} parent=1 // pred_check
      _
    $region31: #{tpu_custom_call.1} parent=1 // pred_check_branch
      %56 = sbr.rel (0) target = $region33
    $region32: #{tpu_custom_call.1} parent=1 // pred_region
      %s58 = ssub.s32 2048, 2048
      %59 = vsyncadd [#allocation8], %s58
      %s60 = sshll.u32 [#allocation9], 4
      %s61 = int_to_ptr.vmem [resolvable:$true] %s60
      %66 = dma.hbm_to_vmem [thread:$0]  %s7, 2048, %s61, [#allocation8], 128, 128, 8
    $region33: #{tpu_custom_call.1} parent=1 // pred_fallthru
      _
    // Predicated region
    $region34: #{tpu_custom_call.1} parent=1 // pred_check
      _
    $region35: #{tpu_custom_call.1} parent=1 // pred_check_branch
      %68 = sbr.rel (0) target = $region37
    $region36: #{tpu_custom_call.1} parent=1 // pred_region
      _
    $region37: #{tpu_custom_call.1} parent=1 // pred_fallthru
      _
    // Predicated region
    $region38: #{tpu_custom_call.1} parent=1 // pred_check
      _
    $region39: #{tpu_custom_call.1} parent=1 // pred_check_branch
      %70 = sbr.rel (0) target = $region41
    $region40: #{tpu_custom_call.1} parent=1 // pred_region
      _
    $region41: #{tpu_custom_call.1} parent=1 // pred_fallthru
      _
    // Predicated region
    $region42: #{tpu_custom_call.1} parent=1 // pred_check
      _
    $region43: #{tpu_custom_call.1} parent=1 // pred_check_branch
      %72 = sbr.rel (0) target = $region45
    $region44: #{tpu_custom_call.1} parent=1 // pred_region
      %s74 = ssub.s32 2048, 2048
      %75 = vsyncadd [#allocation11], %s74
      %s76 = sshll.u32 [#allocation10], 4
      %s77 = int_to_ptr.vmem [resolvable:$true] %s76
      %82 = dma.hbm_to_vmem [thread:$0]  %s10, 2048, %s77, [#allocation11], 128, 128, 8
    $region45: #{tpu_custom_call.1} parent=1 // pred_fallthru
      _
    // Predicated region
    $region46: #{tpu_custom_call.1} parent=1 // pred_check
      _
    $region47: #{tpu_custom_call.1} parent=1 // pred_check_branch
      %84 = sbr.rel (0) target = $region49
    $region48: #{tpu_custom_call.1} parent=1 // pred_region
      _
    $region49: #{tpu_custom_call.1} parent=1 // pred_fallthru
      _
    // Predicated region
    $region50: #{tpu_custom_call.1} parent=1 // pred_check
      _
    $region51: #{tpu_custom_call.1} parent=1 // pred_check_branch
      %86 = sbr.rel (0) target = $region53
    $region52: #{tpu_custom_call.1} parent=1 // pred_region
      %87 = dma.done [#allocation5], 4096
    $region53: #{tpu_custom_call.1} parent=1 // pred_fallthru
      _
    // Predicated region
    $region54: #{tpu_custom_call.1} parent=1 // pred_check
      _
    $region55: #{tpu_custom_call.1} parent=1 // pred_check_branch
      %89 = sbr.rel (0) target = $region57
    $region56: #{tpu_custom_call.1} parent=1 // pred_region
      %90 = dma.done [#allocation8], 8192
    $region57: #{tpu_custom_call.1} parent=1 // pred_fallthru
      _
    // Predicated region
    $region58: #{tpu_custom_call.1} parent=1 // pred_check
      _
    $region59: #{tpu_custom_call.1} parent=1 // pred_check_branch
      %92 = sbr.rel (0) target = $region61
    $region60: #{tpu_custom_call.1} parent=1 // pred_region
      %93 = dma.done [#allocation8], 2048
    $region61: #{tpu_custom_call.1} parent=1 // pred_fallthru
      _
    // Predicated region
    $region62: #{tpu_custom_call.1} parent=1 // pred_check
      _
    $region63: #{tpu_custom_call.1} parent=1 // pred_check_branch
      %95 = sbr.rel (0) target = $region65
    $region64: #{tpu_custom_call.1} parent=1 // pred_region
      %96 = dma.done [#allocation11], 2048
    $region65: #{tpu_custom_call.1} parent=1 // pred_fallthru
      _
    %v98 = vld [vmem:[%s0] sm:$0xff]
    %v99 = vld [vmem:[%s0 + $0x8] sm:$0xff]
    %v100 = vld [vmem:[%s2] sm:$0xff]
    %v101 = vld [vmem:[%s2 + $0x8] sm:$0xff]
    %v102 = vld [vmem:[%s4] sm:$0xf]
    %v104 = vlaneseq
    %v105 = vshrl.u32 %v104, 7
    %v106 = vsub.s32 0, %v105
    %v107 = vrot.slane %v102, %v106
    %v108 = vlaneseq
    %v109 = vshrl.u32 %v108, 7
    %v110 = vsub.s32 1, %v109
    %v111 = vrot.slane %v102, %v110
    %v112 = vlaneseq
    %v113 = vshrl.u32 %v112, 7
    %v114 = vsub.s32 2, %v113
    %v115 = vrot.slane %v102, %v114
    %v116 = vlaneseq
    %v117 = vshrl.u32 %v116, 7
    %v118 = vsub.s32 3, %v117
    %v119 = vrot.slane %v102, %v118
    %v126 = vcombine.high %v100, %v100
    %v127 = vcombine.high %v101, %v101
    %vm128 = vcmask 31744
    %v130 = vsel %vm128, %v98, 0
    %v133 = vsel %vm128, %v99, 0
    %vm135 = vcmask 1043456
    %v136 = vsel %vm135, %v100, 0
    %v138 = vsel %vm135, %v126, 0
    %v140 = vsel %vm135, %v101, 0
    %v142 = vsel %vm135, %v127, 0
    %144 = vmatprep.subr.mxu0 %v138
    %145 = vmatpush1.msra.mxu0 %v136
    %146 = vmatprep.subr.mxu0 0.0
    %147 = vmatpush1.msra.mxu0 0.0
    %148 = vmatprep.subr.mxu0 0.0
    %149 = vmatpush1.msra.mxu0 0.0
    %150 = vmatprep.subr.mxu0 0.0
    %151 = vmatpush1.msra.mxu0 0.0
    %152 = vmatprep.subr.mxu0 0.0
    %153 = vmatpush1.msra.mxu0 0.0
    %154 = vmatprep.subr.mxu0 0.0
    %155 = vmatpush1.msra.mxu0 0.0
    %156 = vmatprep.subr.mxu0 0.0
    %157 = vmatpush1.msra.mxu0 0.0
    %158 = vmatprep.subr.mxu0 0.0
    %159 = vmatpush1.msra.mxu0 0.0
    %160 = vmatprep.subr.mxu0 0.0
    %161 = vmatpush1.msra.mxu0 0.0
    %162 = vmatprep.subr.mxu0 0.0
    %163 = vmatpush1.msra.mxu0 0.0
    %164 = vmatprep.subr.mxu0 0.0
    %165 = vmatpush1.msra.mxu0 0.0
    %166 = vmatprep.subr.mxu0 0.0
    %167 = vmatpush1.msra.mxu0 0.0
    %168 = vmatprep.subr.mxu0 0.0
    %169 = vmatpush1.msra.mxu0 0.0
    %170 = vmatprep.subr.mxu0 0.0
    %171 = vmatpush1.msra.mxu0 0.0
    %172 = vmatprep.subr.mxu0 0.0
    %173 = vmatpush1.msra.mxu0 0.0
    %174 = vmatprep.subr.mxu0 0.0
    %175 = vmatpush1.msra.mxu0 0.0
    %176 = vmatprep.subr.mxu0 0.0
    %177 = vmatpush1.msra.mxu0 0.0
    %178 = vmatprep.subr.mxu0 0.0
    %179 = vmatpush1.msra.mxu0 0.0
    %180 = vmatprep.subr.mxu0 0.0
    %181 = vmatpush1.msra.mxu0 0.0
    %182 = vmatprep.subr.mxu0 0.0
    %183 = vmatpush1.msra.mxu0 0.0
    %184 = vmatprep.subr.mxu0 0.0
    %185 = vmatpush1.msra.mxu0 0.0
    %186 = vmatprep.subr.mxu0 0.0
    %187 = vmatpush1.msra.mxu0 0.0
    %188 = vmatprep.subr.mxu0 0.0
    %189 = vmatpush1.msra.mxu0 0.0
    %190 = vmatprep.subr.mxu0 0.0
    %191 = vmatpush1.msra.mxu0 0.0
    %192 = vmatprep.subr.mxu0 0.0
    %193 = vmatpush1.msra.mxu0 0.0
    %194 = vmatprep.subr.mxu0 0.0
    %195 = vmatpush1.msra.mxu0 0.0
    %196 = vmatprep.subr.mxu0 0.0
    %197 = vmatpush1.msra.mxu0 0.0
    %198 = vmatprep.subr.mxu0 0.0
    %199 = vmatpush1.msra.mxu0 0.0
    %200 = vmatprep.subr.mxu0 0.0
    %201 = vmatpush1.msra.mxu0 0.0
    %202 = vmatprep.subr.mxu0 0.0
    %203 = vmatpush1.msra.mxu0 0.0
    %204 = vmatprep.subr.mxu0 0.0
    %205 = vmatpush1.msra.mxu0 0.0
    %206 = vmatprep.subr.mxu0 0.0
    %207 = vmatpush1.msra.mxu0 0.0
    %208 = vmatprep.mubr.f32.mxu0 0.0
    %209 = vmatmul.mubr.f32.gmra.mrb[0].mxu0 %v130
    %v210 = vpop.f32.mrb[0].mxu0
    %v211 = vadd.f32 %v107, %v210
    %v212 = vpop.f32.mrb[0].mxu0
    %v213 = vadd.f32 %v111, %v212
    %214 = vmatprep.mubr.f32.mxu0 0.0
    %215 = vmatmul.mubr.f32.gmra.mrb[0].mxu0 %v133
    %v216 = vpop.f32.mrb[0].mxu0
    %v217 = vadd.f32 %v107, %v216
    %v218 = vpop.f32.mrb[0].mxu0
    %v219 = vadd.f32 %v111, %v218
    %220 = vdwg.mxu0
    %221 = vmatprep.subr.mxu0 %v142
    %222 = vmatpush1.msra.mxu0 %v140
    %223 = vmatprep.subr.mxu0 0.0
    %224 = vmatpush1.msra.mxu0 0.0
    %225 = vmatprep.subr.mxu0 0.0
    %226 = vmatpush1.msra.mxu0 0.0
    %227 = vmatprep.subr.mxu0 0.0
    %228 = vmatpush1.msra.mxu0 0.0
    %229 = vmatprep.subr.mxu0 0.0
    %230 = vmatpush1.msra.mxu0 0.0
    %231 = vmatprep.subr.mxu0 0.0
    %232 = vmatpush1.msra.mxu0 0.0
    %233 = vmatprep.subr.mxu0 0.0
    %234 = vmatpush1.msra.mxu0 0.0
    %235 = vmatprep.subr.mxu0 0.0
    %236 = vmatpush1.msra.mxu0 0.0
    %237 = vmatprep.subr.mxu0 0.0
    %238 = vmatpush1.msra.mxu0 0.0
    %239 = vmatprep.subr.mxu0 0.0
    %240 = vmatpush1.msra.mxu0 0.0
    %241 = vmatprep.subr.mxu0 0.0
    %242 = vmatpush1.msra.mxu0 0.0
    %243 = vmatprep.subr.mxu0 0.0
    %244 = vmatpush1.msra.mxu0 0.0
    %245 = vmatprep.subr.mxu0 0.0
    %246 = vmatpush1.msra.mxu0 0.0
    %247 = vmatprep.subr.mxu0 0.0
    %248 = vmatpush1.msra.mxu0 0.0
    %249 = vmatprep.subr.mxu0 0.0
    %250 = vmatpush1.msra.mxu0 0.0
    %251 = vmatprep.subr.mxu0 0.0
    %252 = vmatpush1.msra.mxu0 0.0
    %253 = vmatprep.subr.mxu0 0.0
    %254 = vmatpush1.msra.mxu0 0.0
    %255 = vmatprep.subr.mxu0 0.0
    %256 = vmatpush1.msra.mxu0 0.0
    %257 = vmatprep.subr.mxu0 0.0
    %258 = vmatpush1.msra.mxu0 0.0
    %259 = vmatprep.subr.mxu0 0.0
    %260 = vmatpush1.msra.mxu0 0.0
    %261 = vmatprep.subr.mxu0 0.0
    %262 = vmatpush1.msra.mxu0 0.0
    %263 = vmatprep.subr.mxu0 0.0
    %264 = vmatpush1.msra.mxu0 0.0
    %265 = vmatprep.subr.mxu0 0.0
    %266 = vmatpush1.msra.mxu0 0.0
    %267 = vmatprep.subr.mxu0 0.0
    %268 = vmatpush1.msra.mxu0 0.0
    %269 = vmatprep.subr.mxu0 0.0
    %270 = vmatpush1.msra.mxu0 0.0
    %271 = vmatprep.subr.mxu0 0.0
    %272 = vmatpush1.msra.mxu0 0.0
    %273 = vmatprep.subr.mxu0 0.0
    %274 = vmatpush1.msra.mxu0 0.0
    %275 = vmatprep.subr.mxu0 0.0
    %276 = vmatpush1.msra.mxu0 0.0
    %277 = vmatprep.subr.mxu0 0.0
    %278 = vmatpush1.msra.mxu0 0.0
    %279 = vmatprep.subr.mxu0 0.0
    %280 = vmatpush1.msra.mxu0 0.0
    %281 = vmatprep.subr.mxu0 0.0
    %282 = vmatpush1.msra.mxu0 0.0
    %283 = vmatprep.subr.mxu0 0.0
    %284 = vmatpush1.msra.mxu0 0.0
    %285 = vmatprep.mubr.f32.mxu0 0.0
    %286 = vmatmul.mubr.f32.gmra.mrb[0].mxu0 %v130
    %v287 = vpop.f32.mrb[0].mxu0
    %v288 = vadd.f32 %v115, %v287
    %v289 = vpop.f32.mrb[0].mxu0
    %v290 = vadd.f32 %v119, %v289
    %291 = vmatprep.mubr.f32.mxu0 0.0
    %292 = vmatmul.mubr.f32.gmra.mrb[0].mxu0 %v133
    %v293 = vpop.f32.mrb[0].mxu0
    %v294 = vadd.f32 %v115, %v293
    %v295 = vpop.f32.mrb[0].mxu0
    %v296 = vadd.f32 %v119, %v295
    %297 = vdwg.mxu0
    %298 = vst [vmem:[#allocation2] sm:$0xff] %v211
    %299 = vst [vmem:[#allocation2 + $0x8] sm:$0xff] %v213
    %300 = vst [vmem:[#allocation2 + $0x10] sm:$0xff] %v288
    %301 = vst [vmem:[#allocation2 + $0x18] sm:$0xff] %v290
    %302 = vst [vmem:[#allocation2 + $0x20] sm:$0xff] %v217
    %303 = vst [vmem:[#allocation2 + $0x28] sm:$0xff] %v219
    %304 = vst [vmem:[#allocation2 + $0x30] sm:$0xff] %v294
    %305 = vst [vmem:[#allocation2 + $0x38] sm:$0xff] %v296
    %v306 = vld [vmem:[#allocation4] sm:$0xff]
    %v307 = vld [vmem:[#allocation4 + $0x8] sm:$0xff]
    %v308 = vld [vmem:[#allocation4 + $0x10] sm:$0xff]
    %v309 = vld [vmem:[#allocation4 + $0x18] sm:$0xff]
    %v310 = vld [vmem:[#allocation4 + $0x20] sm:$0xff]
    %v311 = vld [vmem:[#allocation4 + $0x28] sm:$0xff]
    %v312 = vld [vmem:[#allocation4 + $0x30] sm:$0xff]
    %v313 = vld [vmem:[#allocation4 + $0x38] sm:$0xff]
    %v314 = vld [vmem:[#allocation4 + $0x40] sm:$0xff]
    %v315 = vld [vmem:[#allocation4 + $0x48] sm:$0xff]
    %v316 = vld [vmem:[#allocation4 + $0x50] sm:$0xff]
    %v317 = vld [vmem:[#allocation4 + $0x58] sm:$0xff]
    %v318 = vld [vmem:[#allocation4 + $0x60] sm:$0xff]
    %v319 = vld [vmem:[#allocation4 + $0x68] sm:$0xff]
    %v320 = vld [vmem:[#allocation4 + $0x70] sm:$0xff]
    %v321 = vld [vmem:[#allocation4 + $0x78] sm:$0xff]
    %v322 = vld [vmem:[#allocation4 + $0x80] sm:$0xff]
    %v323 = vld [vmem:[#allocation4 + $0x88] sm:$0xff]
    %v324 = vld [vmem:[#allocation4 + $0x90] sm:$0xff]
    %v325 = vld [vmem:[#allocation4 + $0x98] sm:$0xff]
    %v326 = vld [vmem:[#allocation4 + $0xa0] sm:$0xff]
    %v327 = vld [vmem:[#allocation4 + $0xa8] sm:$0xff]
    %v328 = vld [vmem:[#allocation4 + $0xb0] sm:$0xff]
    %v329 = vld [vmem:[#allocation4 + $0xb8] sm:$0xff]
    %v330 = vld [vmem:[#allocation4 + $0xc0] sm:$0xff]
    %v331 = vld [vmem:[#allocation4 + $0xc8] sm:$0xff]
    %v332 = vld [vmem:[#allocation4 + $0xd0] sm:$0xff]
    %v333 = vld [vmem:[#allocation4 + $0xd8] sm:$0xff]
    %v334 = vld [vmem:[#allocation4 + $0xe0] sm:$0xff]
    %v335 = vld [vmem:[#allocation4 + $0xe8] sm:$0xff]
    %v336 = vld [vmem:[#allocation4 + $0xf0] sm:$0xff]
    %v337 = vld [vmem:[#allocation4 + $0xf8] sm:$0xff]
    %v338 = vld [vmem:[#allocation7] sm:$0xff]
    %v339 = vld [vmem:[#allocation7 + $0x8] sm:$0xff]
    %v340 = vld [vmem:[#allocation7 + $0x10] sm:$0xff]
    %v341 = vld [vmem:[#allocation7 + $0x18] sm:$0xff]
    %v342 = vld [vmem:[#allocation7 + $0x20] sm:$0xff]
    %v343 = vld [vmem:[#allocation7 + $0x28] sm:$0xff]
    %v344 = vld [vmem:[#allocation7 + $0x30] sm:$0xff]
    %v345 = vld [vmem:[#allocation7 + $0x38] sm:$0xff]
    %v346 = vld [vmem:[#allocation7 + $0x40] sm:$0xff]
    %v347 = vld [vmem:[#allocation7 + $0x48] sm:$0xff]
    %v348 = vld [vmem:[#allocation7 + $0x50] sm:$0xff]
    %v349 = vld [vmem:[#allocation7 + $0x58] sm:$0xff]
    %v350 = vld [vmem:[#allocation7 + $0x60] sm:$0xff]
    %v351 = vld [vmem:[#allocation7 + $0x68] sm:$0xff]
    %v352 = vld [vmem:[#allocation7 + $0x70] sm:$0xff]
    %v353 = vld [vmem:[#allocation7 + $0x78] sm:$0xff]
    %v354 = vld [vmem:[#allocation7 + $0x80] sm:$0xff]
    %v355 = vld [vmem:[#allocation7 + $0x88] sm:$0xff]
    %v356 = vld [vmem:[#allocation7 + $0x90] sm:$0xff]
    %v357 = vld [vmem:[#allocation7 + $0x98] sm:$0xff]
    %v358 = vld [vmem:[#allocation7 + $0xa0] sm:$0xff]
    %v359 = vld [vmem:[#allocation7 + $0xa8] sm:$0xff]
    %v360 = vld [vmem:[#allocation7 + $0xb0] sm:$0xff]
    %v361 = vld [vmem:[#allocation7 + $0xb8] sm:$0xff]
    %v362 = vld [vmem:[#allocation7 + $0xc0] sm:$0xff]
    %v363 = vld [vmem:[#allocation7 + $0xc8] sm:$0xff]
    %v364 = vld [vmem:[#allocation7 + $0xd0] sm:$0xff]
    %v365 = vld [vmem:[#allocation7 + $0xd8] sm:$0xff]
    %v366 = vld [vmem:[#allocation7 + $0xe0] sm:$0xff]
    %v367 = vld [vmem:[#allocation7 + $0xe8] sm:$0xff]
    %v368 = vld [vmem:[#allocation7 + $0xf0] sm:$0xff]
    %v369 = vld [vmem:[#allocation7 + $0xf8] sm:$0xff]
    %v370 = vld [vmem:[#allocation7 + $0x100] sm:$0xff]
    %v371 = vld [vmem:[#allocation7 + $0x108] sm:$0xff]
    %v372 = vld [vmem:[#allocation7 + $0x110] sm:$0xff]
    %v373 = vld [vmem:[#allocation7 + $0x118] sm:$0xff]
    %v374 = vld [vmem:[#allocation7 + $0x120] sm:$0xff]
    %v375 = vld [vmem:[#allocation7 + $0x128] sm:$0xff]
    %v376 = vld [vmem:[#allocation7 + $0x130] sm:$0xff]
    %v377 = vld [vmem:[#allocation7 + $0x138] sm:$0xff]
    %v378 = vld [vmem:[#allocation7 + $0x140] sm:$0xff]
    %v379 = vld [vmem:[#allocation7 + $0x148] sm:$0xff]
    %v380 = vld [vmem:[#allocation7 + $0x150] sm:$0xff]
    %v381 = vld [vmem:[#allocation7 + $0x158] sm:$0xff]
    %v382 = vld [vmem:[#allocation7 + $0x160] sm:$0xff]
    %v383 = vld [vmem:[#allocation7 + $0x168] sm:$0xff]
    %v384 = vld [vmem:[#allocation7 + $0x170] sm:$0xff]
    %v385 = vld [vmem:[#allocation7 + $0x178] sm:$0xff]
    %v386 = vld [vmem:[#allocation7 + $0x180] sm:$0xff]
    %v387 = vld [vmem:[#allocation7 + $0x188] sm:$0xff]
    %v388 = vld [vmem:[#allocation7 + $0x190] sm:$0xff]
    %v389 = vld [vmem:[#allocation7 + $0x198] sm:$0xff]
    %v390 = vld [vmem:[#allocation7 + $0x1a0] sm:$0xff]
    %v391 = vld [vmem:[#allocation7 + $0x1a8] sm:$0xff]
    %v392 = vld [vmem:[#allocation7 + $0x1b0] sm:$0xff]
    %v393 = vld [vmem:[#allocation7 + $0x1b8] sm:$0xff]
    %v394 = vld [vmem:[#allocation7 + $0x1c0] sm:$0xff]
    %v395 = vld [vmem:[#allocation7 + $0x1c8] sm:$0xff]
    %v396 = vld [vmem:[#allocation7 + $0x1d0] sm:$0xff]
    %v397 = vld [vmem:[#allocation7 + $0x1d8] sm:$0xff]
    %v398 = vld [vmem:[#allocation7 + $0x1e0] sm:$0xff]
    %v399 = vld [vmem:[#allocation7 + $0x1e8] sm:$0xff]
    %v400 = vld [vmem:[#allocation7 + $0x1f0] sm:$0xff]
    %v401 = vld [vmem:[#allocation7 + $0x1f8] sm:$0xff]
    %v402 = vld [vmem:[%s6] sm:$0xf]
    %v404 = vlaneseq
    %v405 = vshrl.u32 %v404, 7
    %v406 = vsub.s32 0, %v405
    %v407 = vrot.slane %v402, %v406
    %v408 = vlaneseq
    %v409 = vshrl.u32 %v408, 7
    %v410 = vsub.s32 1, %v409
    %v411 = vrot.slane %v402, %v410
    %v412 = vlaneseq
    %v413 = vshrl.u32 %v412, 7
    %v414 = vsub.s32 2, %v413
    %v415 = vrot.slane %v402, %v414
    %v416 = vlaneseq
    %v417 = vshrl.u32 %v416, 7
    %v418 = vsub.s32 3, %v417
    %v419 = vrot.slane %v402, %v418
    %v424 = vld [vmem:[#allocation2] sm:$0x3]
    %v425 = vld [vmem:[#allocation2 + $0x8] sm:$0x3]
    %v426 = vld [vmem:[#allocation2 + $0x10] sm:$0x3]
    %v427 = vld [vmem:[#allocation2 + $0x18] sm:$0x3]
    %v460 = vunpack.c.l.b16 %v306
    %v461 = vunpack.c.h.b16 %v306
    %v462 = vunpack.c.l.b16 %v307
    %v463 = vunpack.c.h.b16 %v307
    %v464 = vunpack.c.l.b16 %v308
    %v465 = vunpack.c.h.b16 %v308
    %v466 = vunpack.c.l.b16 %v309
    %v467 = vunpack.c.h.b16 %v309
    %v468 = vunpack.c.l.b16 %v310
    %v469 = vunpack.c.h.b16 %v310
    %v470 = vunpack.c.l.b16 %v311
    %v471 = vunpack.c.h.b16 %v311
    %v472 = vunpack.c.l.b16 %v312
    %v473 = vunpack.c.h.b16 %v312
    %v474 = vunpack.c.l.b16 %v313
    %v475 = vunpack.c.h.b16 %v313
    %v476 = vunpack.c.l.b16 %v314
    %v477 = vunpack.c.h.b16 %v314
    %v478 = vunpack.c.l.b16 %v315
    %v479 = vunpack.c.h.b16 %v315
    %v480 = vunpack.c.l.b16 %v316
    %v481 = vunpack.c.h.b16 %v316
    %v482 = vunpack.c.l.b16 %v317
    %v483 = vunpack.c.h.b16 %v317
    %v484 = vunpack.c.l.b16 %v318
    %v485 = vunpack.c.h.b16 %v318
    %v486 = vunpack.c.l.b16 %v319
    %v487 = vunpack.c.h.b16 %v319
    %v488 = vunpack.c.l.b16 %v320
    %v489 = vunpack.c.h.b16 %v320
    %v490 = vunpack.c.l.b16 %v321
    %v491 = vunpack.c.h.b16 %v321
    %v492 = vunpack.c.l.b16 %v322
    %v493 = vunpack.c.h.b16 %v322
    %v494 = vunpack.c.l.b16 %v323
    %v495 = vunpack.c.h.b16 %v323
    %v496 = vunpack.c.l.b16 %v324
    %v497 = vunpack.c.h.b16 %v324
    %v498 = vunpack.c.l.b16 %v325
    %v499 = vunpack.c.h.b16 %v325
    %v500 = vunpack.c.l.b16 %v326
    %v501 = vunpack.c.h.b16 %v326
    %v502 = vunpack.c.l.b16 %v327
    %v503 = vunpack.c.h.b16 %v327
    %v504 = vunpack.c.l.b16 %v328
    %v505 = vunpack.c.h.b16 %v328
    %v506 = vunpack.c.l.b16 %v329
    %v507 = vunpack.c.h.b16 %v329
    %v508 = vunpack.c.l.b16 %v330
    %v509 = vunpack.c.h.b16 %v330
    %v510 = vunpack.c.l.b16 %v331
    %v511 = vunpack.c.h.b16 %v331
    %v512 = vunpack.c.l.b16 %v332
    %v513 = vunpack.c.h.b16 %v332
    %v514 = vunpack.c.l.b16 %v333
    %v515 = vunpack.c.h.b16 %v333
    %v516 = vunpack.c.l.b16 %v334
    %v517 = vunpack.c.h.b16 %v334
    %v518 = vunpack.c.l.b16 %v335
    %v519 = vunpack.c.h.b16 %v335
    %v520 = vunpack.c.l.b16 %v336
    %v521 = vunpack.c.h.b16 %v336
    %v522 = vunpack.c.l.b16 %v337
    %v523 = vunpack.c.h.b16 %v337
    %v524 = vpack.c.b16 %v464, %v460
    %v525 = vpack.c.b16 %v465, %v461
    %v526 = vpack.c.b16 %v466, %v462
    %v527 = vpack.c.b16 %v467, %v463
    %v528 = vpack.c.b16 %v472, %v468
    %v529 = vpack.c.b16 %v473, %v469
    %v530 = vpack.c.b16 %v474, %v470
    %v531 = vpack.c.b16 %v475, %v471
    %v532 = vpack.c.b16 %v480, %v476
    %v533 = vpack.c.b16 %v481, %v477
    %v534 = vpack.c.b16 %v482, %v478
    %v535 = vpack.c.b16 %v483, %v479
    %v536 = vpack.c.b16 %v488, %v484
    %v537 = vpack.c.b16 %v489, %v485
    %v538 = vpack.c.b16 %v490, %v486
    %v539 = vpack.c.b16 %v491, %v487
    %v540 = vpack.c.b16 %v496, %v492
    %v541 = vpack.c.b16 %v497, %v493
    %v542 = vpack.c.b16 %v498, %v494
    %v543 = vpack.c.b16 %v499, %v495
    %v544 = vpack.c.b16 %v504, %v500
    %v545 = vpack.c.b16 %v505, %v501
    %v546 = vpack.c.b16 %v506, %v502
    %v547 = vpack.c.b16 %v507, %v503
    %v548 = vpack.c.b16 %v512, %v508
    %v549 = vpack.c.b16 %v513, %v509
    %v550 = vpack.c.b16 %v514, %v510
    %v551 = vpack.c.b16 %v515, %v511
    %v552 = vpack.c.b16 %v520, %v516
    %v553 = vpack.c.b16 %v521, %v517
    %v554 = vpack.c.b16 %v522, %v518
    %v555 = vpack.c.b16 %v523, %v519
    %588 = vmatprep.subr.bf16.mxu0 %v525
    %589 = vmatpush1.bf16.msra.mxu0 %v524
    %590 = vmatprep.subr.bf16.mxu0 %v529
    %591 = vmatpush1.bf16.msra.mxu0 %v528
    %592 = vmatprep.subr.bf16.mxu0 %v533
    %593 = vmatpush1.bf16.msra.mxu0 %v532
    %594 = vmatprep.subr.bf16.mxu0 %v537
    %595 = vmatpush1.bf16.msra.mxu0 %v536
    %596 = vmatprep.subr.bf16.mxu0 %v541
    %597 = vmatpush1.bf16.msra.mxu0 %v540
    %598 = vmatprep.subr.bf16.mxu0 %v545
    %599 = vmatpush1.bf16.msra.mxu0 %v544
    %600 = vmatprep.subr.bf16.mxu0 %v549
    %601 = vmatpush1.bf16.msra.mxu0 %v548
    %602 = vmatprep.subr.bf16.mxu0 %v553
    %603 = vmatpush1.bf16.msra.mxu0 %v552
    %604 = vmatprep.subr.bf16.mxu0 0
    %605 = vmatpush1.bf16.msra.mxu0 0
    %606 = vmatprep.subr.bf16.mxu0 0
    %607 = vmatpush1.bf16.msra.mxu0 0
    %608 = vmatprep.subr.bf16.mxu0 0
    %609 = vmatpush1.bf16.msra.mxu0 0
    %610 = vmatprep.subr.bf16.mxu0 0
    %611 = vmatpush1.bf16.msra.mxu0 0
    %612 = vmatprep.subr.bf16.mxu0 0
    %613 = vmatpush1.bf16.msra.mxu0 0
    %614 = vmatprep.subr.bf16.mxu0 0
    %615 = vmatpush1.bf16.msra.mxu0 0
    %616 = vmatprep.subr.bf16.mxu0 0
    %617 = vmatpush1.bf16.msra.mxu0 0
    %618 = vmatprep.subr.bf16.mxu0 0
    %619 = vmatpush1.bf16.msra.mxu0 0
    %620 = vmatprep.mubr.bf16.mxu0 0
    %621 = vmatmul.mubr.bf16.gmra.mrb[0].mxu0 0
    %v622 = vpop.f32.mrb[0].mxu0
    %v623 = vadd.f32 0.0, %v622
    %v624 = vpop.f32.mrb[0].mxu0
    %v625 = vadd.f32 0.0, %v624
    %v626 = vpop.f32.mrb[0].mxu0
    %v627 = vpop.f32.mrb[0].mxu0
    %628 = vdwg.mxu0
    %629 = vmatprep.subr.bf16.mxu0 %v527
    %630 = vmatpush1.bf16.msra.mxu0 %v526
    %631 = vmatprep.subr.bf16.mxu0 %v531
    %632 = vmatpush1.bf16.msra.mxu0 %v530
    %633 = vmatprep.subr.bf16.mxu0 %v535
    %634 = vmatpush1.bf16.msra.mxu0 %v534
    %635 = vmatprep.subr.bf16.mxu0 %v539
    %636 = vmatpush1.bf16.msra.mxu0 %v538
    %637 = vmatprep.subr.bf16.mxu0 %v543
    %638 = vmatpush1.bf16.msra.mxu0 %v542
    %639 = vmatprep.subr.bf16.mxu0 %v547
    %640 = vmatpush1.bf16.msra.mxu0 %v546
    %641 = vmatprep.subr.bf16.mxu0 %v551
    %642 = vmatpush1.bf16.msra.mxu0 %v550
    %643 = vmatprep.subr.bf16.mxu0 %v555
    %644 = vmatpush1.bf16.msra.mxu0 %v554
    %645 = vmatprep.subr.bf16.mxu0 0
    %646 = vmatpush1.bf16.msra.mxu0 0
    %647 = vmatprep.subr.bf16.mxu0 0
    %648 = vmatpush1.bf16.msra.mxu0 0
    %649 = vmatprep.subr.bf16.mxu0 0
    %650 = vmatpush1.bf16.msra.mxu0 0
    %651 = vmatprep.subr.bf16.mxu0 0
    %652 = vmatpush1.bf16.msra.mxu0 0
    %653 = vmatprep.subr.bf16.mxu0 0
    %654 = vmatpush1.bf16.msra.mxu0 0
    %655 = vmatprep.subr.bf16.mxu0 0
    %656 = vmatpush1.bf16.msra.mxu0 0
    %657 = vmatprep.subr.bf16.mxu0 0
    %658 = vmatpush1.bf16.msra.mxu0 0
    %659 = vmatprep.subr.bf16.mxu0 0
    %660 = vmatpush1.bf16.msra.mxu0 0
    %661 = vmatprep.mubr.bf16.mxu0 0
    %662 = vmatmul.mubr.bf16.gmra.mrb[0].mxu0 0
    %v663 = vpop.f32.mrb[0].mxu0
    %v664 = vadd.f32 0.0, %v663
    %v665 = vpop.f32.mrb[0].mxu0
    %v666 = vadd.f32 0.0, %v665
    %v667 = vpop.f32.mrb[0].mxu0
    %v668 = vpop.f32.mrb[0].mxu0
    %669 = vdwg.mxu0
    %v670 = vadd.f32 %v424, %v623
    %v671 = vadd.f32 %v425, %v625
    %v672 = vadd.f32 %v426, %v664
    %v673 = vadd.f32 %v427, %v666
    %v674 = vmul.f32 %v670, 0.5
    %v675 = vtanh.pop %v674
    %v676 = vmul.f32 %v675, 0.5
    %v677 = vadd.f32 %v676, 0.5
    %v678 = vmul.f32 %v671, 0.5
    %v679 = vtanh.pop %v678
    %v680 = vmul.f32 %v679, 0.5
    %v681 = vadd.f32 %v680, 0.5
    %v682 = vtanh.pop %v672
    %v683 = vmul.f32 %v673, 0.5
    %v684 = vtanh.pop %v683
    %v685 = vmul.f32 %v684, 0.5
    %v686 = vadd.f32 %v685, 0.5
    %v687 = vmul.f32 %v681, 0.0
    %v688 = vmul.f32 %v677, %v682
    %v689 = vadd.f32 %v687, %v688
    %v690 = vtanh.pop %v689
    %v691 = vmul.f32 %v686, %v690
    %v692 = vpack.c.bf16 %v691, %v691
    %v693 = vpack.c.bf16 0.0, 0.0
    %v758 = vunpack.c.l.b16 %v338
    %v759 = vunpack.c.h.b16 %v338
    %v760 = vunpack.c.l.b16 %v339
    %v761 = vunpack.c.h.b16 %v339
    %v762 = vunpack.c.l.b16 %v340
    %v763 = vunpack.c.h.b16 %v340
    %v764 = vunpack.c.l.b16 %v341
    %v765 = vunpack.c.h.b16 %v341
    %v766 = vunpack.c.l.b16 %v342
    %v767 = vunpack.c.h.b16 %v342
    %v768 = vunpack.c.l.b16 %v343
    %v769 = vunpack.c.h.b16 %v343
    %v770 = vunpack.c.l.b16 %v344
    %v771 = vunpack.c.h.b16 %v344
    %v772 = vunpack.c.l.b16 %v345
    %v773 = vunpack.c.h.b16 %v345
    %v774 = vunpack.c.l.b16 %v346
    %v775 = vunpack.c.h.b16 %v346
    %v776 = vunpack.c.l.b16 %v347
    %v777 = vunpack.c.h.b16 %v347
    %v778 = vunpack.c.l.b16 %v348
    %v779 = vunpack.c.h.b16 %v348
    %v780 = vunpack.c.l.b16 %v349
    %v781 = vunpack.c.h.b16 %v349
    %v782 = vunpack.c.l.b16 %v350
    %v783 = vunpack.c.h.b16 %v350
    %v784 = vunpack.c.l.b16 %v351
    %v785 = vunpack.c.h.b16 %v351
    %v786 = vunpack.c.l.b16 %v352
    %v787 = vunpack.c.h.b16 %v352
    %v788 = vunpack.c.l.b16 %v353
    %v789 = vunpack.c.h.b16 %v353
    %v790 = vunpack.c.l.b16 %v354
    %v791 = vunpack.c.h.b16 %v354
    %v792 = vunpack.c.l.b16 %v355
    %v793 = vunpack.c.h.b16 %v355
    %v794 = vunpack.c.l.b16 %v356
    %v795 = vunpack.c.h.b16 %v356
    %v796 = vunpack.c.l.b16 %v357
    %v797 = vunpack.c.h.b16 %v357
    %v798 = vunpack.c.l.b16 %v358
    %v799 = vunpack.c.h.b16 %v358
    %v800 = vunpack.c.l.b16 %v359
    %v801 = vunpack.c.h.b16 %v359
    %v802 = vunpack.c.l.b16 %v360
    %v803 = vunpack.c.h.b16 %v360
    %v804 = vunpack.c.l.b16 %v361
    %v805 = vunpack.c.h.b16 %v361
    %v806 = vunpack.c.l.b16 %v362
    %v807 = vunpack.c.h.b16 %v362
    %v808 = vunpack.c.l.b16 %v363
    %v809 = vunpack.c.h.b16 %v363
    %v810 = vunpack.c.l.b16 %v364
    %v811 = vunpack.c.h.b16 %v364
    %v812 = vunpack.c.l.b16 %v365
    %v813 = vunpack.c.h.b16 %v365
    %v814 = vunpack.c.l.b16 %v366
    %v815 = vunpack.c.h.b16 %v366
    %v816 = vunpack.c.l.b16 %v367
    %v817 = vunpack.c.h.b16 %v367
    %v818 = vunpack.c.l.b16 %v368
    %v819 = vunpack.c.h.b16 %v368
    %v820 = vunpack.c.l.b16 %v369
    %v821 = vunpack.c.h.b16 %v369
    %v822 = vunpack.c.l.b16 %v370
    %v823 = vunpack.c.h.b16 %v370
    %v824 = vunpack.c.l.b16 %v371
    %v825 = vunpack.c.h.b16 %v371
    %v826 = vunpack.c.l.b16 %v372
    %v827 = vunpack.c.h.b16 %v372
    %v828 = vunpack.c.l.b16 %v373
    %v829 = vunpack.c.h.b16 %v373
    %v830 = vunpack.c.l.b16 %v374
    %v831 = vunpack.c.h.b16 %v374
    %v832 = vunpack.c.l.b16 %v375
    %v833 = vunpack.c.h.b16 %v375
    %v834 = vunpack.c.l.b16 %v376
    %v835 = vunpack.c.h.b16 %v376
    %v836 = vunpack.c.l.b16 %v377
    %v837 = vunpack.c.h.b16 %v377
    %v838 = vunpack.c.l.b16 %v378
    %v839 = vunpack.c.h.b16 %v378
    %v840 = vunpack.c.l.b16 %v379
    %v841 = vunpack.c.h.b16 %v379
    %v842 = vunpack.c.l.b16 %v380
    %v843 = vunpack.c.h.b16 %v380
    %v844 = vunpack.c.l.b16 %v381
    %v845 = vunpack.c.h.b16 %v381
    %v846 = vunpack.c.l.b16 %v382
    %v847 = vunpack.c.h.b16 %v382
    %v848 = vunpack.c.l.b16 %v383
    %v849 = vunpack.c.h.b16 %v383
    %v850 = vunpack.c.l.b16 %v384
    %v851 = vunpack.c.h.b16 %v384
    %v852 = vunpack.c.l.b16 %v385
    %v853 = vunpack.c.h.b16 %v385
    %v854 = vunpack.c.l.b16 %v386
    %v855 = vunpack.c.h.b16 %v386
    %v856 = vunpack.c.l.b16 %v387
    %v857 = vunpack.c.h.b16 %v387
    %v858 = vunpack.c.l.b16 %v388
    %v859 = vunpack.c.h.b16 %v388
    %v860 = vunpack.c.l.b16 %v389
    %v861 = vunpack.c.h.b16 %v389
    %v862 = vunpack.c.l.b16 %v390
    %v863 = vunpack.c.h.b16 %v390
    %v864 = vunpack.c.l.b16 %v391
    %v865 = vunpack.c.h.b16 %v391
    %v866 = vunpack.c.l.b16 %v392
    %v867 = vunpack.c.h.b16 %v392
    %v868 = vunpack.c.l.b16 %v393
    %v869 = vunpack.c.h.b16 %v393
    %v870 = vunpack.c.l.b16 %v394
    %v871 = vunpack.c.h.b16 %v394
    %v872 = vunpack.c.l.b16 %v395
    %v873 = vunpack.c.h.b16 %v395
    %v874 = vunpack.c.l.b16 %v396
    %v875 = vunpack.c.h.b16 %v396
    %v876 = vunpack.c.l.b16 %v397
    %v877 = vunpack.c.h.b16 %v397
    %v878 = vunpack.c.l.b16 %v398
    %v879 = vunpack.c.h.b16 %v398
    %v880 = vunpack.c.l.b16 %v399
    %v881 = vunpack.c.h.b16 %v399
    %v882 = vunpack.c.l.b16 %v400
    %v883 = vunpack.c.h.b16 %v400
    %v884 = vunpack.c.l.b16 %v401
    %v885 = vunpack.c.h.b16 %v401
    %v886 = vpack.c.b16 %v762, %v758
    %v887 = vpack.c.b16 %v763, %v759
    %v888 = vpack.c.b16 %v764, %v760
    %v889 = vpack.c.b16 %v765, %v761
    %v890 = vpack.c.b16 %v770, %v766
    %v891 = vpack.c.b16 %v771, %v767
    %v892 = vpack.c.b16 %v772, %v768
    %v893 = vpack.c.b16 %v773, %v769
    %v894 = vpack.c.b16 %v778, %v774
    %v895 = vpack.c.b16 %v779, %v775
    %v896 = vpack.c.b16 %v780, %v776
    %v897 = vpack.c.b16 %v781, %v777
    %v898 = vpack.c.b16 %v786, %v782
    %v899 = vpack.c.b16 %v787, %v783
    %v900 = vpack.c.b16 %v788, %v784
    %v901 = vpack.c.b16 %v789, %v785
    %v902 = vpack.c.b16 %v794, %v790
    %v903 = vpack.c.b16 %v795, %v791
    %v904 = vpack.c.b16 %v796, %v792
    %v905 = vpack.c.b16 %v797, %v793
    %v906 = vpack.c.b16 %v802, %v798
    %v907 = vpack.c.b16 %v803, %v799
    %v908 = vpack.c.b16 %v804, %v800
    %v909 = vpack.c.b16 %v805, %v801
    %v910 = vpack.c.b16 %v810, %v806
    %v911 = vpack.c.b16 %v811, %v807
    %v912 = vpack.c.b16 %v812, %v808
    %v913 = vpack.c.b16 %v813, %v809
    %v914 = vpack.c.b16 %v818, %v814
    %v915 = vpack.c.b16 %v819, %v815
    %v916 = vpack.c.b16 %v820, %v816
    %v917 = vpack.c.b16 %v821, %v817
    %v918 = vpack.c.b16 %v826, %v822
    %v919 = vpack.c.b16 %v827, %v823
    %v920 = vpack.c.b16 %v828, %v824
    %v921 = vpack.c.b16 %v829, %v825
    %v922 = vpack.c.b16 %v834, %v830
    %v923 = vpack.c.b16 %v835, %v831
    %v924 = vpack.c.b16 %v836, %v832
    %v925 = vpack.c.b16 %v837, %v833
    %v926 = vpack.c.b16 %v842, %v838
    %v927 = vpack.c.b16 %v843, %v839
    %v928 = vpack.c.b16 %v844, %v840
    %v929 = vpack.c.b16 %v845, %v841
    %v930 = vpack.c.b16 %v850, %v846
    %v931 = vpack.c.b16 %v851, %v847
    %v932 = vpack.c.b16 %v852, %v848
    %v933 = vpack.c.b16 %v853, %v849
    %v934 = vpack.c.b16 %v858, %v854
    %v935 = vpack.c.b16 %v859, %v855
    %v936 = vpack.c.b16 %v860, %v856
    %v937 = vpack.c.b16 %v861, %v857
    %v938 = vpack.c.b16 %v866, %v862
    %v939 = vpack.c.b16 %v867, %v863
    %v940 = vpack.c.b16 %v868, %v864
    %v941 = vpack.c.b16 %v869, %v865
    %v942 = vpack.c.b16 %v874, %v870
    %v943 = vpack.c.b16 %v875, %v871
    %v944 = vpack.c.b16 %v876, %v872
    %v945 = vpack.c.b16 %v877, %v873
    %v946 = vpack.c.b16 %v882, %v878
    %v947 = vpack.c.b16 %v883, %v879
    %v948 = vpack.c.b16 %v884, %v880
    %v949 = vpack.c.b16 %v885, %v881
    %1014 = vmatprep.subr.bf16.mxu0 %v887
    %1015 = vmatpush1.bf16.msra.mxu0 %v886
    %1016 = vmatprep.subr.bf16.mxu0 %v891
    %1017 = vmatpush1.bf16.msra.mxu0 %v890
    %1018 = vmatprep.subr.bf16.mxu0 %v895
    %1019 = vmatpush1.bf16.msra.mxu0 %v894
    %1020 = vmatprep.subr.bf16.mxu0 %v899
    %1021 = vmatpush1.bf16.msra.mxu0 %v898
    %1022 = vmatprep.subr.bf16.mxu0 %v903
    %1023 = vmatpush1.bf16.msra.mxu0 %v902
    %1024 = vmatprep.subr.bf16.mxu0 %v907
    %1025 = vmatpush1.bf16.msra.mxu0 %v906
    %1026 = vmatprep.subr.bf16.mxu0 %v911
    %1027 = vmatpush1.bf16.msra.mxu0 %v910
    %1028 = vmatprep.subr.bf16.mxu0 %v915
    %1029 = vmatpush1.bf16.msra.mxu0 %v914
    %1030 = vmatprep.subr.bf16.mxu0 %v919
    %1031 = vmatpush1.bf16.msra.mxu0 %v918
    %1032 = vmatprep.subr.bf16.mxu0 %v923
    %1033 = vmatpush1.bf16.msra.mxu0 %v922
    %1034 = vmatprep.subr.bf16.mxu0 %v927
    %1035 = vmatpush1.bf16.msra.mxu0 %v926
    %1036 = vmatprep.subr.bf16.mxu0 %v931
    %1037 = vmatpush1.bf16.msra.mxu0 %v930
    %1038 = vmatprep.subr.bf16.mxu0 %v935
    %1039 = vmatpush1.bf16.msra.mxu0 %v934
    %1040 = vmatprep.subr.bf16.mxu0 %v939
    %1041 = vmatpush1.bf16.msra.mxu0 %v938
    %1042 = vmatprep.subr.bf16.mxu0 %v943
    %1043 = vmatpush1.bf16.msra.mxu0 %v942
    %1044 = vmatprep.subr.bf16.mxu0 %v947
    %1045 = vmatpush1.bf16.msra.mxu0 %v946
    %1046 = vmatprep.mubr.bf16.mxu0 %v693
    %1047 = vmatmul.mubr.bf16.gmra.mrb[0].mxu0 %v692
    %v1048 = vpop.f32.mrb[0].mxu0
    %v1049 = vadd.f32 %v407, %v1048
    %v1050 = vpop.f32.mrb[0].mxu0
    %v1051 = vadd.f32 %v411, %v1050
    %v1052 = vpop.f32.mrb[0].mxu0
    %v1053 = vpop.f32.mrb[0].mxu0
    %1054 = vdwg.mxu0
    %1055 = vmatprep.subr.bf16.mxu0 %v889
    %1056 = vmatpush1.bf16.msra.mxu0 %v888
    %1057 = vmatprep.subr.bf16.mxu0 %v893
    %1058 = vmatpush1.bf16.msra.mxu0 %v892
    %1059 = vmatprep.subr.bf16.mxu0 %v897
    %1060 = vmatpush1.bf16.msra.mxu0 %v896
    %1061 = vmatprep.subr.bf16.mxu0 %v901
    %1062 = vmatpush1.bf16.msra.mxu0 %v900
    %1063 = vmatprep.subr.bf16.mxu0 %v905
    %1064 = vmatpush1.bf16.msra.mxu0 %v904
    %1065 = vmatprep.subr.bf16.mxu0 %v909
    %1066 = vmatpush1.bf16.msra.mxu0 %v908
    %1067 = vmatprep.subr.bf16.mxu0 %v913
    %1068 = vmatpush1.bf16.msra.mxu0 %v912
    %1069 = vmatprep.subr.bf16.mxu0 %v917
    %1070 = vmatpush1.bf16.msra.mxu0 %v916
    %1071 = vmatprep.subr.bf16.mxu0 %v921
    %1072 = vmatpush1.bf16.msra.mxu0 %v920
    %1073 = vmatprep.subr.bf16.mxu0 %v925
    %1074 = vmatpush1.bf16.msra.mxu0 %v924
    %1075 = vmatprep.subr.bf16.mxu0 %v929
    %1076 = vmatpush1.bf16.msra.mxu0 %v928
    %1077 = vmatprep.subr.bf16.mxu0 %v933
    %1078 = vmatpush1.bf16.msra.mxu0 %v932
    %1079 = vmatprep.subr.bf16.mxu0 %v937
    %1080 = vmatpush1.bf16.msra.mxu0 %v936
    %1081 = vmatprep.subr.bf16.mxu0 %v941
    %1082 = vmatpush1.bf16.msra.mxu0 %v940
    %1083 = vmatprep.subr.bf16.mxu0 %v945
    %1084 = vmatpush1.bf16.msra.mxu0 %v944
    %1085 = vmatprep.subr.bf16.mxu0 %v949
    %1086 = vmatpush1.bf16.msra.mxu0 %v948
    %1087 = vmatprep.mubr.bf16.mxu0 %v693
    %1088 = vmatmul.mubr.bf16.gmra.mrb[0].mxu0 %v692
    %v1089 = vpop.f32.mrb[0].mxu0
    %v1090 = vadd.f32 %v415, %v1089
    %v1091 = vpop.f32.mrb[0].mxu0
    %v1092 = vadd.f32 %v419, %v1091
    %v1093 = vpop.f32.mrb[0].mxu0
    %v1094 = vpop.f32.mrb[0].mxu0
    %1095 = vdwg.mxu0
    %v1096 = vmul.f32 %v1049, 0.5
    %v1097 = vtanh.pop %v1096
    %v1098 = vmul.f32 %v1097, 0.5
    %v1099 = vadd.f32 %v1098, 0.5
    %v1100 = vmul.f32 %v1051, 0.5
    %v1101 = vtanh.pop %v1100
    %v1102 = vmul.f32 %v1101, 0.5
    %v1103 = vadd.f32 %v1102, 0.5
    %v1104 = vtanh.pop %v1090
    %v1105 = vmul.f32 %v1092, 0.5
    %v1106 = vtanh.pop %v1105
    %v1107 = vmul.f32 %v1106, 0.5
    %v1108 = vadd.f32 %v1107, 0.5
    %v1109 = vmul.f32 %v1103, 0.0
    %v1110 = vmul.f32 %v1099, %v1104
    %v1111 = vadd.f32 %v1109, %v1110
    %v1112 = vtanh.pop %v1111
    %v1113 = vmul.f32 %v1108, %v1112
    %1114 = vst [vmem:[#allocation3] sm:$0x3] %v1113
    %v1115 = vld [vmem:[#allocation2] sm:$0xc]
    %v1116 = vld [vmem:[#allocation2 + $0x8] sm:$0xc]
    %v1117 = vld [vmem:[#allocation2 + $0x10] sm:$0xc]
    %v1118 = vld [vmem:[#allocation2 + $0x18] sm:$0xc]
    %1119 = vmatprep.subr.bf16.mxu0 %v525
    %1120 = vmatpush1.bf16.msra.mxu0 %v524
    %1121 = vmatprep.subr.bf16.mxu0 %v529
    %1122 = vmatpush1.bf16.msra.mxu0 %v528
    %1123 = vmatprep.subr.bf16.mxu0 %v533
    %1124 = vmatpush1.bf16.msra.mxu0 %v532
    %1125 = vmatprep.subr.bf16.mxu0 %v537
    %1126 = vmatpush1.bf16.msra.mxu0 %v536
    %1127 = vmatprep.subr.bf16.mxu0 %v541
    %1128 = vmatpush1.bf16.msra.mxu0 %v540
    %1129 = vmatprep.subr.bf16.mxu0 %v545
    %1130 = vmatpush1.bf16.msra.mxu0 %v544
    %1131 = vmatprep.subr.bf16.mxu0 %v549
    %1132 = vmatpush1.bf16.msra.mxu0 %v548
    %1133 = vmatprep.subr.bf16.mxu0 %v553
    %1134 = vmatpush1.bf16.msra.mxu0 %v552
    %1135 = vmatprep.subr.bf16.mxu0 0
    %1136 = vmatpush1.bf16.msra.mxu0 0
    %1137 = vmatprep.subr.bf16.mxu0 0
    %1138 = vmatpush1.bf16.msra.mxu0 0
    %1139 = vmatprep.subr.bf16.mxu0 0
    %1140 = vmatpush1.bf16.msra.mxu0 0
    %1141 = vmatprep.subr.bf16.mxu0 0
    %1142 = vmatpush1.bf16.msra.mxu0 0
    %1143 = vmatprep.subr.bf16.mxu0 0
    %1144 = vmatpush1.bf16.msra.mxu0 0
    %1145 = vmatprep.subr.bf16.mxu0 0
    %1146 = vmatpush1.bf16.msra.mxu0 0
    %1147 = vmatprep.subr.bf16.mxu0 0
    %1148 = vmatpush1.bf16.msra.mxu0 0
    %1149 = vmatprep.subr.bf16.mxu0 0
    %1150 = vmatpush1.bf16.msra.mxu0 0
    %1151 = vmatprep.mubr.bf16.mxu0 0
    %1152 = vmatmul.mubr.bf16.gmra.mrb[0].mxu0 %v692
    %v1153 = vpop.f32.mrb[0].mxu0
    %v1154 = vadd.f32 0.0, %v1153
    %v1155 = vpop.f32.mrb[0].mxu0
    %v1156 = vadd.f32 0.0, %v1155
    %v1157 = vpop.f32.mrb[0].mxu0
    %v1158 = vpop.f32.mrb[0].mxu0
    %1159 = vdwg.mxu0
    %1160 = vmatprep.subr.bf16.mxu0 %v527
    %1161 = vmatpush1.bf16.msra.mxu0 %v526
    %1162 = vmatprep.subr.bf16.mxu0 %v531
    %1163 = vmatpush1.bf16.msra.mxu0 %v530
    %1164 = vmatprep.subr.bf16.mxu0 %v535
    %1165 = vmatpush1.bf16.msra.mxu0 %v534
    %1166 = vmatprep.subr.bf16.mxu0 %v539
    %1167 = vmatpush1.bf16.msra.mxu0 %v538
    %1168 = vmatprep.subr.bf16.mxu0 %v543
    %1169 = vmatpush1.bf16.msra.mxu0 %v542
    %1170 = vmatprep.subr.bf16.mxu0 %v547
    %1171 = vmatpush1.bf16.msra.mxu0 %v546
    %1172 = vmatprep.subr.bf16.mxu0 %v551
    %1173 = vmatpush1.bf16.msra.mxu0 %v550
    %1174 = vmatprep.subr.bf16.mxu0 %v555
    %1175 = vmatpush1.bf16.msra.mxu0 %v554
    %1176 = vmatprep.subr.bf16.mxu0 0
    %1177 = vmatpush1.bf16.msra.mxu0 0
    %1178 = vmatprep.subr.bf16.mxu0 0
    %1179 = vmatpush1.bf16.msra.mxu0 0
    %1180 = vmatprep.subr.bf16.mxu0 0
    %1181 = vmatpush1.bf16.msra.mxu0 0
    %1182 = vmatprep.subr.bf16.mxu0 0
    %1183 = vmatpush1.bf16.msra.mxu0 0
    %1184 = vmatprep.subr.bf16.mxu0 0
    %1185 = vmatpush1.bf16.msra.mxu0 0
    %1186 = vmatprep.subr.bf16.mxu0 0
    %1187 = vmatpush1.bf16.msra.mxu0 0
    %1188 = vmatprep.subr.bf16.mxu0 0
    %1189 = vmatpush1.bf16.msra.mxu0 0
    %1190 = vmatprep.subr.bf16.mxu0 0
    %1191 = vmatpush1.bf16.msra.mxu0 0
    %1192 = vmatprep.mubr.bf16.mxu0 0
    %1193 = vmatmul.mubr.bf16.gmra.mrb[0].mxu0 %v692
    %v1194 = vpop.f32.mrb[0].mxu0
    %v1195 = vadd.f32 0.0, %v1194
    %v1196 = vpop.f32.mrb[0].mxu0
    %v1197 = vadd.f32 0.0, %v1196
    %v1198 = vpop.f32.mrb[0].mxu0
    %v1199 = vpop.f32.mrb[0].mxu0
    %1200 = vdwg.mxu0
    %v1205 = vrot.slane %v1154, 6
    %v1206 = vrot.slane %v1156, 6
    %v1207 = vrot.slane %v1195, 6
    %v1208 = vrot.slane %v1197, 6
    %v1213 = vadd.f32 %v1115, %v1205
    %v1214 = vadd.f32 %v1116, %v1206
    %v1215 = vadd.f32 %v1117, %v1207
    %v1216 = vadd.f32 %v1118, %v1208
    %v1217 = vmul.f32 %v1213, 0.5
    %v1218 = vtanh.pop %v1217
    %v1219 = vmul.f32 %v1218, 0.5
    %v1220 = vadd.f32 %v1219, 0.5
    %v1221 = vmul.f32 %v1214, 0.5
    %v1222 = vtanh.pop %v1221
    %v1223 = vmul.f32 %v1222, 0.5
    %v1224 = vadd.f32 %v1223, 0.5
    %v1225 = vtanh.pop %v1215
    %v1226 = vmul.f32 %v1216, 0.5
    %v1227 = vtanh.pop %v1226
    %v1228 = vmul.f32 %v1227, 0.5
    %v1229 = vadd.f32 %v1228, 0.5
    %v1231 = vrot.slane %v689, 6
    %v1233 = vmul.f32 %v1224, %v1231
    %v1234 = vmul.f32 %v1220, %v1225
    %v1235 = vadd.f32 %v1233, %v1234
    %v1236 = vtanh.pop %v1235
    %v1237 = vmul.f32 %v1229, %v1236
    %v1239 = vrot.slane %v1113, 6
    %v1241 = vpack.c.bf16 %v1237, %v1237
    %v1242 = vpack.c.bf16 %v1239, %v1239
    %v1245 = vrot.slane %v1241, 1
    %v1246 = vrot.slane %v1242, 1
    %1249 = vmatprep.subr.bf16.mxu0 %v887
    %1250 = vmatpush1.bf16.msra.mxu0 %v886
    %1251 = vmatprep.subr.bf16.mxu0 %v891
    %1252 = vmatpush1.bf16.msra.mxu0 %v890
    %1253 = vmatprep.subr.bf16.mxu0 %v895
    %1254 = vmatpush1.bf16.msra.mxu0 %v894
    %1255 = vmatprep.subr.bf16.mxu0 %v899
    %1256 = vmatpush1.bf16.msra.mxu0 %v898
    %1257 = vmatprep.subr.bf16.mxu0 %v903
    %1258 = vmatpush1.bf16.msra.mxu0 %v902
    %1259 = vmatprep.subr.bf16.mxu0 %v907
    %1260 = vmatpush1.bf16.msra.mxu0 %v906
    %1261 = vmatprep.subr.bf16.mxu0 %v911
    %1262 = vmatpush1.bf16.msra.mxu0 %v910
    %1263 = vmatprep.subr.bf16.mxu0 %v915
    %1264 = vmatpush1.bf16.msra.mxu0 %v914
    %1265 = vmatprep.subr.bf16.mxu0 %v919
    %1266 = vmatpush1.bf16.msra.mxu0 %v918
    %1267 = vmatprep.subr.bf16.mxu0 %v923
    %1268 = vmatpush1.bf16.msra.mxu0 %v922
    %1269 = vmatprep.subr.bf16.mxu0 %v927
    %1270 = vmatpush1.bf16.msra.mxu0 %v926
    %1271 = vmatprep.subr.bf16.mxu0 %v931
    %1272 = vmatpush1.bf16.msra.mxu0 %v930
    %1273 = vmatprep.subr.bf16.mxu0 %v935
    %1274 = vmatpush1.bf16.msra.mxu0 %v934
    %1275 = vmatprep.subr.bf16.mxu0 %v939
    %1276 = vmatpush1.bf16.msra.mxu0 %v938
    %1277 = vmatprep.subr.bf16.mxu0 %v943
    %1278 = vmatpush1.bf16.msra.mxu0 %v942
    %1279 = vmatprep.subr.bf16.mxu0 %v947
    %1280 = vmatpush1.bf16.msra.mxu0 %v946
    %1281 = vmatprep.mubr.bf16.mxu0 %v1246
    %1282 = vmatmul.mubr.bf16.gmra.mrb[0].mxu0 %v1245
    %v1283 = vpop.f32.mrb[0].mxu0
    %v1284 = vadd.f32 %v407, %v1283
    %v1285 = vpop.f32.mrb[0].mxu0
    %v1286 = vadd.f32 %v411, %v1285
    %v1287 = vpop.f32.mrb[0].mxu0
    %v1288 = vpop.f32.mrb[0].mxu0
    %1289 = vdwg.mxu0
    %1290 = vmatprep.subr.bf16.mxu0 %v889
    %1291 = vmatpush1.bf16.msra.mxu0 %v888
    %1292 = vmatprep.subr.bf16.mxu0 %v893
    %1293 = vmatpush1.bf16.msra.mxu0 %v892
    %1294 = vmatprep.subr.bf16.mxu0 %v897
    %1295 = vmatpush1.bf16.msra.mxu0 %v896
    %1296 = vmatprep.subr.bf16.mxu0 %v901
    %1297 = vmatpush1.bf16.msra.mxu0 %v900
    %1298 = vmatprep.subr.bf16.mxu0 %v905
    %1299 = vmatpush1.bf16.msra.mxu0 %v904
    %1300 = vmatprep.subr.bf16.mxu0 %v909
    %1301 = vmatpush1.bf16.msra.mxu0 %v908
    %1302 = vmatprep.subr.bf16.mxu0 %v913
    %1303 = vmatpush1.bf16.msra.mxu0 %v912
    %1304 = vmatprep.subr.bf16.mxu0 %v917
    %1305 = vmatpush1.bf16.msra.mxu0 %v916
    %1306 = vmatprep.subr.bf16.mxu0 %v921
    %1307 = vmatpush1.bf16.msra.mxu0 %v920
    %1308 = vmatprep.subr.bf16.mxu0 %v925
    %1309 = vmatpush1.bf16.msra.mxu0 %v924
    %1310 = vmatprep.subr.bf16.mxu0 %v929
    %1311 = vmatpush1.bf16.msra.mxu0 %v928
    %1312 = vmatprep.subr.bf16.mxu0 %v933
    %1313 = vmatpush1.bf16.msra.mxu0 %v932
    %1314 = vmatprep.subr.bf16.mxu0 %v937
    %1315 = vmatpush1.bf16.msra.mxu0 %v936
    %1316 = vmatprep.subr.bf16.mxu0 %v941
    %1317 = vmatpush1.bf16.msra.mxu0 %v940
    %1318 = vmatprep.subr.bf16.mxu0 %v945
    %1319 = vmatpush1.bf16.msra.mxu0 %v944
    %1320 = vmatprep.subr.bf16.mxu0 %v949
    %1321 = vmatpush1.bf16.msra.mxu0 %v948
    %1322 = vmatprep.mubr.bf16.mxu0 %v1246
    %1323 = vmatmul.mubr.bf16.gmra.mrb[0].mxu0 %v1245
    %v1324 = vpop.f32.mrb[0].mxu0
    %v1325 = vadd.f32 %v415, %v1324
    %v1326 = vpop.f32.mrb[0].mxu0
    %v1327 = vadd.f32 %v419, %v1326
    %v1328 = vpop.f32.mrb[0].mxu0
    %v1329 = vpop.f32.mrb[0].mxu0
    %1330 = vdwg.mxu0
    %v1331 = vmul.f32 %v1284, 0.5
    %v1332 = vtanh.pop %v1331
    %v1333 = vmul.f32 %v1332, 0.5
    %v1334 = vadd.f32 %v1333, 0.5
    %v1335 = vmul.f32 %v1286, 0.5
    %v1336 = vtanh.pop %v1335
    %v1337 = vmul.f32 %v1336, 0.5
    %v1338 = vadd.f32 %v1337, 0.5
    %v1339 = vtanh.pop %v1325
    %v1340 = vmul.f32 %v1327, 0.5
    %v1341 = vtanh.pop %v1340
    %v1342 = vmul.f32 %v1341, 0.5
    %v1343 = vadd.f32 %v1342, 0.5
    %v1344 = vmul.f32 %v1338, %v1111
    %v1345 = vmul.f32 %v1334, %v1339
    %v1346 = vadd.f32 %v1344, %v1345
    %v1347 = vtanh.pop %v1346
    %v1348 = vmul.f32 %v1343, %v1347
    %1349 = vst [vmem:[#allocation3 + $0x2] sm:$0x3] %v1348
    %v1350 = vld [vmem:[#allocation2] sm:$0x30]
    %v1351 = vld [vmem:[#allocation2 + $0x8] sm:$0x30]
    %v1352 = vld [vmem:[#allocation2 + $0x10] sm:$0x30]
    %v1353 = vld [vmem:[#allocation2 + $0x18] sm:$0x30]
    %1354 = vmatprep.subr.bf16.mxu0 %v525
    %1355 = vmatpush1.bf16.msra.mxu0 %v524
    %1356 = vmatprep.subr.bf16.mxu0 %v529
    %1357 = vmatpush1.bf16.msra.mxu0 %v528
    %1358 = vmatprep.subr.bf16.mxu0 %v533
    %1359 = vmatpush1.bf16.msra.mxu0 %v532
    %1360 = vmatprep.subr.bf16.mxu0 %v537
    %1361 = vmatpush1.bf16.msra.mxu0 %v536
    %1362 = vmatprep.subr.bf16.mxu0 %v541
    %1363 = vmatpush1.bf16.msra.mxu0 %v540
    %1364 = vmatprep.subr.bf16.mxu0 %v545
    %1365 = vmatpush1.bf16.msra.mxu0 %v544
    %1366 = vmatprep.subr.bf16.mxu0 %v549
    %1367 = vmatpush1.bf16.msra.mxu0 %v548
    %1368 = vmatprep.subr.bf16.mxu0 %v553
    %1369 = vmatpush1.bf16.msra.mxu0 %v552
    %1370 = vmatprep.subr.bf16.mxu0 0
    %1371 = vmatpush1.bf16.msra.mxu0 0
    %1372 = vmatprep.subr.bf16.mxu0 0
    %1373 = vmatpush1.bf16.msra.mxu0 0
    %1374 = vmatprep.subr.bf16.mxu0 0
    %1375 = vmatpush1.bf16.msra.mxu0 0
    %1376 = vmatprep.subr.bf16.mxu0 0
    %1377 = vmatpush1.bf16.msra.mxu0 0
    %1378 = vmatprep.subr.bf16.mxu0 0
    %1379 = vmatpush1.bf16.msra.mxu0 0
    %1380 = vmatprep.subr.bf16.mxu0 0
    %1381 = vmatpush1.bf16.msra.mxu0 0
    %1382 = vmatprep.subr.bf16.mxu0 0
    %1383 = vmatpush1.bf16.msra.mxu0 0
    %1384 = vmatprep.subr.bf16.mxu0 0
    %1385 = vmatpush1.bf16.msra.mxu0 0
    %1386 = vmatprep.mubr.bf16.mxu0 0
    %1387 = vmatmul.mubr.bf16.gmra.mrb[0].mxu0 %v1245
    %v1388 = vpop.f32.mrb[0].mxu0
    %v1389 = vadd.f32 0.0, %v1388
    %v1390 = vpop.f32.mrb[0].mxu0
    %v1391 = vadd.f32 0.0, %v1390
    %v1392 = vpop.f32.mrb[0].mxu0
    %v1393 = vpop.f32.mrb[0].mxu0
    %1394 = vdwg.mxu0
    %1395 = vmatprep.subr.bf16.mxu0 %v527
    %1396 = vmatpush1.bf16.msra.mxu0 %v526
    %1397 = vmatprep.subr.bf16.mxu0 %v531
    %1398 = vmatpush1.bf16.msra.mxu0 %v530
    %1399 = vmatprep.subr.bf16.mxu0 %v535
    %1400 = vmatpush1.bf16.msra.mxu0 %v534
    %1401 = vmatprep.subr.bf16.mxu0 %v539
    %1402 = vmatpush1.bf16.msra.mxu0 %v538
    %1403 = vmatprep.subr.bf16.mxu0 %v543
    %1404 = vmatpush1.bf16.msra.mxu0 %v542
    %1405 = vmatprep.subr.bf16.mxu0 %v547
    %1406 = vmatpush1.bf16.msra.mxu0 %v546
    %1407 = vmatprep.subr.bf16.mxu0 %v551
    %1408 = vmatpush1.bf16.msra.mxu0 %v550
    %1409 = vmatprep.subr.bf16.mxu0 %v555
    %1410 = vmatpush1.bf16.msra.mxu0 %v554
    %1411 = vmatprep.subr.bf16.mxu0 0
    %1412 = vmatpush1.bf16.msra.mxu0 0
    %1413 = vmatprep.subr.bf16.mxu0 0
    %1414 = vmatpush1.bf16.msra.mxu0 0
    %1415 = vmatprep.subr.bf16.mxu0 0
    %1416 = vmatpush1.bf16.msra.mxu0 0
    %1417 = vmatprep.subr.bf16.mxu0 0
    %1418 = vmatpush1.bf16.msra.mxu0 0
    %1419 = vmatprep.subr.bf16.mxu0 0
    %1420 = vmatpush1.bf16.msra.mxu0 0
    %1421 = vmatprep.subr.bf16.mxu0 0
    %1422 = vmatpush1.bf16.msra.mxu0 0
    %1423 = vmatprep.subr.bf16.mxu0 0
    %1424 = vmatpush1.bf16.msra.mxu0 0
    %1425 = vmatprep.subr.bf16.mxu0 0
    %1426 = vmatpush1.bf16.msra.mxu0 0
    %1427 = vmatprep.mubr.bf16.mxu0 0
    %1428 = vmatmul.mubr.bf16.gmra.mrb[0].mxu0 %v1245
    %v1429 = vpop.f32.mrb[0].mxu0
    %v1430 = vadd.f32 0.0, %v1429
    %v1431 = vpop.f32.mrb[0].mxu0
    %v1432 = vadd.f32 0.0, %v1431
    %v1433 = vpop.f32.mrb[0].mxu0
    %v1434 = vpop.f32.mrb[0].mxu0
    %1435 = vdwg.mxu0
    %v1440 = vrot.slane %v1389, 4
    %v1441 = vrot.slane %v1391, 4
    %v1442 = vrot.slane %v1430, 4
    %v1443 = vrot.slane %v1432, 4
    %v1448 = vadd.f32 %v1350, %v1440
    %v1449 = vadd.f32 %v1351, %v1441
    %v1450 = vadd.f32 %v1352, %v1442
    %v1451 = vadd.f32 %v1353, %v1443
    %v1452 = vmul.f32 %v1448, 0.5
    %v1453 = vtanh.pop %v1452
    %v1454 = vmul.f32 %v1453, 0.5
    %v1455 = vadd.f32 %v1454, 0.5
    %v1456 = vmul.f32 %v1449, 0.5
    %v1457 = vtanh.pop %v1456
    %v1458 = vmul.f32 %v1457, 0.5
    %v1459 = vadd.f32 %v1458, 0.5
    %v1460 = vtanh.pop %v1450
    %v1461 = vmul.f32 %v1451, 0.5
    %v1462 = vtanh.pop %v1461
    %v1463 = vmul.f32 %v1462, 0.5
    %v1464 = vadd.f32 %v1463, 0.5
    %v1466 = vrot.slane %v1235, 6
    %v1468 = vmul.f32 %v1459, %v1466
    %v1469 = vmul.f32 %v1455, %v1460
    %v1470 = vadd.f32 %v1468, %v1469
    %v1471 = vtanh.pop %v1470
    %v1472 = vmul.f32 %v1464, %v1471
    %v1474 = vrot.slane %v1348, 4
    %v1476 = vpack.c.bf16 %v1472, %v1472
    %v1477 = vpack.c.bf16 %v1474, %v1474
    %v1480 = vrot.slane %v1476, 2
    %v1481 = vrot.slane %v1477, 2
    %1484 = vmatprep.subr.bf16.mxu0 %v887
    %1485 = vmatpush1.bf16.msra.mxu0 %v886
    %1486 = vmatprep.subr.bf16.mxu0 %v891
    %1487 = vmatpush1.bf16.msra.mxu0 %v890
    %1488 = vmatprep.subr.bf16.mxu0 %v895
    %1489 = vmatpush1.bf16.msra.mxu0 %v894
    %1490 = vmatprep.subr.bf16.mxu0 %v899
    %1491 = vmatpush1.bf16.msra.mxu0 %v898
    %1492 = vmatprep.subr.bf16.mxu0 %v903
    %1493 = vmatpush1.bf16.msra.mxu0 %v902
    %1494 = vmatprep.subr.bf16.mxu0 %v907
    %1495 = vmatpush1.bf16.msra.mxu0 %v906
    %1496 = vmatprep.subr.bf16.mxu0 %v911
    %1497 = vmatpush1.bf16.msra.mxu0 %v910
    %1498 = vmatprep.subr.bf16.mxu0 %v915
    %1499 = vmatpush1.bf16.msra.mxu0 %v914
    %1500 = vmatprep.subr.bf16.mxu0 %v919
    %1501 = vmatpush1.bf16.msra.mxu0 %v918
    %1502 = vmatprep.subr.bf16.mxu0 %v923
    %1503 = vmatpush1.bf16.msra.mxu0 %v922
    %1504 = vmatprep.subr.bf16.mxu0 %v927
    %1505 = vmatpush1.bf16.msra.mxu0 %v926
    %1506 = vmatprep.subr.bf16.mxu0 %v931
    %1507 = vmatpush1.bf16.msra.mxu0 %v930
    %1508 = vmatprep.subr.bf16.mxu0 %v935
    %1509 = vmatpush1.bf16.msra.mxu0 %v934
    %1510 = vmatprep.subr.bf16.mxu0 %v939
    %1511 = vmatpush1.bf16.msra.mxu0 %v938
    %1512 = vmatprep.subr.bf16.mxu0 %v943
    %1513 = vmatpush1.bf16.msra.mxu0 %v942
    %1514 = vmatprep.subr.bf16.mxu0 %v947
    %1515 = vmatpush1.bf16.msra.mxu0 %v946
    %1516 = vmatprep.mubr.bf16.mxu0 %v1481
    %1517 = vmatmul.mubr.bf16.gmra.mrb[0].mxu0 %v1480
    %v1518 = vpop.f32.mrb[0].mxu0
    %v1519 = vadd.f32 %v407, %v1518
    %v1520 = vpop.f32.mrb[0].mxu0
    %v1521 = vadd.f32 %v411, %v1520
    %v1522 = vpop.f32.mrb[0].mxu0
    %v1523 = vpop.f32.mrb[0].mxu0
    %1524 = vdwg.mxu0
    %1525 = vmatprep.subr.bf16.mxu0 %v889
    %1526 = vmatpush1.bf16.msra.mxu0 %v888
    %1527 = vmatprep.subr.bf16.mxu0 %v893
    %1528 = vmatpush1.bf16.msra.mxu0 %v892
    %1529 = vmatprep.subr.bf16.mxu0 %v897
    %1530 = vmatpush1.bf16.msra.mxu0 %v896
    %1531 = vmatprep.subr.bf16.mxu0 %v901
    %1532 = vmatpush1.bf16.msra.mxu0 %v900
    %1533 = vmatprep.subr.bf16.mxu0 %v905
    %1534 = vmatpush1.bf16.msra.mxu0 %v904
    %1535 = vmatprep.subr.bf16.mxu0 %v909
    %1536 = vmatpush1.bf16.msra.mxu0 %v908
    %1537 = vmatprep.subr.bf16.mxu0 %v913
    %1538 = vmatpush1.bf16.msra.mxu0 %v912
    %1539 = vmatprep.subr.bf16.mxu0 %v917
    %1540 = vmatpush1.bf16.msra.mxu0 %v916
    %1541 = vmatprep.subr.bf16.mxu0 %v921
    %1542 = vmatpush1.bf16.msra.mxu0 %v920
    %1543 = vmatprep.subr.bf16.mxu0 %v925
    %1544 = vmatpush1.bf16.msra.mxu0 %v924
    %1545 = vmatprep.subr.bf16.mxu0 %v929
    %1546 = vmatpush1.bf16.msra.mxu0 %v928
    %1547 = vmatprep.subr.bf16.mxu0 %v933
    %1548 = vmatpush1.bf16.msra.mxu0 %v932
    %1549 = vmatprep.subr.bf16.mxu0 %v937
    %1550 = vmatpush1.bf16.msra.mxu0 %v936
    %1551 = vmatprep.subr.bf16.mxu0 %v941
    %1552 = vmatpush1.bf16.msra.mxu0 %v940
    %1553 = vmatprep.subr.bf16.mxu0 %v945
    %1554 = vmatpush1.bf16.msra.mxu0 %v944
    %1555 = vmatprep.subr.bf16.mxu0 %v949
    %1556 = vmatpush1.bf16.msra.mxu0 %v948
    %1557 = vmatprep.mubr.bf16.mxu0 %v1481
    %1558 = vmatmul.mubr.bf16.gmra.mrb[0].mxu0 %v1480
    %v1559 = vpop.f32.mrb[0].mxu0
    %v1560 = vadd.f32 %v415, %v1559
    %v1561 = vpop.f32.mrb[0].mxu0
    %v1562 = vadd.f32 %v419, %v1561
    %v1563 = vpop.f32.mrb[0].mxu0
    %v1564 = vpop.f32.mrb[0].mxu0
    %1565 = vdwg.mxu0
    %v1566 = vmul.f32 %v1519, 0.5
    %v1567 = vtanh.pop %v1566
    %v1568 = vmul.f32 %v1567, 0.5
    %v1569 = vadd.f32 %v1568, 0.5
    %v1570 = vmul.f32 %v1521, 0.5
    %v1571 = vtanh.pop %v1570
    %v1572 = vmul.f32 %v1571, 0.5
    %v1573 = vadd.f32 %v1572, 0.5
    %v1574 = vtanh.pop %v1560
    %v1575 = vmul.f32 %v1562, 0.5
    %v1576 = vtanh.pop %v1575
    %v1577 = vmul.f32 %v1576, 0.5
    %v1578 = vadd.f32 %v1577, 0.5
    %v1579 = vmul.f32 %v1573, %v1346
    %v1580 = vmul.f32 %v1569, %v1574
    %v1581 = vadd.f32 %v1579, %v1580
    %v1582 = vtanh.pop %v1581
    %v1583 = vmul.f32 %v1578, %v1582
    %1584 = vst [vmem:[#allocation3 + $0x4] sm:$0x3] %v1583
    %v1585 = vld [vmem:[#allocation2] sm:$0xc0]
    %v1586 = vld [vmem:[#allocation2 + $0x8] sm:$0xc0]
    %v1587 = vld [vmem:[#allocation2 + $0x10] sm:$0xc0]
    %v1588 = vld [vmem:[#allocation2 + $0x18] sm:$0xc0]
    %1589 = vmatprep.subr.bf16.mxu0 %v525
    %1590 = vmatpush1.bf16.msra.mxu0 %v524
    %1591 = vmatprep.subr.bf16.mxu0 %v529
    %1592 = vmatpush1.bf16.msra.mxu0 %v528
    %1593 = vmatprep.subr.bf16.mxu0 %v533
    %1594 = vmatpush1.bf16.msra.mxu0 %v532
    %1595 = vmatprep.subr.bf16.mxu0 %v537
    %1596 = vmatpush1.bf16.msra.mxu0 %v536
    %1597 = vmatprep.subr.bf16.mxu0 %v541
    %1598 = vmatpush1.bf16.msra.mxu0 %v540
    %1599 = vmatprep.subr.bf16.mxu0 %v545
    %1600 = vmatpush1.bf16.msra.mxu0 %v544
    %1601 = vmatprep.subr.bf16.mxu0 %v549
    %1602 = vmatpush1.bf16.msra.mxu0 %v548
    %1603 = vmatprep.subr.bf16.mxu0 %v553
    %1604 = vmatpush1.bf16.msra.mxu0 %v552
    %1605 = vmatprep.subr.bf16.mxu0 0
    %1606 = vmatpush1.bf16.msra.mxu0 0
    %1607 = vmatprep.subr.bf16.mxu0 0
    %1608 = vmatpush1.bf16.msra.mxu0 0
    %1609 = vmatprep.subr.bf16.mxu0 0
    %1610 = vmatpush1.bf16.msra.mxu0 0
    %1611 = vmatprep.subr.bf16.mxu0 0
    %1612 = vmatpush1.bf16.msra.mxu0 0
    %1613 = vmatprep.subr.bf16.mxu0 0
    %1614 = vmatpush1.bf16.msra.mxu0 0
    %1615 = vmatprep.subr.bf16.mxu0 0
    %1616 = vmatpush1.bf16.msra.mxu0 0
    %1617 = vmatprep.subr.bf16.mxu0 0
    %1618 = vmatpush1.bf16.msra.mxu0 0
    %1619 = vmatprep.subr.bf16.mxu0 0
    %1620 = vmatpush1.bf16.msra.mxu0 0
    %1621 = vmatprep.mubr.bf16.mxu0 0
    %1622 = vmatmul.mubr.bf16.gmra.mrb[0].mxu0 %v1480
    %v1623 = vpop.f32.mrb[0].mxu0
    %v1624 = vadd.f32 0.0, %v1623
    %v1625 = vpop.f32.mrb[0].mxu0
    %v1626 = vadd.f32 0.0, %v1625
    %v1627 = vpop.f32.mrb[0].mxu0
    %v1628 = vpop.f32.mrb[0].mxu0
    %1629 = vdwg.mxu0
    %1630 = vmatprep.subr.bf16.mxu0 %v527
    %1631 = vmatpush1.bf16.msra.mxu0 %v526
    %1632 = vmatprep.subr.bf16.mxu0 %v531
    %1633 = vmatpush1.bf16.msra.mxu0 %v530
    %1634 = vmatprep.subr.bf16.mxu0 %v535
    %1635 = vmatpush1.bf16.msra.mxu0 %v534
    %1636 = vmatprep.subr.bf16.mxu0 %v539
    %1637 = vmatpush1.bf16.msra.mxu0 %v538
    %1638 = vmatprep.subr.bf16.mxu0 %v543
    %1639 = vmatpush1.bf16.msra.mxu0 %v542
    %1640 = vmatprep.subr.bf16.mxu0 %v547
    %1641 = vmatpush1.bf16.msra.mxu0 %v546
    %1642 = vmatprep.subr.bf16.mxu0 %v551
    %1643 = vmatpush1.bf16.msra.mxu0 %v550
    %1644 = vmatprep.subr.bf16.mxu0 %v555
    %1645 = vmatpush1.bf16.msra.mxu0 %v554
    %1646 = vmatprep.subr.bf16.mxu0 0
    %1647 = vmatpush1.bf16.msra.mxu0 0
    %1648 = vmatprep.subr.bf16.mxu0 0
    %1649 = vmatpush1.bf16.msra.mxu0 0
    %1650 = vmatprep.subr.bf16.mxu0 0
    %1651 = vmatpush1.bf16.msra.mxu0 0
    %1652 = vmatprep.subr.bf16.mxu0 0
    %1653 = vmatpush1.bf16.msra.mxu0 0
    %1654 = vmatprep.subr.bf16.mxu0 0
    %1655 = vmatpush1.bf16.msra.mxu0 0
    %1656 = vmatprep.subr.bf16.mxu0 0
    %1657 = vmatpush1.bf16.msra.mxu0 0
    %1658 = vmatprep.subr.bf16.mxu0 0
    %1659 = vmatpush1.bf16.msra.mxu0 0
    %1660 = vmatprep.subr.bf16.mxu0 0
    %1661 = vmatpush1.bf16.msra.mxu0 0
    %1662 = vmatprep.mubr.bf16.mxu0 0
    %1663 = vmatmul.mubr.bf16.gmra.mrb[0].mxu0 %v1480
    %v1664 = vpop.f32.mrb[0].mxu0
    %v1665 = vadd.f32 0.0, %v1664
    %v1666 = vpop.f32.mrb[0].mxu0
    %v1667 = vadd.f32 0.0, %v1666
    %v1668 = vpop.f32.mrb[0].mxu0
    %v1669 = vpop.f32.mrb[0].mxu0
    %1670 = vdwg.mxu0
    %v1675 = vrot.slane %v1624, 2
    %v1676 = vrot.slane %v1626, 2
    %v1677 = vrot.slane %v1665, 2
    %v1678 = vrot.slane %v1667, 2
    %v1683 = vadd.f32 %v1585, %v1675
    %v1684 = vadd.f32 %v1586, %v1676
    %v1685 = vadd.f32 %v1587, %v1677
    %v1686 = vadd.f32 %v1588, %v1678
    %v1687 = vmul.f32 %v1683, 0.5
    %v1688 = vtanh.pop %v1687
    %v1689 = vmul.f32 %v1688, 0.5
    %v1690 = vadd.f32 %v1689, 0.5
    %v1691 = vmul.f32 %v1684, 0.5
    %v1692 = vtanh.pop %v1691
    %v1693 = vmul.f32 %v1692, 0.5
    %v1694 = vadd.f32 %v1693, 0.5
    %v1695 = vtanh.pop %v1685
    %v1696 = vmul.f32 %v1686, 0.5
    %v1697 = vtanh.pop %v1696
    %v1698 = vmul.f32 %v1697, 0.5
    %v1699 = vadd.f32 %v1698, 0.5
    %v1701 = vrot.slane %v1470, 6
    %v1703 = vmul.f32 %v1694, %v1701
    %v1704 = vmul.f32 %v1690, %v1695
    %v1705 = vadd.f32 %v1703, %v1704
    %v1706 = vtanh.pop %v1705
    %v1707 = vmul.f32 %v1699, %v1706
    %v1709 = vrot.slane %v1583, 2
    %v1711 = vpack.c.bf16 %v1707, %v1707
    %v1712 = vpack.c.bf16 %v1709, %v1709
    %v1715 = vrot.slane %v1711, 3
    %v1716 = vrot.slane %v1712, 3
    %1719 = vmatprep.subr.bf16.mxu0 %v887
    %1720 = vmatpush1.bf16.msra.mxu0 %v886
    %1721 = vmatprep.subr.bf16.mxu0 %v891
    %1722 = vmatpush1.bf16.msra.mxu0 %v890
    %1723 = vmatprep.subr.bf16.mxu0 %v895
    %1724 = vmatpush1.bf16.msra.mxu0 %v894
    %1725 = vmatprep.subr.bf16.mxu0 %v899
    %1726 = vmatpush1.bf16.msra.mxu0 %v898
    %1727 = vmatprep.subr.bf16.mxu0 %v903
    %1728 = vmatpush1.bf16.msra.mxu0 %v902
    %1729 = vmatprep.subr.bf16.mxu0 %v907
    %1730 = vmatpush1.bf16.msra.mxu0 %v906
    %1731 = vmatprep.subr.bf16.mxu0 %v911
    %1732 = vmatpush1.bf16.msra.mxu0 %v910
    %1733 = vmatprep.subr.bf16.mxu0 %v915
    %1734 = vmatpush1.bf16.msra.mxu0 %v914
    %1735 = vmatprep.subr.bf16.mxu0 %v919
    %1736 = vmatpush1.bf16.msra.mxu0 %v918
    %1737 = vmatprep.subr.bf16.mxu0 %v923
    %1738 = vmatpush1.bf16.msra.mxu0 %v922
    %1739 = vmatprep.subr.bf16.mxu0 %v927
    %1740 = vmatpush1.bf16.msra.mxu0 %v926
    %1741 = vmatprep.subr.bf16.mxu0 %v931
    %1742 = vmatpush1.bf16.msra.mxu0 %v930
    %1743 = vmatprep.subr.bf16.mxu0 %v935
    %1744 = vmatpush1.bf16.msra.mxu0 %v934
    %1745 = vmatprep.subr.bf16.mxu0 %v939
    %1746 = vmatpush1.bf16.msra.mxu0 %v938
    %1747 = vmatprep.subr.bf16.mxu0 %v943
    %1748 = vmatpush1.bf16.msra.mxu0 %v942
    %1749 = vmatprep.subr.bf16.mxu0 %v947
    %1750 = vmatpush1.bf16.msra.mxu0 %v946
    %1751 = vmatprep.mubr.bf16.mxu0 %v1716
    %1752 = vmatmul.mubr.bf16.gmra.mrb[0].mxu0 %v1715
    %v1753 = vpop.f32.mrb[0].mxu0
    %v1754 = vadd.f32 %v407, %v1753
    %v1755 = vpop.f32.mrb[0].mxu0
    %v1756 = vadd.f32 %v411, %v1755
    %v1757 = vpop.f32.mrb[0].mxu0
    %v1758 = vpop.f32.mrb[0].mxu0
    %1759 = vdwg.mxu0
    %1760 = vmatprep.subr.bf16.mxu0 %v889
    %1761 = vmatpush1.bf16.msra.mxu0 %v888
    %1762 = vmatprep.subr.bf16.mxu0 %v893
    %1763 = vmatpush1.bf16.msra.mxu0 %v892
    %1764 = vmatprep.subr.bf16.mxu0 %v897
    %1765 = vmatpush1.bf16.msra.mxu0 %v896
    %1766 = vmatprep.subr.bf16.mxu0 %v901
    %1767 = vmatpush1.bf16.msra.mxu0 %v900
    %1768 = vmatprep.subr.bf16.mxu0 %v905
    %1769 = vmatpush1.bf16.msra.mxu0 %v904
    %1770 = vmatprep.subr.bf16.mxu0 %v909
    %1771 = vmatpush1.bf16.msra.mxu0 %v908
    %1772 = vmatprep.subr.bf16.mxu0 %v913
    %1773 = vmatpush1.bf16.msra.mxu0 %v912
    %1774 = vmatprep.subr.bf16.mxu0 %v917
    %1775 = vmatpush1.bf16.msra.mxu0 %v916
    %1776 = vmatprep.subr.bf16.mxu0 %v921
    %1777 = vmatpush1.bf16.msra.mxu0 %v920
    %1778 = vmatprep.subr.bf16.mxu0 %v925
    %1779 = vmatpush1.bf16.msra.mxu0 %v924
    %1780 = vmatprep.subr.bf16.mxu0 %v929
    %1781 = vmatpush1.bf16.msra.mxu0 %v928
    %1782 = vmatprep.subr.bf16.mxu0 %v933
    %1783 = vmatpush1.bf16.msra.mxu0 %v932
    %1784 = vmatprep.subr.bf16.mxu0 %v937
    %1785 = vmatpush1.bf16.msra.mxu0 %v936
    %1786 = vmatprep.subr.bf16.mxu0 %v941
    %1787 = vmatpush1.bf16.msra.mxu0 %v940
    %1788 = vmatprep.subr.bf16.mxu0 %v945
    %1789 = vmatpush1.bf16.msra.mxu0 %v944
    %1790 = vmatprep.subr.bf16.mxu0 %v949
    %1791 = vmatpush1.bf16.msra.mxu0 %v948
    %1792 = vmatprep.mubr.bf16.mxu0 %v1716
    %1793 = vmatmul.mubr.bf16.gmra.mrb[0].mxu0 %v1715
    %v1794 = vpop.f32.mrb[0].mxu0
    %v1795 = vadd.f32 %v415, %v1794
    %v1796 = vpop.f32.mrb[0].mxu0
    %v1797 = vadd.f32 %v419, %v1796
    %v1798 = vpop.f32.mrb[0].mxu0
    %v1799 = vpop.f32.mrb[0].mxu0
    %1800 = vdwg.mxu0
    %v1801 = vmul.f32 %v1754, 0.5
    %v1802 = vtanh.pop %v1801
    %v1803 = vmul.f32 %v1802, 0.5
    %v1804 = vadd.f32 %v1803, 0.5
    %v1805 = vmul.f32 %v1756, 0.5
    %v1806 = vtanh.pop %v1805
    %v1807 = vmul.f32 %v1806, 0.5
    %v1808 = vadd.f32 %v1807, 0.5
    %v1809 = vtanh.pop %v1795
    %v1810 = vmul.f32 %v1797, 0.5
    %v1811 = vtanh.pop %v1810
    %v1812 = vmul.f32 %v1811, 0.5
    %v1813 = vadd.f32 %v1812, 0.5
    %v1814 = vmul.f32 %v1808, %v1581
    %v1815 = vmul.f32 %v1804, %v1809
    %v1816 = vadd.f32 %v1814, %v1815
    %v1817 = vtanh.pop %v1816
    %v1818 = vmul.f32 %v1813, %v1817
    %1819 = vst [vmem:[#allocation3 + $0x6] sm:$0x3] %v1818
    %v1820 = vld [vmem:[#allocation2 + $0x20] sm:$0x3]
    %v1821 = vld [vmem:[#allocation2 + $0x28] sm:$0x3]
    %v1822 = vld [vmem:[#allocation2 + $0x30] sm:$0x3]
    %v1823 = vld [vmem:[#allocation2 + $0x38] sm:$0x3]
    %1824 = vmatprep.subr.bf16.mxu0 %v525
    %1825 = vmatpush1.bf16.msra.mxu0 %v524
    %1826 = vmatprep.subr.bf16.mxu0 %v529
    %1827 = vmatpush1.bf16.msra.mxu0 %v528
    %1828 = vmatprep.subr.bf16.mxu0 %v533
    %1829 = vmatpush1.bf16.msra.mxu0 %v532
    %1830 = vmatprep.subr.bf16.mxu0 %v537
    %1831 = vmatpush1.bf16.msra.mxu0 %v536
    %1832 = vmatprep.subr.bf16.mxu0 %v541
    %1833 = vmatpush1.bf16.msra.mxu0 %v540
    %1834 = vmatprep.subr.bf16.mxu0 %v545
    %1835 = vmatpush1.bf16.msra.mxu0 %v544
    %1836 = vmatprep.subr.bf16.mxu0 %v549
    %1837 = vmatpush1.bf16.msra.mxu0 %v548
    %1838 = vmatprep.subr.bf16.mxu0 %v553
    %1839 = vmatpush1.bf16.msra.mxu0 %v552
    %1840 = vmatprep.subr.bf16.mxu0 0
    %1841 = vmatpush1.bf16.msra.mxu0 0
    %1842 = vmatprep.subr.bf16.mxu0 0
    %1843 = vmatpush1.bf16.msra.mxu0 0
    %1844 = vmatprep.subr.bf16.mxu0 0
    %1845 = vmatpush1.bf16.msra.mxu0 0
    %1846 = vmatprep.subr.bf16.mxu0 0
    %1847 = vmatpush1.bf16.msra.mxu0 0
    %1848 = vmatprep.subr.bf16.mxu0 0
    %1849 = vmatpush1.bf16.msra.mxu0 0
    %1850 = vmatprep.subr.bf16.mxu0 0
    %1851 = vmatpush1.bf16.msra.mxu0 0
    %1852 = vmatprep.subr.bf16.mxu0 0
    %1853 = vmatpush1.bf16.msra.mxu0 0
    %1854 = vmatprep.subr.bf16.mxu0 0
    %1855 = vmatpush1.bf16.msra.mxu0 0
    %1856 = vmatprep.mubr.bf16.mxu0 0
    %1857 = vmatmul.mubr.bf16.gmra.mrb[0].mxu0 %v1715
    %v1858 = vpop.f32.mrb[0].mxu0
    %v1859 = vadd.f32 0.0, %v1858
    %v1860 = vpop.f32.mrb[0].mxu0
    %v1861 = vadd.f32 0.0, %v1860
    %v1862 = vpop.f32.mrb[0].mxu0
    %v1863 = vpop.f32.mrb[0].mxu0
    %1864 = vdwg.mxu0
    %1865 = vmatprep.subr.bf16.mxu0 %v527
    %1866 = vmatpush1.bf16.msra.mxu0 %v526
    %1867 = vmatprep.subr.bf16.mxu0 %v531
    %1868 = vmatpush1.bf16.msra.mxu0 %v530
    %1869 = vmatprep.subr.bf16.mxu0 %v535
    %1870 = vmatpush1.bf16.msra.mxu0 %v534
    %1871 = vmatprep.subr.bf16.mxu0 %v539
    %1872 = vmatpush1.bf16.msra.mxu0 %v538
    %1873 = vmatprep.subr.bf16.mxu0 %v543
    %1874 = vmatpush1.bf16.msra.mxu0 %v542
    %1875 = vmatprep.subr.bf16.mxu0 %v547
    %1876 = vmatpush1.bf16.msra.mxu0 %v546
    %1877 = vmatprep.subr.bf16.mxu0 %v551
    %1878 = vmatpush1.bf16.msra.mxu0 %v550
    %1879 = vmatprep.subr.bf16.mxu0 %v555
    %1880 = vmatpush1.bf16.msra.mxu0 %v554
    %1881 = vmatprep.subr.bf16.mxu0 0
    %1882 = vmatpush1.bf16.msra.mxu0 0
    %1883 = vmatprep.subr.bf16.mxu0 0
    %1884 = vmatpush1.bf16.msra.mxu0 0
    %1885 = vmatprep.subr.bf16.mxu0 0
    %1886 = vmatpush1.bf16.msra.mxu0 0
    %1887 = vmatprep.subr.bf16.mxu0 0
    %1888 = vmatpush1.bf16.msra.mxu0 0
    %1889 = vmatprep.subr.bf16.mxu0 0
    %1890 = vmatpush1.bf16.msra.mxu0 0
    %1891 = vmatprep.subr.bf16.mxu0 0
    %1892 = vmatpush1.bf16.msra.mxu0 0
    %1893 = vmatprep.subr.bf16.mxu0 0
    %1894 = vmatpush1.bf16.msra.mxu0 0
    %1895 = vmatprep.subr.bf16.mxu0 0
    %1896 = vmatpush1.bf16.msra.mxu0 0
    %1897 = vmatprep.mubr.bf16.mxu0 0
    %1898 = vmatmul.mubr.bf16.gmra.mrb[0].mxu0 %v1715
    %v1899 = vpop.f32.mrb[0].mxu0
    %v1900 = vadd.f32 0.0, %v1899
    %v1901 = vpop.f32.mrb[0].mxu0
    %v1902 = vadd.f32 0.0, %v1901
    %v1903 = vpop.f32.mrb[0].mxu0
    %v1904 = vpop.f32.mrb[0].mxu0
    %1905 = vdwg.mxu0
    %v1906 = vadd.f32 %v1820, %v1859
    %v1907 = vadd.f32 %v1821, %v1861
    %v1908 = vadd.f32 %v1822, %v1900
    %v1909 = vadd.f32 %v1823, %v1902
    %v1910 = vmul.f32 %v1906, 0.5
    %v1911 = vtanh.pop %v1910
    %v1912 = vmul.f32 %v1911, 0.5
    %v1913 = vadd.f32 %v1912, 0.5
    %v1914 = vmul.f32 %v1907, 0.5
    %v1915 = vtanh.pop %v1914
    %v1916 = vmul.f32 %v1915, 0.5
    %v1917 = vadd.f32 %v1916, 0.5
    %v1918 = vtanh.pop %v1908
    %v1919 = vmul.f32 %v1909, 0.5
    %v1920 = vtanh.pop %v1919
    %v1921 = vmul.f32 %v1920, 0.5
    %v1922 = vadd.f32 %v1921, 0.5
    %v1924 = vrot.slane %v1705, 6
    %v1926 = vmul.f32 %v1917, %v1924
    %v1927 = vmul.f32 %v1913, %v1918
    %v1928 = vadd.f32 %v1926, %v1927
    %v1929 = vtanh.pop %v1928
    %v1930 = vmul.f32 %v1922, %v1929
    %v1931 = vpack.c.bf16 %v1930, %v1930
    %v1932 = vpack.c.bf16 %v1818, %v1818
    %1933 = vmatprep.subr.bf16.mxu0 %v887
    %1934 = vmatpush1.bf16.msra.mxu0 %v886
    %1935 = vmatprep.subr.bf16.mxu0 %v891
    %1936 = vmatpush1.bf16.msra.mxu0 %v890
    %1937 = vmatprep.subr.bf16.mxu0 %v895
    %1938 = vmatpush1.bf16.msra.mxu0 %v894
    %1939 = vmatprep.subr.bf16.mxu0 %v899
    %1940 = vmatpush1.bf16.msra.mxu0 %v898
    %1941 = vmatprep.subr.bf16.mxu0 %v903
    %1942 = vmatpush1.bf16.msra.mxu0 %v902
    %1943 = vmatprep.subr.bf16.mxu0 %v907
    %1944 = vmatpush1.bf16.msra.mxu0 %v906
    %1945 = vmatprep.subr.bf16.mxu0 %v911
    %1946 = vmatpush1.bf16.msra.mxu0 %v910
    %1947 = vmatprep.subr.bf16.mxu0 %v915
    %1948 = vmatpush1.bf16.msra.mxu0 %v914
    %1949 = vmatprep.subr.bf16.mxu0 %v919
    %1950 = vmatpush1.bf16.msra.mxu0 %v918
    %1951 = vmatprep.subr.bf16.mxu0 %v923
    %1952 = vmatpush1.bf16.msra.mxu0 %v922
    %1953 = vmatprep.subr.bf16.mxu0 %v927
    %1954 = vmatpush1.bf16.msra.mxu0 %v926
    %1955 = vmatprep.subr.bf16.mxu0 %v931
    %1956 = vmatpush1.bf16.msra.mxu0 %v930
    %1957 = vmatprep.subr.bf16.mxu0 %v935
    %1958 = vmatpush1.bf16.msra.mxu0 %v934
    %1959 = vmatprep.subr.bf16.mxu0 %v939
    %1960 = vmatpush1.bf16.msra.mxu0 %v938
    %1961 = vmatprep.subr.bf16.mxu0 %v943
    %1962 = vmatpush1.bf16.msra.mxu0 %v942
    %1963 = vmatprep.subr.bf16.mxu0 %v947
    %1964 = vmatpush1.bf16.msra.mxu0 %v946
    %1965 = vmatprep.mubr.bf16.mxu0 %v1932
    %1966 = vmatmul.mubr.bf16.gmra.mrb[0].mxu0 %v1931
    %v1967 = vpop.f32.mrb[0].mxu0
    %v1968 = vadd.f32 %v407, %v1967
    %v1969 = vpop.f32.mrb[0].mxu0
    %v1970 = vadd.f32 %v411, %v1969
    %v1971 = vpop.f32.mrb[0].mxu0
    %v1972 = vpop.f32.mrb[0].mxu0
    %1973 = vdwg.mxu0
    %1974 = vmatprep.subr.bf16.mxu0 %v889
    %1975 = vmatpush1.bf16.msra.mxu0 %v888
    %1976 = vmatprep.subr.bf16.mxu0 %v893
    %1977 = vmatpush1.bf16.msra.mxu0 %v892
    %1978 = vmatprep.subr.bf16.mxu0 %v897
    %1979 = vmatpush1.bf16.msra.mxu0 %v896
    %1980 = vmatprep.subr.bf16.mxu0 %v901
    %1981 = vmatpush1.bf16.msra.mxu0 %v900
    %1982 = vmatprep.subr.bf16.mxu0 %v905
    %1983 = vmatpush1.bf16.msra.mxu0 %v904
    %1984 = vmatprep.subr.bf16.mxu0 %v909
    %1985 = vmatpush1.bf16.msra.mxu0 %v908
    %1986 = vmatprep.subr.bf16.mxu0 %v913
    %1987 = vmatpush1.bf16.msra.mxu0 %v912
    %1988 = vmatprep.subr.bf16.mxu0 %v917
    %1989 = vmatpush1.bf16.msra.mxu0 %v916
    %1990 = vmatprep.subr.bf16.mxu0 %v921
    %1991 = vmatpush1.bf16.msra.mxu0 %v920
    %1992 = vmatprep.subr.bf16.mxu0 %v925
    %1993 = vmatpush1.bf16.msra.mxu0 %v924
    %1994 = vmatprep.subr.bf16.mxu0 %v929
    %1995 = vmatpush1.bf16.msra.mxu0 %v928
    %1996 = vmatprep.subr.bf16.mxu0 %v933
    %1997 = vmatpush1.bf16.msra.mxu0 %v932
    %1998 = vmatprep.subr.bf16.mxu0 %v937
    %1999 = vmatpush1.bf16.msra.mxu0 %v936
    %2000 = vmatprep.subr.bf16.mxu0 %v941
    %2001 = vmatpush1.bf16.msra.mxu0 %v940
    %2002 = vmatprep.subr.bf16.mxu0 %v945
    %2003 = vmatpush1.bf16.msra.mxu0 %v944
    %2004 = vmatprep.subr.bf16.mxu0 %v949
    %2005 = vmatpush1.bf16.msra.mxu0 %v948
    %2006 = vmatprep.mubr.bf16.mxu0 %v1932
    %2007 = vmatmul.mubr.bf16.gmra.mrb[0].mxu0 %v1931
    %v2008 = vpop.f32.mrb[0].mxu0
    %v2009 = vadd.f32 %v415, %v2008
    %v2010 = vpop.f32.mrb[0].mxu0
    %v2011 = vadd.f32 %v419, %v2010
    %v2012 = vpop.f32.mrb[0].mxu0
    %v2013 = vpop.f32.mrb[0].mxu0
    %2014 = vdwg.mxu0
    %v2015 = vmul.f32 %v1968, 0.5
    %v2016 = vtanh.pop %v2015
    %v2017 = vmul.f32 %v2016, 0.5
    %v2018 = vadd.f32 %v2017, 0.5
    %v2019 = vmul.f32 %v1970, 0.5
    %v2020 = vtanh.pop %v2019
    %v2021 = vmul.f32 %v2020, 0.5
    %v2022 = vadd.f32 %v2021, 0.5
    %v2023 = vtanh.pop %v2009
    %v2024 = vmul.f32 %v2011, 0.5
    %v2025 = vtanh.pop %v2024
    %v2026 = vmul.f32 %v2025, 0.5
    %v2027 = vadd.f32 %v2026, 0.5
    %v2028 = vmul.f32 %v2022, %v1816
    %v2029 = vmul.f32 %v2018, %v2023
    %v2030 = vadd.f32 %v2028, %v2029
    %v2031 = vtanh.pop %v2030
    %v2032 = vmul.f32 %v2027, %v2031
    %2033 = vst [vmem:[#allocation3 + $0x8] sm:$0x3] %v2032
    %v2034 = vld [vmem:[#allocation2 + $0x20] sm:$0xc]
    %v2035 = vld [vmem:[#allocation2 + $0x28] sm:$0xc]
    %v2036 = vld [vmem:[#allocation2 + $0x30] sm:$0xc]
    %v2037 = vld [vmem:[#allocation2 + $0x38] sm:$0xc]
    %2038 = vmatprep.subr.bf16.mxu0 %v525
    %2039 = vmatpush1.bf16.msra.mxu0 %v524
    %2040 = vmatprep.subr.bf16.mxu0 %v529
    %2041 = vmatpush1.bf16.msra.mxu0 %v528
    %2042 = vmatprep.subr.bf16.mxu0 %v533
    %2043 = vmatpush1.bf16.msra.mxu0 %v532
    %2044 = vmatprep.subr.bf16.mxu0 %v537
    %2045 = vmatpush1.bf16.msra.mxu0 %v536
    %2046 = vmatprep.subr.bf16.mxu0 %v541
    %2047 = vmatpush1.bf16.msra.mxu0 %v540
    %2048 = vmatprep.subr.bf16.mxu0 %v545
    %2049 = vmatpush1.bf16.msra.mxu0 %v544
    %2050 = vmatprep.subr.bf16.mxu0 %v549
    %2051 = vmatpush1.bf16.msra.mxu0 %v548
    %2052 = vmatprep.subr.bf16.mxu0 %v553
    %2053 = vmatpush1.bf16.msra.mxu0 %v552
    %2054 = vmatprep.subr.bf16.mxu0 0
    %2055 = vmatpush1.bf16.msra.mxu0 0
    %2056 = vmatprep.subr.bf16.mxu0 0
    %2057 = vmatpush1.bf16.msra.mxu0 0
    %2058 = vmatprep.subr.bf16.mxu0 0
    %2059 = vmatpush1.bf16.msra.mxu0 0
    %2060 = vmatprep.subr.bf16.mxu0 0
    %2061 = vmatpush1.bf16.msra.mxu0 0
    %2062 = vmatprep.subr.bf16.mxu0 0
    %2063 = vmatpush1.bf16.msra.mxu0 0
    %2064 = vmatprep.subr.bf16.mxu0 0
    %2065 = vmatpush1.bf16.msra.mxu0 0
    %2066 = vmatprep.subr.bf16.mxu0 0
    %2067 = vmatpush1.bf16.msra.mxu0 0
    %2068 = vmatprep.subr.bf16.mxu0 0
    %2069 = vmatpush1.bf16.msra.mxu0 0
    %2070 = vmatprep.mubr.bf16.mxu0 0
    %2071 = vmatmul.mubr.bf16.gmra.mrb[0].mxu0 %v1931
    %v2072 = vpop.f32.mrb[0].mxu0
    %v2073 = vadd.f32 0.0, %v2072
    %v2074 = vpop.f32.mrb[0].mxu0
    %v2075 = vadd.f32 0.0, %v2074
    %v2076 = vpop.f32.mrb[0].mxu0
    %v2077 = vpop.f32.mrb[0].mxu0
    %2078 = vdwg.mxu0
    %2079 = vmatprep.subr.bf16.mxu0 %v527
    %2080 = vmatpush1.bf16.msra.mxu0 %v526
    %2081 = vmatprep.subr.bf16.mxu0 %v531
    %2082 = vmatpush1.bf16.msra.mxu0 %v530
    %2083 = vmatprep.subr.bf16.mxu0 %v535
    %2084 = vmatpush1.bf16.msra.mxu0 %v534
    %2085 = vmatprep.subr.bf16.mxu0 %v539
    %2086 = vmatpush1.bf16.msra.mxu0 %v538
    %2087 = vmatprep.subr.bf16.mxu0 %v543
    %2088 = vmatpush1.bf16.msra.mxu0 %v542
    %2089 = vmatprep.subr.bf16.mxu0 %v547
    %2090 = vmatpush1.bf16.msra.mxu0 %v546
    %2091 = vmatprep.subr.bf16.mxu0 %v551
    %2092 = vmatpush1.bf16.msra.mxu0 %v550
    %2093 = vmatprep.subr.bf16.mxu0 %v555
    %2094 = vmatpush1.bf16.msra.mxu0 %v554
    %2095 = vmatprep.subr.bf16.mxu0 0
    %2096 = vmatpush1.bf16.msra.mxu0 0
    %2097 = vmatprep.subr.bf16.mxu0 0
    %2098 = vmatpush1.bf16.msra.mxu0 0
    %2099 = vmatprep.subr.bf16.mxu0 0
    %2100 = vmatpush1.bf16.msra.mxu0 0
    %2101 = vmatprep.subr.bf16.mxu0 0
    %2102 = vmatpush1.bf16.msra.mxu0 0
    %2103 = vmatprep.subr.bf16.mxu0 0
    %2104 = vmatpush1.bf16.msra.mxu0 0
    %2105 = vmatprep.subr.bf16.mxu0 0
    %2106 = vmatpush1.bf16.msra.mxu0 0
    %2107 = vmatprep.subr.bf16.mxu0 0
    %2108 = vmatpush1.bf16.msra.mxu0 0
    %2109 = vmatprep.subr.bf16.mxu0 0
    %2110 = vmatpush1.bf16.msra.mxu0 0
    %2111 = vmatprep.mubr.bf16.mxu0 0
    %2112 = vmatmul.mubr.bf16.gmra.mrb[0].mxu0 %v1931
    %v2113 = vpop.f32.mrb[0].mxu0
    %v2114 = vadd.f32 0.0, %v2113
    %v2115 = vpop.f32.mrb[0].mxu0
    %v2116 = vadd.f32 0.0, %v2115
    %v2117 = vpop.f32.mrb[0].mxu0
    %v2118 = vpop.f32.mrb[0].mxu0
    %2119 = vdwg.mxu0
    %v2124 = vrot.slane %v2073, 6
    %v2125 = vrot.slane %v2075, 6
    %v2126 = vrot.slane %v2114, 6
    %v2127 = vrot.slane %v2116, 6
    %v2132 = vadd.f32 %v2034, %v2124
    %v2133 = vadd.f32 %v2035, %v2125
    %v2134 = vadd.f32 %v2036, %v2126
    %v2135 = vadd.f32 %v2037, %v2127
    %v2136 = vmul.f32 %v2132, 0.5
    %v2137 = vtanh.pop %v2136
    %v2138 = vmul.f32 %v2137, 0.5
    %v2139 = vadd.f32 %v2138, 0.5
    %v2140 = vmul.f32 %v2133, 0.5
    %v2141 = vtanh.pop %v2140
    %v2142 = vmul.f32 %v2141, 0.5
    %v2143 = vadd.f32 %v2142, 0.5
    %v2144 = vtanh.pop %v2134
    %v2145 = vmul.f32 %v2135, 0.5
    %v2146 = vtanh.pop %v2145
    %v2147 = vmul.f32 %v2146, 0.5
    %v2148 = vadd.f32 %v2147, 0.5
    %v2150 = vrot.slane %v1928, 6
    %v2152 = vmul.f32 %v2143, %v2150
    %v2153 = vmul.f32 %v2139, %v2144
    %v2154 = vadd.f32 %v2152, %v2153
    %v2155 = vtanh.pop %v2154
    %v2156 = vmul.f32 %v2148, %v2155
    %v2158 = vrot.slane %v2032, 6
    %v2160 = vpack.c.bf16 %v2156, %v2156
    %v2161 = vpack.c.bf16 %v2158, %v2158
    %v2164 = vrot.slane %v2160, 1
    %v2165 = vrot.slane %v2161, 1
    %2168 = vmatprep.subr.bf16.mxu0 %v887
    %2169 = vmatpush1.bf16.msra.mxu0 %v886
    %2170 = vmatprep.subr.bf16.mxu0 %v891
    %2171 = vmatpush1.bf16.msra.mxu0 %v890
    %2172 = vmatprep.subr.bf16.mxu0 %v895
    %2173 = vmatpush1.bf16.msra.mxu0 %v894
    %2174 = vmatprep.subr.bf16.mxu0 %v899
    %2175 = vmatpush1.bf16.msra.mxu0 %v898
    %2176 = vmatprep.subr.bf16.mxu0 %v903
    %2177 = vmatpush1.bf16.msra.mxu0 %v902
    %2178 = vmatprep.subr.bf16.mxu0 %v907
    %2179 = vmatpush1.bf16.msra.mxu0 %v906
    %2180 = vmatprep.subr.bf16.mxu0 %v911
    %2181 = vmatpush1.bf16.msra.mxu0 %v910
    %2182 = vmatprep.subr.bf16.mxu0 %v915
    %2183 = vmatpush1.bf16.msra.mxu0 %v914
    %2184 = vmatprep.subr.bf16.mxu0 %v919
    %2185 = vmatpush1.bf16.msra.mxu0 %v918
    %2186 = vmatprep.subr.bf16.mxu0 %v923
    %2187 = vmatpush1.bf16.msra.mxu0 %v922
    %2188 = vmatprep.subr.bf16.mxu0 %v927
    %2189 = vmatpush1.bf16.msra.mxu0 %v926
    %2190 = vmatprep.subr.bf16.mxu0 %v931
    %2191 = vmatpush1.bf16.msra.mxu0 %v930
    %2192 = vmatprep.subr.bf16.mxu0 %v935
    %2193 = vmatpush1.bf16.msra.mxu0 %v934
    %2194 = vmatprep.subr.bf16.mxu0 %v939
    %2195 = vmatpush1.bf16.msra.mxu0 %v938
    %2196 = vmatprep.subr.bf16.mxu0 %v943
    %2197 = vmatpush1.bf16.msra.mxu0 %v942
    %2198 = vmatprep.subr.bf16.mxu0 %v947
    %2199 = vmatpush1.bf16.msra.mxu0 %v946
    %2200 = vmatprep.mubr.bf16.mxu0 %v2165
    %2201 = vmatmul.mubr.bf16.gmra.mrb[0].mxu0 %v2164
    %v2202 = vpop.f32.mrb[0].mxu0
    %v2203 = vadd.f32 %v407, %v2202
    %v2204 = vpop.f32.mrb[0].mxu0
    %v2205 = vadd.f32 %v411, %v2204
    %v2206 = vpop.f32.mrb[0].mxu0
    %v2207 = vpop.f32.mrb[0].mxu0
    %2208 = vdwg.mxu0
    %2209 = vmatprep.subr.bf16.mxu0 %v889
    %2210 = vmatpush1.bf16.msra.mxu0 %v888
    %2211 = vmatprep.subr.bf16.mxu0 %v893
    %2212 = vmatpush1.bf16.msra.mxu0 %v892
    %2213 = vmatprep.subr.bf16.mxu0 %v897
    %2214 = vmatpush1.bf16.msra.mxu0 %v896
    %2215 = vmatprep.subr.bf16.mxu0 %v901
    %2216 = vmatpush1.bf16.msra.mxu0 %v900
    %2217 = vmatprep.subr.bf16.mxu0 %v905
    %2218 = vmatpush1.bf16.msra.mxu0 %v904
    %2219 = vmatprep.subr.bf16.mxu0 %v909
    %2220 = vmatpush1.bf16.msra.mxu0 %v908
    %2221 = vmatprep.subr.bf16.mxu0 %v913
    %2222 = vmatpush1.bf16.msra.mxu0 %v912
    %2223 = vmatprep.subr.bf16.mxu0 %v917
    %2224 = vmatpush1.bf16.msra.mxu0 %v916
    %2225 = vmatprep.subr.bf16.mxu0 %v921
    %2226 = vmatpush1.bf16.msra.mxu0 %v920
    %2227 = vmatprep.subr.bf16.mxu0 %v925
    %2228 = vmatpush1.bf16.msra.mxu0 %v924
    %2229 = vmatprep.subr.bf16.mxu0 %v929
    %2230 = vmatpush1.bf16.msra.mxu0 %v928
    %2231 = vmatprep.subr.bf16.mxu0 %v933
    %2232 = vmatpush1.bf16.msra.mxu0 %v932
    %2233 = vmatprep.subr.bf16.mxu0 %v937
    %2234 = vmatpush1.bf16.msra.mxu0 %v936
    %2235 = vmatprep.subr.bf16.mxu0 %v941
    %2236 = vmatpush1.bf16.msra.mxu0 %v940
    %2237 = vmatprep.subr.bf16.mxu0 %v945
    %2238 = vmatpush1.bf16.msra.mxu0 %v944
    %2239 = vmatprep.subr.bf16.mxu0 %v949
    %2240 = vmatpush1.bf16.msra.mxu0 %v948
    %2241 = vmatprep.mubr.bf16.mxu0 %v2165
    %2242 = vmatmul.mubr.bf16.gmra.mrb[0].mxu0 %v2164
    %v2243 = vpop.f32.mrb[0].mxu0
    %v2244 = vadd.f32 %v415, %v2243
    %v2245 = vpop.f32.mrb[0].mxu0
    %v2246 = vadd.f32 %v419, %v2245
    %v2247 = vpop.f32.mrb[0].mxu0
    %v2248 = vpop.f32.mrb[0].mxu0
    %2249 = vdwg.mxu0
    %v2250 = vmul.f32 %v2203, 0.5
    %v2251 = vtanh.pop %v2250
    %v2252 = vmul.f32 %v2251, 0.5
    %v2253 = vadd.f32 %v2252, 0.5
    %v2254 = vmul.f32 %v2205, 0.5
    %v2255 = vtanh.pop %v2254
    %v2256 = vmul.f32 %v2255, 0.5
    %v2257 = vadd.f32 %v2256, 0.5
    %v2258 = vtanh.pop %v2244
    %v2259 = vmul.f32 %v2246, 0.5
    %v2260 = vtanh.pop %v2259
    %v2261 = vmul.f32 %v2260, 0.5
    %v2262 = vadd.f32 %v2261, 0.5
    %v2263 = vmul.f32 %v2257, %v2030
    %v2264 = vmul.f32 %v2253, %v2258
    %v2265 = vadd.f32 %v2263, %v2264
    %v2266 = vtanh.pop %v2265
    %v2267 = vmul.f32 %v2262, %v2266
    %2268 = vst [vmem:[#allocation3 + $0xa] sm:$0x3] %v2267
    %v2269 = vld [vmem:[#allocation2 + $0x20] sm:$0x30]
    %v2270 = vld [vmem:[#allocation2 + $0x28] sm:$0x30]
    %v2271 = vld [vmem:[#allocation2 + $0x30] sm:$0x30]
    %v2272 = vld [vmem:[#allocation2 + $0x38] sm:$0x30]
    %2273 = vmatprep.subr.bf16.mxu0 %v525
    %2274 = vmatpush1.bf16.msra.mxu0 %v524
    %2275 = vmatprep.subr.bf16.mxu0 %v529
    %2276 = vmatpush1.bf16.msra.mxu0 %v528
    %2277 = vmatprep.subr.bf16.mxu0 %v533
    %2278 = vmatpush1.bf16.msra.mxu0 %v532
    %2279 = vmatprep.subr.bf16.mxu0 %v537
    %2280 = vmatpush1.bf16.msra.mxu0 %v536
    %2281 = vmatprep.subr.bf16.mxu0 %v541
    %2282 = vmatpush1.bf16.msra.mxu0 %v540
    %2283 = vmatprep.subr.bf16.mxu0 %v545
    %2284 = vmatpush1.bf16.msra.mxu0 %v544
    %2285 = vmatprep.subr.bf16.mxu0 %v549
    %2286 = vmatpush1.bf16.msra.mxu0 %v548
    %2287 = vmatprep.subr.bf16.mxu0 %v553
    %2288 = vmatpush1.bf16.msra.mxu0 %v552
    %2289 = vmatprep.subr.bf16.mxu0 0
    %2290 = vmatpush1.bf16.msra.mxu0 0
    %2291 = vmatprep.subr.bf16.mxu0 0
    %2292 = vmatpush1.bf16.msra.mxu0 0
    %2293 = vmatprep.subr.bf16.mxu0 0
    %2294 = vmatpush1.bf16.msra.mxu0 0
    %2295 = vmatprep.subr.bf16.mxu0 0
    %2296 = vmatpush1.bf16.msra.mxu0 0
    %2297 = vmatprep.subr.bf16.mxu0 0
    %2298 = vmatpush1.bf16.msra.mxu0 0
    %2299 = vmatprep.subr.bf16.mxu0 0
    %2300 = vmatpush1.bf16.msra.mxu0 0
    %2301 = vmatprep.subr.bf16.mxu0 0
    %2302 = vmatpush1.bf16.msra.mxu0 0
    %2303 = vmatprep.subr.bf16.mxu0 0
    %2304 = vmatpush1.bf16.msra.mxu0 0
    %2305 = vmatprep.mubr.bf16.mxu0 0
    %2306 = vmatmul.mubr.bf16.gmra.mrb[0].mxu0 %v2164
    %v2307 = vpop.f32.mrb[0].mxu0
    %v2308 = vadd.f32 0.0, %v2307
    %v2309 = vpop.f32.mrb[0].mxu0
    %v2310 = vadd.f32 0.0, %v2309
    %v2311 = vpop.f32.mrb[0].mxu0
    %v2312 = vpop.f32.mrb[0].mxu0
    %2313 = vdwg.mxu0
    %2314 = vmatprep.subr.bf16.mxu0 %v527
    %2315 = vmatpush1.bf16.msra.mxu0 %v526
    %2316 = vmatprep.subr.bf16.mxu0 %v531
    %2317 = vmatpush1.bf16.msra.mxu0 %v530
    %2318 = vmatprep.subr.bf16.mxu0 %v535
    %2319 = vmatpush1.bf16.msra.mxu0 %v534
    %2320 = vmatprep.subr.bf16.mxu0 %v539
    %2321 = vmatpush1.bf16.msra.mxu0 %v538
    %2322 = vmatprep.subr.bf16.mxu0 %v543
    %2323 = vmatpush1.bf16.msra.mxu0 %v542
    %2324 = vmatprep.subr.bf16.mxu0 %v547
    %2325 = vmatpush1.bf16.msra.mxu0 %v546
    %2326 = vmatprep.subr.bf16.mxu0 %v551
    %2327 = vmatpush1.bf16.msra.mxu0 %v550
    %2328 = vmatprep.subr.bf16.mxu0 %v555
    %2329 = vmatpush1.bf16.msra.mxu0 %v554
    %2330 = vmatprep.subr.bf16.mxu0 0
    %2331 = vmatpush1.bf16.msra.mxu0 0
    %2332 = vmatprep.subr.bf16.mxu0 0
    %2333 = vmatpush1.bf16.msra.mxu0 0
    %2334 = vmatprep.subr.bf16.mxu0 0
    %2335 = vmatpush1.bf16.msra.mxu0 0
    %2336 = vmatprep.subr.bf16.mxu0 0
    %2337 = vmatpush1.bf16.msra.mxu0 0
    %2338 = vmatprep.subr.bf16.mxu0 0
    %2339 = vmatpush1.bf16.msra.mxu0 0
    %2340 = vmatprep.subr.bf16.mxu0 0
    %2341 = vmatpush1.bf16.msra.mxu0 0
    %2342 = vmatprep.subr.bf16.mxu0 0
    %2343 = vmatpush1.bf16.msra.mxu0 0
    %2344 = vmatprep.subr.bf16.mxu0 0
    %2345 = vmatpush1.bf16.msra.mxu0 0
    %2346 = vmatprep.mubr.bf16.mxu0 0
    %2347 = vmatmul.mubr.bf16.gmra.mrb[0].mxu0 %v2164
    %v2348 = vpop.f32.mrb[0].mxu0
    %v2349 = vadd.f32 0.0, %v2348
    %v2350 = vpop.f32.mrb[0].mxu0
    %v2351 = vadd.f32 0.0, %v2350
    %v2352 = vpop.f32.mrb[0].mxu0
    %v2353 = vpop.f32.mrb[0].mxu0
    %2354 = vdwg.mxu0
    %v2359 = vrot.slane %v2308, 4
    %v2360 = vrot.slane %v2310, 4
    %v2361 = vrot.slane %v2349, 4
    %v2362 = vrot.slane %v2351, 4
    %v2367 = vadd.f32 %v2269, %v2359
    %v2368 = vadd.f32 %v2270, %v2360
    %v2369 = vadd.f32 %v2271, %v2361
    %v2370 = vadd.f32 %v2272, %v2362
    %v2371 = vmul.f32 %v2367, 0.5
    %v2372 = vtanh.pop %v2371
    %v2373 = vmul.f32 %v2372, 0.5
    %v2374 = vadd.f32 %v2373, 0.5
    %v2375 = vmul.f32 %v2368, 0.5
    %v2376 = vtanh.pop %v2375
    %v2377 = vmul.f32 %v2376, 0.5
    %v2378 = vadd.f32 %v2377, 0.5
    %v2379 = vtanh.pop %v2369
    %v2380 = vmul.f32 %v2370, 0.5
    %v2381 = vtanh.pop %v2380
    %v2382 = vmul.f32 %v2381, 0.5
    %v2383 = vadd.f32 %v2382, 0.5
    %v2385 = vrot.slane %v2154, 6
    %v2387 = vmul.f32 %v2378, %v2385
    %v2388 = vmul.f32 %v2374, %v2379
    %v2389 = vadd.f32 %v2387, %v2388
    %v2390 = vtanh.pop %v2389
    %v2391 = vmul.f32 %v2383, %v2390
    %v2393 = vrot.slane %v2267, 4
    %v2395 = vpack.c.bf16 %v2391, %v2391
    %v2396 = vpack.c.bf16 %v2393, %v2393
    %v2399 = vrot.slane %v2395, 2
    %v2400 = vrot.slane %v2396, 2
    %2403 = vmatprep.subr.bf16.mxu0 %v887
    %2404 = vmatpush1.bf16.msra.mxu0 %v886
    %2405 = vmatprep.subr.bf16.mxu0 %v891
    %2406 = vmatpush1.bf16.msra.mxu0 %v890
    %2407 = vmatprep.subr.bf16.mxu0 %v895
    %2408 = vmatpush1.bf16.msra.mxu0 %v894
    %2409 = vmatprep.subr.bf16.mxu0 %v899
    %2410 = vmatpush1.bf16.msra.mxu0 %v898
    %2411 = vmatprep.subr.bf16.mxu0 %v903
    %2412 = vmatpush1.bf16.msra.mxu0 %v902
    %2413 = vmatprep.subr.bf16.mxu0 %v907
    %2414 = vmatpush1.bf16.msra.mxu0 %v906
    %2415 = vmatprep.subr.bf16.mxu0 %v911
    %2416 = vmatpush1.bf16.msra.mxu0 %v910
    %2417 = vmatprep.subr.bf16.mxu0 %v915
    %2418 = vmatpush1.bf16.msra.mxu0 %v914
    %2419 = vmatprep.subr.bf16.mxu0 %v919
    %2420 = vmatpush1.bf16.msra.mxu0 %v918
    %2421 = vmatprep.subr.bf16.mxu0 %v923
    %2422 = vmatpush1.bf16.msra.mxu0 %v922
    %2423 = vmatprep.subr.bf16.mxu0 %v927
    %2424 = vmatpush1.bf16.msra.mxu0 %v926
    %2425 = vmatprep.subr.bf16.mxu0 %v931
    %2426 = vmatpush1.bf16.msra.mxu0 %v930
    %2427 = vmatprep.subr.bf16.mxu0 %v935
    %2428 = vmatpush1.bf16.msra.mxu0 %v934
    %2429 = vmatprep.subr.bf16.mxu0 %v939
    %2430 = vmatpush1.bf16.msra.mxu0 %v938
    %2431 = vmatprep.subr.bf16.mxu0 %v943
    %2432 = vmatpush1.bf16.msra.mxu0 %v942
    %2433 = vmatprep.subr.bf16.mxu0 %v947
    %2434 = vmatpush1.bf16.msra.mxu0 %v946
    %2435 = vmatprep.mubr.bf16.mxu0 %v2400
    %2436 = vmatmul.mubr.bf16.gmra.mrb[0].mxu0 %v2399
    %v2437 = vpop.f32.mrb[0].mxu0
    %v2438 = vadd.f32 %v407, %v2437
    %v2439 = vpop.f32.mrb[0].mxu0
    %v2440 = vadd.f32 %v411, %v2439
    %v2441 = vpop.f32.mrb[0].mxu0
    %v2442 = vpop.f32.mrb[0].mxu0
    %2443 = vdwg.mxu0
    %2444 = vmatprep.subr.bf16.mxu0 %v889
    %2445 = vmatpush1.bf16.msra.mxu0 %v888
    %2446 = vmatprep.subr.bf16.mxu0 %v893
    %2447 = vmatpush1.bf16.msra.mxu0 %v892
    %2448 = vmatprep.subr.bf16.mxu0 %v897
    %2449 = vmatpush1.bf16.msra.mxu0 %v896
    %2450 = vmatprep.subr.bf16.mxu0 %v901
    %2451 = vmatpush1.bf16.msra.mxu0 %v900
    %2452 = vmatprep.subr.bf16.mxu0 %v905
    %2453 = vmatpush1.bf16.msra.mxu0 %v904
    %2454 = vmatprep.subr.bf16.mxu0 %v909
    %2455 = vmatpush1.bf16.msra.mxu0 %v908
    %2456 = vmatprep.subr.bf16.mxu0 %v913
    %2457 = vmatpush1.bf16.msra.mxu0 %v912
    %2458 = vmatprep.subr.bf16.mxu0 %v917
    %2459 = vmatpush1.bf16.msra.mxu0 %v916
    %2460 = vmatprep.subr.bf16.mxu0 %v921
    %2461 = vmatpush1.bf16.msra.mxu0 %v920
    %2462 = vmatprep.subr.bf16.mxu0 %v925
    %2463 = vmatpush1.bf16.msra.mxu0 %v924
    %2464 = vmatprep.subr.bf16.mxu0 %v929
    %2465 = vmatpush1.bf16.msra.mxu0 %v928
    %2466 = vmatprep.subr.bf16.mxu0 %v933
    %2467 = vmatpush1.bf16.msra.mxu0 %v932
    %2468 = vmatprep.subr.bf16.mxu0 %v937
    %2469 = vmatpush1.bf16.msra.mxu0 %v936
    %2470 = vmatprep.subr.bf16.mxu0 %v941
    %2471 = vmatpush1.bf16.msra.mxu0 %v940
    %2472 = vmatprep.subr.bf16.mxu0 %v945
    %2473 = vmatpush1.bf16.msra.mxu0 %v944
    %2474 = vmatprep.subr.bf16.mxu0 %v949
    %2475 = vmatpush1.bf16.msra.mxu0 %v948
    %2476 = vmatprep.mubr.bf16.mxu0 %v2400
    %2477 = vmatmul.mubr.bf16.gmra.mrb[0].mxu0 %v2399
    %v2478 = vpop.f32.mrb[0].mxu0
    %v2479 = vadd.f32 %v415, %v2478
    %v2480 = vpop.f32.mrb[0].mxu0
    %v2481 = vadd.f32 %v419, %v2480
    %v2482 = vpop.f32.mrb[0].mxu0
    %v2483 = vpop.f32.mrb[0].mxu0
    %2484 = vdwg.mxu0
    %v2485 = vmul.f32 %v2438, 0.5
    %v2486 = vtanh.pop %v2485
    %v2487 = vmul.f32 %v2486, 0.5
    %v2488 = vadd.f32 %v2487, 0.5
    %v2489 = vmul.f32 %v2440, 0.5
    %v2490 = vtanh.pop %v2489
    %v2491 = vmul.f32 %v2490, 0.5
    %v2492 = vadd.f32 %v2491, 0.5
    %v2493 = vtanh.pop %v2479
    %v2494 = vmul.f32 %v2481, 0.5
    %v2495 = vtanh.pop %v2494
    %v2496 = vmul.f32 %v2495, 0.5
    %v2497 = vadd.f32 %v2496, 0.5
    %v2498 = vmul.f32 %v2492, %v2265
    %v2499 = vmul.f32 %v2488, %v2493
    %v2500 = vadd.f32 %v2498, %v2499
    %v2501 = vtanh.pop %v2500
    %v2502 = vmul.f32 %v2497, %v2501
    %2503 = vst [vmem:[#allocation3 + $0xc] sm:$0x3] %v2502
    %v2504 = vld [vmem:[#allocation2 + $0x20] sm:$0xc0]
    %v2505 = vld [vmem:[#allocation2 + $0x28] sm:$0xc0]
    %v2506 = vld [vmem:[#allocation2 + $0x30] sm:$0xc0]
    %v2507 = vld [vmem:[#allocation2 + $0x38] sm:$0xc0]
    %2508 = vmatprep.subr.bf16.mxu0 %v525
    %2509 = vmatpush1.bf16.msra.mxu0 %v524
    %2510 = vmatprep.subr.bf16.mxu0 %v529
    %2511 = vmatpush1.bf16.msra.mxu0 %v528
    %2512 = vmatprep.subr.bf16.mxu0 %v533
    %2513 = vmatpush1.bf16.msra.mxu0 %v532
    %2514 = vmatprep.subr.bf16.mxu0 %v537
    %2515 = vmatpush1.bf16.msra.mxu0 %v536
    %2516 = vmatprep.subr.bf16.mxu0 %v541
    %2517 = vmatpush1.bf16.msra.mxu0 %v540
    %2518 = vmatprep.subr.bf16.mxu0 %v545
    %2519 = vmatpush1.bf16.msra.mxu0 %v544
    %2520 = vmatprep.subr.bf16.mxu0 %v549
    %2521 = vmatpush1.bf16.msra.mxu0 %v548
    %2522 = vmatprep.subr.bf16.mxu0 %v553
    %2523 = vmatpush1.bf16.msra.mxu0 %v552
    %2524 = vmatprep.subr.bf16.mxu0 0
    %2525 = vmatpush1.bf16.msra.mxu0 0
    %2526 = vmatprep.subr.bf16.mxu0 0
    %2527 = vmatpush1.bf16.msra.mxu0 0
    %2528 = vmatprep.subr.bf16.mxu0 0
    %2529 = vmatpush1.bf16.msra.mxu0 0
    %2530 = vmatprep.subr.bf16.mxu0 0
    %2531 = vmatpush1.bf16.msra.mxu0 0
    %2532 = vmatprep.subr.bf16.mxu0 0
    %2533 = vmatpush1.bf16.msra.mxu0 0
    %2534 = vmatprep.subr.bf16.mxu0 0
    %2535 = vmatpush1.bf16.msra.mxu0 0
    %2536 = vmatprep.subr.bf16.mxu0 0
    %2537 = vmatpush1.bf16.msra.mxu0 0
    %2538 = vmatprep.subr.bf16.mxu0 0
    %2539 = vmatpush1.bf16.msra.mxu0 0
    %2540 = vmatprep.mubr.bf16.mxu0 0
    %2541 = vmatmul.mubr.bf16.gmra.mrb[0].mxu0 %v2399
    %v2542 = vpop.f32.mrb[0].mxu0
    %v2543 = vadd.f32 0.0, %v2542
    %v2544 = vpop.f32.mrb[0].mxu0
    %v2545 = vadd.f32 0.0, %v2544
    %v2546 = vpop.f32.mrb[0].mxu0
    %v2547 = vpop.f32.mrb[0].mxu0
    %2548 = vdwg.mxu0
    %2549 = vmatprep.subr.bf16.mxu0 %v527
    %2550 = vmatpush1.bf16.msra.mxu0 %v526
    %2551 = vmatprep.subr.bf16.mxu0 %v531
    %2552 = vmatpush1.bf16.msra.mxu0 %v530
    %2553 = vmatprep.subr.bf16.mxu0 %v535
    %2554 = vmatpush1.bf16.msra.mxu0 %v534
    %2555 = vmatprep.subr.bf16.mxu0 %v539
    %2556 = vmatpush1.bf16.msra.mxu0 %v538
    %2557 = vmatprep.subr.bf16.mxu0 %v543
    %2558 = vmatpush1.bf16.msra.mxu0 %v542
    %2559 = vmatprep.subr.bf16.mxu0 %v547
    %2560 = vmatpush1.bf16.msra.mxu0 %v546
    %2561 = vmatprep.subr.bf16.mxu0 %v551
    %2562 = vmatpush1.bf16.msra.mxu0 %v550
    %2563 = vmatprep.subr.bf16.mxu0 %v555
    %2564 = vmatpush1.bf16.msra.mxu0 %v554
    %2565 = vmatprep.subr.bf16.mxu0 0
    %2566 = vmatpush1.bf16.msra.mxu0 0
    %2567 = vmatprep.subr.bf16.mxu0 0
    %2568 = vmatpush1.bf16.msra.mxu0 0
    %2569 = vmatprep.subr.bf16.mxu0 0
    %2570 = vmatpush1.bf16.msra.mxu0 0
    %2571 = vmatprep.subr.bf16.mxu0 0
    %2572 = vmatpush1.bf16.msra.mxu0 0
    %2573 = vmatprep.subr.bf16.mxu0 0
    %2574 = vmatpush1.bf16.msra.mxu0 0
    %2575 = vmatprep.subr.bf16.mxu0 0
    %2576 = vmatpush1.bf16.msra.mxu0 0
    %2577 = vmatprep.subr.bf16.mxu0 0
    %2578 = vmatpush1.bf16.msra.mxu0 0
    %2579 = vmatprep.subr.bf16.mxu0 0
    %2580 = vmatpush1.bf16.msra.mxu0 0
    %2581 = vmatprep.mubr.bf16.mxu0 0
    %2582 = vmatmul.mubr.bf16.gmra.mrb[0].mxu0 %v2399
    %v2583 = vpop.f32.mrb[0].mxu0
    %v2584 = vadd.f32 0.0, %v2583
    %v2585 = vpop.f32.mrb[0].mxu0
    %v2586 = vadd.f32 0.0, %v2585
    %v2587 = vpop.f32.mrb[0].mxu0
    %v2588 = vpop.f32.mrb[0].mxu0
    %2589 = vdwg.mxu0
    %v2594 = vrot.slane %v2543, 2
    %v2595 = vrot.slane %v2545, 2
    %v2596 = vrot.slane %v2584, 2
    %v2597 = vrot.slane %v2586, 2
    %v2602 = vadd.f32 %v2504, %v2594
    %v2603 = vadd.f32 %v2505, %v2595
    %v2604 = vadd.f32 %v2506, %v2596
    %v2605 = vadd.f32 %v2507, %v2597
    %v2606 = vmul.f32 %v2602, 0.5
    %v2607 = vtanh.pop %v2606
    %v2608 = vmul.f32 %v2607, 0.5
    %v2609 = vadd.f32 %v2608, 0.5
    %v2610 = vmul.f32 %v2603, 0.5
    %v2611 = vtanh.pop %v2610
    %v2612 = vmul.f32 %v2611, 0.5
    %v2613 = vadd.f32 %v2612, 0.5
    %v2614 = vtanh.pop %v2604
    %v2615 = vmul.f32 %v2605, 0.5
    %v2616 = vtanh.pop %v2615
    %v2617 = vmul.f32 %v2616, 0.5
    %v2618 = vadd.f32 %v2617, 0.5
    %v2620 = vrot.slane %v2389, 6
    %v2622 = vmul.f32 %v2613, %v2620
    %v2623 = vmul.f32 %v2609, %v2614
    %v2624 = vadd.f32 %v2622, %v2623
    %v2625 = vtanh.pop %v2624
    %v2626 = vmul.f32 %v2618, %v2625
    %v2628 = vrot.slane %v2502, 2
    %v2630 = vpack.c.bf16 %v2626, %v2626
    %v2631 = vpack.c.bf16 %v2628, %v2628
    %v2634 = vrot.slane %v2630, 3
    %v2635 = vrot.slane %v2631, 3
    %2638 = vmatprep.subr.bf16.mxu0 %v887
    %2639 = vmatpush1.bf16.msra.mxu0 %v886
    %2640 = vmatprep.subr.bf16.mxu0 %v891
    %2641 = vmatpush1.bf16.msra.mxu0 %v890
    %2642 = vmatprep.subr.bf16.mxu0 %v895
    %2643 = vmatpush1.bf16.msra.mxu0 %v894
    %2644 = vmatprep.subr.bf16.mxu0 %v899
    %2645 = vmatpush1.bf16.msra.mxu0 %v898
    %2646 = vmatprep.subr.bf16.mxu0 %v903
    %2647 = vmatpush1.bf16.msra.mxu0 %v902
    %2648 = vmatprep.subr.bf16.mxu0 %v907
    %2649 = vmatpush1.bf16.msra.mxu0 %v906
    %2650 = vmatprep.subr.bf16.mxu0 %v911
    %2651 = vmatpush1.bf16.msra.mxu0 %v910
    %2652 = vmatprep.subr.bf16.mxu0 %v915
    %2653 = vmatpush1.bf16.msra.mxu0 %v914
    %2654 = vmatprep.subr.bf16.mxu0 %v919
    %2655 = vmatpush1.bf16.msra.mxu0 %v918
    %2656 = vmatprep.subr.bf16.mxu0 %v923
    %2657 = vmatpush1.bf16.msra.mxu0 %v922
    %2658 = vmatprep.subr.bf16.mxu0 %v927
    %2659 = vmatpush1.bf16.msra.mxu0 %v926
    %2660 = vmatprep.subr.bf16.mxu0 %v931
    %2661 = vmatpush1.bf16.msra.mxu0 %v930
    %2662 = vmatprep.subr.bf16.mxu0 %v935
    %2663 = vmatpush1.bf16.msra.mxu0 %v934
    %2664 = vmatprep.subr.bf16.mxu0 %v939
    %2665 = vmatpush1.bf16.msra.mxu0 %v938
    %2666 = vmatprep.subr.bf16.mxu0 %v943
    %2667 = vmatpush1.bf16.msra.mxu0 %v942
    %2668 = vmatprep.subr.bf16.mxu0 %v947
    %2669 = vmatpush1.bf16.msra.mxu0 %v946
    %2670 = vmatprep.mubr.bf16.mxu0 %v2635
    %2671 = vmatmul.mubr.bf16.gmra.mrb[0].mxu0 %v2634
    %v2672 = vpop.f32.mrb[0].mxu0
    %v2673 = vadd.f32 %v407, %v2672
    %v2674 = vpop.f32.mrb[0].mxu0
    %v2675 = vadd.f32 %v411, %v2674
    %v2676 = vpop.f32.mrb[0].mxu0
    %v2677 = vpop.f32.mrb[0].mxu0
    %2678 = vdwg.mxu0
    %2679 = vmatprep.subr.bf16.mxu0 %v889
    %2680 = vmatpush1.bf16.msra.mxu0 %v888
    %2681 = vmatprep.subr.bf16.mxu0 %v893
    %2682 = vmatpush1.bf16.msra.mxu0 %v892
    %2683 = vmatprep.subr.bf16.mxu0 %v897
    %2684 = vmatpush1.bf16.msra.mxu0 %v896
    %2685 = vmatprep.subr.bf16.mxu0 %v901
    %2686 = vmatpush1.bf16.msra.mxu0 %v900
    %2687 = vmatprep.subr.bf16.mxu0 %v905
    %2688 = vmatpush1.bf16.msra.mxu0 %v904
    %2689 = vmatprep.subr.bf16.mxu0 %v909
    %2690 = vmatpush1.bf16.msra.mxu0 %v908
    %2691 = vmatprep.subr.bf16.mxu0 %v913
    %2692 = vmatpush1.bf16.msra.mxu0 %v912
    %2693 = vmatprep.subr.bf16.mxu0 %v917
    %2694 = vmatpush1.bf16.msra.mxu0 %v916
    %2695 = vmatprep.subr.bf16.mxu0 %v921
    %2696 = vmatpush1.bf16.msra.mxu0 %v920
    %2697 = vmatprep.subr.bf16.mxu0 %v925
    %2698 = vmatpush1.bf16.msra.mxu0 %v924
    %2699 = vmatprep.subr.bf16.mxu0 %v929
    %2700 = vmatpush1.bf16.msra.mxu0 %v928
    %2701 = vmatprep.subr.bf16.mxu0 %v933
    %2702 = vmatpush1.bf16.msra.mxu0 %v932
    %2703 = vmatprep.subr.bf16.mxu0 %v937
    %2704 = vmatpush1.bf16.msra.mxu0 %v936
    %2705 = vmatprep.subr.bf16.mxu0 %v941
    %2706 = vmatpush1.bf16.msra.mxu0 %v940
    %2707 = vmatprep.subr.bf16.mxu0 %v945
    %2708 = vmatpush1.bf16.msra.mxu0 %v944
    %2709 = vmatprep.subr.bf16.mxu0 %v949
    %2710 = vmatpush1.bf16.msra.mxu0 %v948
    %2711 = vmatprep.mubr.bf16.mxu0 %v2635
    %2712 = vmatmul.mubr.bf16.gmra.mrb[0].mxu0 %v2634
    %v2713 = vpop.f32.mrb[0].mxu0
    %v2714 = vadd.f32 %v415, %v2713
    %v2715 = vpop.f32.mrb[0].mxu0
    %v2716 = vadd.f32 %v419, %v2715
    %v2717 = vpop.f32.mrb[0].mxu0
    %v2718 = vpop.f32.mrb[0].mxu0
    %2719 = vdwg.mxu0
    %v2720 = vmul.f32 %v2673, 0.5
    %v2721 = vtanh.pop %v2720
    %v2722 = vmul.f32 %v2721, 0.5
    %v2723 = vadd.f32 %v2722, 0.5
    %v2724 = vmul.f32 %v2675, 0.5
    %v2725 = vtanh.pop %v2724
    %v2726 = vmul.f32 %v2725, 0.5
    %v2727 = vadd.f32 %v2726, 0.5
    %v2728 = vtanh.pop %v2714
    %v2729 = vmul.f32 %v2716, 0.5
    %v2730 = vtanh.pop %v2729
    %v2731 = vmul.f32 %v2730, 0.5
    %v2732 = vadd.f32 %v2731, 0.5
    %v2733 = vmul.f32 %v2727, %v2500
    %v2734 = vmul.f32 %v2723, %v2728
    %v2735 = vadd.f32 %v2733, %v2734
    %v2736 = vtanh.pop %v2735
    %v2737 = vmul.f32 %v2732, %v2736
    %2738 = vst [vmem:[#allocation3 + $0xe] sm:$0x3] %v2737
    %v2739 = vld [vmem:[#allocation3] sm:$0xff]
    %v2740 = vld [vmem:[#allocation3 + $0x8] sm:$0xff]
    %v2741 = vld [vmem:[#allocation9] sm:$0xff]
    %v2742 = vld [vmem:[#allocation9 + $0x8] sm:$0xff]
    %v2743 = vld [vmem:[#allocation9 + $0x10] sm:$0xff]
    %v2744 = vld [vmem:[#allocation9 + $0x18] sm:$0xff]
    %v2745 = vld [vmem:[#allocation9 + $0x20] sm:$0xff]
    %v2746 = vld [vmem:[#allocation9 + $0x28] sm:$0xff]
    %v2747 = vld [vmem:[#allocation9 + $0x30] sm:$0xff]
    %v2748 = vld [vmem:[#allocation9 + $0x38] sm:$0xff]
    %v2749 = vld [vmem:[#allocation9 + $0x40] sm:$0xff]
    %v2750 = vld [vmem:[#allocation9 + $0x48] sm:$0xff]
    %v2751 = vld [vmem:[#allocation9 + $0x50] sm:$0xff]
    %v2752 = vld [vmem:[#allocation9 + $0x58] sm:$0xff]
    %v2753 = vld [vmem:[#allocation9 + $0x60] sm:$0xff]
    %v2754 = vld [vmem:[#allocation9 + $0x68] sm:$0xff]
    %v2755 = vld [vmem:[#allocation9 + $0x70] sm:$0xff]
    %v2756 = vld [vmem:[#allocation9 + $0x78] sm:$0xff]
    %v2757 = vld [vmem:[%s1] sm:$0xff]
    %v2758 = vld [vmem:[%s1 + $0x8] sm:$0xff]
    %v2759 = vld [vmem:[%s8] sm:$0xf]
    %v2761 = vsel %vm128, %v2757, 0
    %v2764 = vsel %vm128, %v2758, 0
    %v2767 = vsel %vm135, %v2759, 0
    %2769 = vmatprep.subr.mxu0 0.0
    %2770 = vmatpush1.msra.mxu0 %v2767
    %2771 = vmatprep.subr.mxu0 0.0
    %2772 = vmatpush1.msra.mxu0 0.0
    %2773 = vmatprep.subr.mxu0 0.0
    %2774 = vmatpush1.msra.mxu0 0.0
    %2775 = vmatprep.subr.mxu0 0.0
    %2776 = vmatpush1.msra.mxu0 0.0
    %2777 = vmatprep.subr.mxu0 0.0
    %2778 = vmatpush1.msra.mxu0 0.0
    %2779 = vmatprep.subr.mxu0 0.0
    %2780 = vmatpush1.msra.mxu0 0.0
    %2781 = vmatprep.subr.mxu0 0.0
    %2782 = vmatpush1.msra.mxu0 0.0
    %2783 = vmatprep.subr.mxu0 0.0
    %2784 = vmatpush1.msra.mxu0 0.0
    %2785 = vmatprep.subr.mxu0 0.0
    %2786 = vmatpush1.msra.mxu0 0.0
    %2787 = vmatprep.subr.mxu0 0.0
    %2788 = vmatpush1.msra.mxu0 0.0
    %2789 = vmatprep.subr.mxu0 0.0
    %2790 = vmatpush1.msra.mxu0 0.0
    %2791 = vmatprep.subr.mxu0 0.0
    %2792 = vmatpush1.msra.mxu0 0.0
    %2793 = vmatprep.subr.mxu0 0.0
    %2794 = vmatpush1.msra.mxu0 0.0
    %2795 = vmatprep.subr.mxu0 0.0
    %2796 = vmatpush1.msra.mxu0 0.0
    %2797 = vmatprep.subr.mxu0 0.0
    %2798 = vmatpush1.msra.mxu0 0.0
    %2799 = vmatprep.subr.mxu0 0.0
    %2800 = vmatpush1.msra.mxu0 0.0
    %2801 = vmatprep.subr.mxu0 0.0
    %2802 = vmatpush1.msra.mxu0 0.0
    %2803 = vmatprep.subr.mxu0 0.0
    %2804 = vmatpush1.msra.mxu0 0.0
    %2805 = vmatprep.subr.mxu0 0.0
    %2806 = vmatpush1.msra.mxu0 0.0
    %2807 = vmatprep.subr.mxu0 0.0
    %2808 = vmatpush1.msra.mxu0 0.0
    %2809 = vmatprep.subr.mxu0 0.0
    %2810 = vmatpush1.msra.mxu0 0.0
    %2811 = vmatprep.subr.mxu0 0.0
    %2812 = vmatpush1.msra.mxu0 0.0
    %2813 = vmatprep.subr.mxu0 0.0
    %2814 = vmatpush1.msra.mxu0 0.0
    %2815 = vmatprep.subr.mxu0 0.0
    %2816 = vmatpush1.msra.mxu0 0.0
    %2817 = vmatprep.subr.mxu0 0.0
    %2818 = vmatpush1.msra.mxu0 0.0
    %2819 = vmatprep.subr.mxu0 0.0
    %2820 = vmatpush1.msra.mxu0 0.0
    %2821 = vmatprep.subr.mxu0 0.0
    %2822 = vmatpush1.msra.mxu0 0.0
    %2823 = vmatprep.subr.mxu0 0.0
    %2824 = vmatpush1.msra.mxu0 0.0
    %2825 = vmatprep.subr.mxu0 0.0
    %2826 = vmatpush1.msra.mxu0 0.0
    %2827 = vmatprep.subr.mxu0 0.0
    %2828 = vmatpush1.msra.mxu0 0.0
    %2829 = vmatprep.subr.mxu0 0.0
    %2830 = vmatpush1.msra.mxu0 0.0
    %2831 = vmatprep.subr.mxu0 0.0
    %2832 = vmatpush1.msra.mxu0 0.0
    %2833 = vmatprep.mubr.f32.mxu0 0.0
    %2834 = vmatmul.mubr.f32.gmra.mrb[0].mxu0 %v2761
    %v2835 = vpop.f32.mrb[0].mxu0
    %v2836 = vadd.f32 0.0, %v2835
    %v2837 = vpop.f32.mrb[0].mxu0
    %2838 = vmatprep.mubr.f32.mxu0 0.0
    %2839 = vmatmul.mubr.f32.gmra.mrb[0].mxu0 %v2764
    %v2840 = vpop.f32.mrb[0].mxu0
    %v2841 = vadd.f32 0.0, %v2840
    %v2842 = vpop.f32.mrb[0].mxu0
    %2843 = vdwg.mxu0
    %2844 = vmatprep.subr.mxu0 0.0
    %2845 = vmatpush1.msra.mxu0 %v2741
    %2846 = vmatprep.subr.mxu0 0.0
    %2847 = vmatpush1.msra.mxu0 %v2742
    %2848 = vmatprep.subr.mxu0 0.0
    %2849 = vmatpush1.msra.mxu0 %v2743
    %2850 = vmatprep.subr.mxu0 0.0
    %2851 = vmatpush1.msra.mxu0 %v2744
    %2852 = vmatprep.subr.mxu0 0.0
    %2853 = vmatpush1.msra.mxu0 %v2745
    %2854 = vmatprep.subr.mxu0 0.0
    %2855 = vmatpush1.msra.mxu0 %v2746
    %2856 = vmatprep.subr.mxu0 0.0
    %2857 = vmatpush1.msra.mxu0 %v2747
    %2858 = vmatprep.subr.mxu0 0.0
    %2859 = vmatpush1.msra.mxu0 %v2748
    %2860 = vmatprep.subr.mxu0 0.0
    %2861 = vmatpush1.msra.mxu0 %v2749
    %2862 = vmatprep.subr.mxu0 0.0
    %2863 = vmatpush1.msra.mxu0 %v2750
    %2864 = vmatprep.subr.mxu0 0.0
    %2865 = vmatpush1.msra.mxu0 %v2751
    %2866 = vmatprep.subr.mxu0 0.0
    %2867 = vmatpush1.msra.mxu0 %v2752
    %2868 = vmatprep.subr.mxu0 0.0
    %2869 = vmatpush1.msra.mxu0 %v2753
    %2870 = vmatprep.subr.mxu0 0.0
    %2871 = vmatpush1.msra.mxu0 %v2754
    %2872 = vmatprep.subr.mxu0 0.0
    %2873 = vmatpush1.msra.mxu0 %v2755
    %2874 = vmatprep.subr.mxu0 0.0
    %2875 = vmatpush1.msra.mxu0 %v2756
    %2876 = vmatprep.subr.mxu0 0.0
    %2877 = vmatpush1.msra.mxu0 0.0
    %2878 = vmatprep.subr.mxu0 0.0
    %2879 = vmatpush1.msra.mxu0 0.0
    %2880 = vmatprep.subr.mxu0 0.0
    %2881 = vmatpush1.msra.mxu0 0.0
    %2882 = vmatprep.subr.mxu0 0.0
    %2883 = vmatpush1.msra.mxu0 0.0
    %2884 = vmatprep.subr.mxu0 0.0
    %2885 = vmatpush1.msra.mxu0 0.0
    %2886 = vmatprep.subr.mxu0 0.0
    %2887 = vmatpush1.msra.mxu0 0.0
    %2888 = vmatprep.subr.mxu0 0.0
    %2889 = vmatpush1.msra.mxu0 0.0
    %2890 = vmatprep.subr.mxu0 0.0
    %2891 = vmatpush1.msra.mxu0 0.0
    %2892 = vmatprep.subr.mxu0 0.0
    %2893 = vmatpush1.msra.mxu0 0.0
    %2894 = vmatprep.subr.mxu0 0.0
    %2895 = vmatpush1.msra.mxu0 0.0
    %2896 = vmatprep.subr.mxu0 0.0
    %2897 = vmatpush1.msra.mxu0 0.0
    %2898 = vmatprep.subr.mxu0 0.0
    %2899 = vmatpush1.msra.mxu0 0.0
    %2900 = vmatprep.subr.mxu0 0.0
    %2901 = vmatpush1.msra.mxu0 0.0
    %2902 = vmatprep.subr.mxu0 0.0
    %2903 = vmatpush1.msra.mxu0 0.0
    %2904 = vmatprep.subr.mxu0 0.0
    %2905 = vmatpush1.msra.mxu0 0.0
    %2906 = vmatprep.subr.mxu0 0.0
    %2907 = vmatpush1.msra.mxu0 0.0
    %2908 = vmatprep.mubr.f32.mxu0 0.0
    %2909 = vmatmul.mubr.f32.gmra.mrb[0].mxu0 %v2739
    %v2910 = vpop.f32.mrb[0].mxu0
    %v2911 = vadd.f32 %v2836, %v2910
    %v2912 = vpop.f32.mrb[0].mxu0
    %2913 = vmatprep.mubr.f32.mxu0 0.0
    %2914 = vmatmul.mubr.f32.gmra.mrb[0].mxu0 %v2740
    %v2915 = vpop.f32.mrb[0].mxu0
    %v2916 = vadd.f32 %v2841, %v2915
    %v2917 = vpop.f32.mrb[0].mxu0
    %2918 = vdwg.mxu0
    %v2919 = vld [vmem:[%s9] sm:$0x1]
    %v2921 = vlaneseq
    %v2922 = vshrl.u32 %v2921, 7
    %v2923 = vsub.s32 0, %v2922
    %v2924 = vrot.slane %v2919, %v2923
    %v2926 = vadd.f32 %v2911, %v2924
    %v2927 = vadd.f32 %v2916, %v2924
    %v2928 = vmax.f32 %v2926, 0.0
    %v2929 = vmax.f32 %v2927, 0.0
    %v2930 = vld [vmem:[#allocation10] sm:$0xff]
    %v2931 = vld [vmem:[#allocation10 + $0x8] sm:$0xff]
    %v2932 = vld [vmem:[#allocation10 + $0x10] sm:$0xff]
    %v2933 = vld [vmem:[#allocation10 + $0x18] sm:$0xff]
    %v2934 = vld [vmem:[#allocation10 + $0x20] sm:$0xff]
    %v2935 = vld [vmem:[#allocation10 + $0x28] sm:$0xff]
    %v2936 = vld [vmem:[#allocation10 + $0x30] sm:$0xff]
    %v2937 = vld [vmem:[#allocation10 + $0x38] sm:$0xff]
    %v2938 = vld [vmem:[#allocation10 + $0x40] sm:$0xff]
    %v2939 = vld [vmem:[#allocation10 + $0x48] sm:$0xff]
    %v2940 = vld [vmem:[#allocation10 + $0x50] sm:$0xff]
    %v2941 = vld [vmem:[#allocation10 + $0x58] sm:$0xff]
    %v2942 = vld [vmem:[#allocation10 + $0x60] sm:$0xff]
    %v2943 = vld [vmem:[#allocation10 + $0x68] sm:$0xff]
    %v2944 = vld [vmem:[#allocation10 + $0x70] sm:$0xff]
    %v2945 = vld [vmem:[#allocation10 + $0x78] sm:$0xff]
    %v2946 = vld [vmem:[%s11] sm:$0x1]
    %v2948 = vlaneseq
    %v2949 = vshrl.u32 %v2948, 7
    %v2950 = vsub.s32 0, %v2949
    %v2951 = vrot.slane %v2946, %v2950
    %2953 = vmatprep.subr.mxu0 0.0
    %2954 = vmatpush1.msra.mxu0 %v2930
    %2955 = vmatprep.subr.mxu0 0.0
    %2956 = vmatpush1.msra.mxu0 %v2931
    %2957 = vmatprep.subr.mxu0 0.0
    %2958 = vmatpush1.msra.mxu0 %v2932
    %2959 = vmatprep.subr.mxu0 0.0
    %2960 = vmatpush1.msra.mxu0 %v2933
    %2961 = vmatprep.subr.mxu0 0.0
    %2962 = vmatpush1.msra.mxu0 %v2934
    %2963 = vmatprep.subr.mxu0 0.0
    %2964 = vmatpush1.msra.mxu0 %v2935
    %2965 = vmatprep.subr.mxu0 0.0
    %2966 = vmatpush1.msra.mxu0 %v2936
    %2967 = vmatprep.subr.mxu0 0.0
    %2968 = vmatpush1.msra.mxu0 %v2937
    %2969 = vmatprep.subr.mxu0 0.0
    %2970 = vmatpush1.msra.mxu0 %v2938
    %2971 = vmatprep.subr.mxu0 0.0
    %2972 = vmatpush1.msra.mxu0 %v2939
    %2973 = vmatprep.subr.mxu0 0.0
    %2974 = vmatpush1.msra.mxu0 %v2940
    %2975 = vmatprep.subr.mxu0 0.0
    %2976 = vmatpush1.msra.mxu0 %v2941
    %2977 = vmatprep.subr.mxu0 0.0
    %2978 = vmatpush1.msra.mxu0 %v2942
    %2979 = vmatprep.subr.mxu0 0.0
    %2980 = vmatpush1.msra.mxu0 %v2943
    %2981 = vmatprep.subr.mxu0 0.0
    %2982 = vmatpush1.msra.mxu0 %v2944
    %2983 = vmatprep.subr.mxu0 0.0
    %2984 = vmatpush1.msra.mxu0 %v2945
    %2985 = vmatprep.subr.mxu0 0.0
    %2986 = vmatpush1.msra.mxu0 0.0
    %2987 = vmatprep.subr.mxu0 0.0
    %2988 = vmatpush1.msra.mxu0 0.0
    %2989 = vmatprep.subr.mxu0 0.0
    %2990 = vmatpush1.msra.mxu0 0.0
    %2991 = vmatprep.subr.mxu0 0.0
    %2992 = vmatpush1.msra.mxu0 0.0
    %2993 = vmatprep.subr.mxu0 0.0
    %2994 = vmatpush1.msra.mxu0 0.0
    %2995 = vmatprep.subr.mxu0 0.0
    %2996 = vmatpush1.msra.mxu0 0.0
    %2997 = vmatprep.subr.mxu0 0.0
    %2998 = vmatpush1.msra.mxu0 0.0
    %2999 = vmatprep.subr.mxu0 0.0
    %3000 = vmatpush1.msra.mxu0 0.0
    %3001 = vmatprep.subr.mxu0 0.0
    %3002 = vmatpush1.msra.mxu0 0.0
    %3003 = vmatprep.subr.mxu0 0.0
    %3004 = vmatpush1.msra.mxu0 0.0
    %3005 = vmatprep.subr.mxu0 0.0
    %3006 = vmatpush1.msra.mxu0 0.0
    %3007 = vmatprep.subr.mxu0 0.0
    %3008 = vmatpush1.msra.mxu0 0.0
    %3009 = vmatprep.subr.mxu0 0.0
    %3010 = vmatpush1.msra.mxu0 0.0
    %3011 = vmatprep.subr.mxu0 0.0
    %3012 = vmatpush1.msra.mxu0 0.0
    %3013 = vmatprep.subr.mxu0 0.0
    %3014 = vmatpush1.msra.mxu0 0.0
    %3015 = vmatprep.subr.mxu0 0.0
    %3016 = vmatpush1.msra.mxu0 0.0
    %3017 = vmatprep.mubr.f32.mxu0 0.0
    %3018 = vmatmul.mubr.f32.gmra.mrb[0].mxu0 %v2928
    %v3019 = vpop.f32.mrb[0].mxu0
    %v3020 = vadd.f32 %v2951, %v3019
    %v3021 = vpop.f32.mrb[0].mxu0
    %3022 = vmatprep.mubr.f32.mxu0 0.0
    %3023 = vmatmul.mubr.f32.gmra.mrb[0].mxu0 %v2929
    %v3024 = vpop.f32.mrb[0].mxu0
    %v3025 = vadd.f32 %v2951, %v3024
    %v3026 = vpop.f32.mrb[0].mxu0
    %3027 = vdwg.mxu0
    %3028 = vst [vmem:[#allocation12] sm:$0xff] %v3020
    %3029 = vst [vmem:[#allocation12 + $0x8] sm:$0xff] %v3025
    // Predicated region
    $region66: #{tpu_custom_call.1} parent=1 // pred_check
      _
    $region67: #{tpu_custom_call.1} parent=1 // pred_check_branch
      %3031 = sbr.rel (0) target = $region69
    $region68: #{tpu_custom_call.1} parent=1 // pred_region
      %s3033 = ssub.s32 256, 256
      %3034 = vsyncadd [#allocation6], %s3033
      %s3035 = sshll.u32 [#allocation12], 4
      %s3036 = int_to_ptr.vmem [resolvable:$true] %s3035
      %3041 = dma.vmem_to_hbm [thread:$0]  %s3036, 256, %s12, [#allocation6], 128, 128, 8
    $region69: #{tpu_custom_call.1} parent=1 // pred_fallthru
      _
    // Predicated region
    $region70: #{tpu_custom_call.1} parent=1 // pred_check
      _
    $region71: #{tpu_custom_call.1} parent=1 // pred_check_branch
      %3043 = sbr.rel (0) target = $region73
    $region72: #{tpu_custom_call.1} parent=1 // pred_region
      %3044 = dma.done [#allocation6], 256
    $region73: #{tpu_custom_call.1} parent=1 // pred_fallthru
      _
    %3045 = vsyncpa [#allocation5], 1
    %3046 = vsyncpa [#allocation8], 1
    %3047 = vsyncpa [#allocation11], 1
    %3048 = vsyncpa [#allocation6], 1

</llo_original>
